<compile_context>
chip_gen: v7x
topology: tpu7x:2x2x1
jax: 0.10.0
libtpu: 0.0.40
codegen_flags: <defaults>
</compile_context>

<pallas_src>
import functools

import jax
import jax.numpy as jnp
from jax import lax
from jax.experimental import pallas as pl
from jax.experimental.pallas import tpu as pltpu


def _round_up(n, m):
    return ((n + m - 1) // m) * m


def _vmem_capacity_bytes():
    try:
        info = pltpu.get_tpu_info()
        cap = int(getattr(info, "vmem_capacity_bytes", 0) or 0)
        if cap > 0:
            return cap
    except Exception:
        pass
    return 64 * 1024 * 1024   # conservative (v7x-sized) fallback


# ------------------------------ fused kernel ---------------------------------
def bilstm_fused_kernel(xf_ref, xb_ref, wih_f_ref, wih_b_ref, bf_ref, bb_ref,
                        whh_f_ref, whh_b_ref, wfc_f_ref, wfc_b_ref, bfc_ref,
                        out_ref,
                        gf_buf, gb_buf, hf, cf, hb, cb,
                        *, TT, T, Tpad, Hp, Bp):
    t = pl.program_id(0)
    nt = pl.num_programs(0)

    @pl.when(t == 0)
    def _init():
        hf[...] = jnp.zeros_like(hf)
        cf[...] = jnp.zeros_like(cf)
        hb[...] = jnp.zeros_like(hb)
        cb[...] = jnp.zeros_like(cb)

    # Per-chunk input projection for both directions (one MXU matmul each);
    # this is off the per-timestep serial h-dependency chain and replaces the
    # previous standalone kernel + gates HBM round-trip.
    gf_buf[...] = (jnp.dot(xf_ref[...], wih_f_ref[...],
                           preferred_element_type=jnp.float32) + bf_ref[...])
    gb_buf[...] = (jnp.dot(xb_ref[...], wih_b_ref[...],
                           preferred_element_type=jnp.float32) + bb_ref[...])

    def cell(g_pre, h, c, whh):
        # Only h @ W_hh^T is on the serial path; h is kept bf16 (no cast here).
        g = g_pre + jnp.dot(h, whh, preferred_element_type=jnp.float32)
        i_g = jax.nn.sigmoid(g[:, 0 * Hp:1 * Hp])      # whole-vreg gate slices
        f_g = jax.nn.sigmoid(g[:, 1 * Hp:2 * Hp])
        g_g = jnp.tanh(g[:, 2 * Hp:3 * Hp])
        o_g = jax.nn.sigmoid(g[:, 3 * Hp:4 * Hp])
        c_new = f_g * c + i_g * g_g
        h_new = o_g * jnp.tanh(c_new)
        return h_new.astype(jnp.bfloat16), c_new

    needs_mask = Tpad != T
    hf_c, cf_c = hf[...], cf[...]
    hb_c, cb_c = hb[...], cb[...]
    # Statically unrolled time loop over the chunk; forward processes time
    # t*TT + j, backward processes time Tpad-1 - (t*TT + j) (local TT-1-j).
    for j in range(TT):
        gf_j = gf_buf[pl.ds(j * Bp, Bp), :]
        gb_j = gb_buf[pl.ds((TT - 1 - j) * Bp, Bp), :]
        hf_n, cf_n = cell(gf_j, hf_c, cf_c, whh_f_ref[...])
        hb_n, cb_n = cell(gb_j, hb_c, cb_c, whh_b_ref[...])
        if needs_mask:
            # Freeze the state on padded timesteps (T was rounded up to Tpad).
            vf = (t * TT + j) < T
            vb = (t * TT + j) >= (Tpad - T)
            hf_n = jnp.where(vf, hf_n, hf_c)
            cf_n = jnp.where(vf, cf_n, cf_c)
            hb_n = jnp.where(vb, hb_n, hb_c)
            cb_n = jnp.where(vb, cb_n, cb_c)
        hf_c, cf_c, hb_c, cb_c = hf_n, cf_n, hb_n, cb_n

    hf[...] = hf_c
    cf[...] = cf_c
    hb[...] = hb_c
    cb[...] = cb_c

    # Fused classifier epilogue: bf16 operands, no lane-axis concatenate,
    # lane-dense (Bp, Cp) store.
    @pl.when(t == nt - 1)
    def _epilogue():
        out_ref[...] = (
            jnp.dot(hf_c, wfc_f_ref[...], preferred_element_type=jnp.float32)
            + jnp.dot(hb_c, wfc_b_ref[...], preferred_element_type=jnp.float32)
            + bfc_ref[...])


# --------------------------- weight packing ----------------------------------
def _pack_ih(w, H, Hp):
    # (4H, E) -> (E, 4*Hp); gate order (i, f, g, o), each gate padded to Hp lanes.
    E = w.shape[1]
    w4 = jnp.transpose(w.reshape(4, H, E), (2, 0, 1))            # (E, 4, H)
    return jnp.pad(w4, ((0, 0), (0, 0), (0, Hp - H))).reshape(E, 4 * Hp)


def _pack_hh(w, H, Hp):
    # (4H, H) -> (Hp, 4*Hp)
    w4 = jnp.transpose(w.reshape(4, H, H), (2, 0, 1))            # (H, 4, H)
    return jnp.pad(w4, ((0, Hp - H), (0, 0), (0, Hp - H))).reshape(Hp, 4 * Hp)


def _pack_bias(b_ih, b_hh, H, Hp):
    b = (b_ih + b_hh).reshape(4, H)
    return jnp.pad(b, ((0, 0), (0, Hp - H))).reshape(1, 4 * Hp)


def init_params(key, vocab_size, embed_dim, hidden_dim, n_classes):
    ks = jax.random.split(key, 12)
    s = 0.1
    return {
        "embedding": jax.random.normal(ks[0], (vocab_size, embed_dim), jnp.float32) * s,
        "w_ih_f": jax.random.normal(ks[1], (4 * hidden_dim, embed_dim), jnp.float32) * s,
        "w_hh_f": jax.random.normal(ks[2], (4 * hidden_dim, hidden_dim), jnp.float32) * s,
        "b_ih_f": jax.random.normal(ks[3], (4 * hidden_dim,), jnp.float32) * s,
        "b_hh_f": jax.random.normal(ks[4], (4 * hidden_dim,), jnp.float32) * s,
        "w_ih_b": jax.random.normal(ks[5], (4 * hidden_dim, embed_dim), jnp.float32) * s,
        "w_hh_b": jax.random.normal(ks[6], (4 * hidden_dim, hidden_dim), jnp.float32) * s,
        "b_ih_b": jax.random.normal(ks[7], (4 * hidden_dim,), jnp.float32) * s,
        "b_hh_b": jax.random.normal(ks[8], (4 * hidden_dim,), jnp.float32) * s,
        "w_fc": jax.random.normal(ks[9], (n_classes, 2 * hidden_dim), jnp.float32) * s,
        "b_fc": jax.random.normal(ks[10], (n_classes,), jnp.float32) * s,
    }


# ------------------------------ forward --------------------------------------
def lstm_classifier_forward(input_ids, attention_mask, params):
    # attention_mask is accepted but unused, matching the reference forward().
    del attention_mask
    B, T = input_ids.shape
    E = params["embedding"].shape[1]
    H = params["w_hh_f"].shape[1]
    C = params["w_fc"].shape[0]

    Hp = _round_up(H, 128)     # per-gate width -> whole vregs on the lane axis
    Bp = _round_up(B, 8)       # batch -> sublane multiple
    Cp = _round_up(C, 128)     # class dim -> lane-dense output store
    G = 4 * Hp

    # Per-generation VMEM budget and time-chunk sizing.
    vmem_cap = _vmem_capacity_bytes()
    vmem_limit = max(32 * 1024 * 1024, vmem_cap - 16 * 1024 * 1024)
    TT = 32 if vmem_cap >= 96 * 1024 * 1024 else 16
    # Keep the per-chunk f32 gate scratch (both directions) within ~1/4 budget.
    max_tt = max(1, (vmem_limit // 4) // (2 * Bp * G * 4))
    TT = max(1, min(TT, max_tt, T))
    Tpad = _round_up(T, TT)
    nt = Tpad // TT

    # Glue: embedding lookup (XLA gather), time-major padded bf16 layout.
    # TODO(synk): nn.Dropout is identity at inference; training-mode dropout not applied.
    emb = jnp.take(params["embedding"], input_ids, axis=0).astype(jnp.float32)  # (B,T,E)
    x = jnp.transpose(emb, (1, 0, 2))                       # (T, B, E) time-major
    x = jnp.pad(x, ((0, Tpad - T), (0, Bp - B), (0, 0)))    # (Tpad, Bp, E)
    x2d = x.reshape(Tpad * Bp, E).astype(jnp.bfloat16)

    # Weight packing (padded gate slabs, pre-transposed, bf16 MXU operands).
    wih_f = _pack_ih(params["w_ih_f"], H, Hp).astype(jnp.bfloat16)   # (E, G)
    wih_b = _pack_ih(params["w_ih_b"], H, Hp).astype(jnp.bfloat16)
    b_f = _pack_bias(params["b_ih_f"], params["b_hh_f"], H, Hp)      # (1, G) f32
    b_b = _pack_bias(params["b_ih_b"], params["b_hh_b"], H, Hp)
    whh_f = _pack_hh(params["w_hh_f"], H, Hp).astype(jnp.bfloat16)   # (Hp, G)
    whh_b = _pack_hh(params["w_hh_b"], H, Hp).astype(jnp.bfloat16)
    wfc = params["w_fc"]                                             # (C, 2H)
    wfc_f = (jnp.zeros((Hp, Cp), jnp.float32)
             .at[:H, :C].set(wfc[:, :H].T).astype(jnp.bfloat16))
    wfc_b = (jnp.zeros((Hp, Cp), jnp.float32)
             .at[:H, :C].set(wfc[:, H:].T).astype(jnp.bfloat16))
    bfc = jnp.zeros((1, Cp), jnp.float32).at[0, :C].set(params["b_fc"])

    kernel = functools.partial(bilstm_fused_kernel,
                               TT=TT, T=T, Tpad=Tpad, Hp=Hp, Bp=Bp)
    rows = TT * Bp

    out_pad = pl.pallas_call(
        kernel,
        out_shape=jax.ShapeDtypeStruct((Bp, Cp), jnp.float32),
        grid=(nt,),
        in_specs=[
            pl.BlockSpec((rows, E), lambda t: (t, 0)),            # x chunk (fwd order)
            pl.BlockSpec((rows, E), lambda t: (nt - 1 - t, 0)),   # x chunk (bwd order)
            pl.BlockSpec((E, G), lambda t: (0, 0)),               # W_ih fwd (resident)
            pl.BlockSpec((E, G), lambda t: (0, 0)),               # W_ih bwd (resident)
            pl.BlockSpec((1, G), lambda t: (0, 0)),               # bias fwd
            pl.BlockSpec((1, G), lambda t: (0, 0)),               # bias bwd
            pl.BlockSpec((Hp, G), lambda t: (0, 0)),              # W_hh fwd (resident)
            pl.BlockSpec((Hp, G), lambda t: (0, 0)),              # W_hh bwd (resident)
            pl.BlockSpec((Hp, Cp), lambda t: (0, 0)),             # fc weights (fwd half)
            pl.BlockSpec((Hp, Cp), lambda t: (0, 0)),             # fc weights (bwd half)
            pl.BlockSpec((1, Cp), lambda t: (0, 0)),              # fc bias
        ],
        out_specs=pl.BlockSpec((Bp, Cp), lambda t: (0, 0)),
        scratch_shapes=[
            pltpu.VMEM((rows, G), jnp.float32),    # fwd gate pre-activations (chunk)
            pltpu.VMEM((rows, G), jnp.float32),    # bwd gate pre-activations (chunk)
            pltpu.VMEM((Bp, Hp), jnp.bfloat16),    # h_f (bf16: no cast on serial path)
            pltpu.VMEM((Bp, Hp), jnp.float32),     # c_f
            pltpu.VMEM((Bp, Hp), jnp.bfloat16),    # h_b
            pltpu.VMEM((Bp, Hp), jnp.float32),     # c_b
        ],
        compiler_params=pltpu.CompilerParams(
            dimension_semantics=("arbitrary",),
            vmem_limit_bytes=vmem_limit),
    )(x2d, x2d, wih_f, wih_b, b_f, b_b, whh_f, whh_b, wfc_f, wfc_b, bfc)

    return out_pad[:B, :C]


# ----------------------------- reference -------------------------------------
def _reference_forward(input_ids, params):
    emb = jnp.take(params["embedding"], input_ids, axis=0)    # (B, T, E)
    B = emb.shape[0]
    H = params["w_hh_f"].shape[1]

    def run(x_btd, wih, whh, bih, bhh):
        def step(carry, xt):
            h, c = carry
            g = xt @ wih.T + h @ whh.T + bih + bhh
            i = jax.nn.sigmoid(g[:, :H])
            f = jax.nn.sigmoid(g[:, H:2 * H])
            gg = jnp.tanh(g[:, 2 * H:3 * H])
            o = jax.nn.sigmoid(g[:, 3 * H:])
            c = f * c + i * gg
            h = o * jnp.tanh(c)
            return (h, c), None
        init = (jnp.zeros((B, H), jnp.float32), jnp.zeros((B, H), jnp.float32))
        (h, _), _ = lax.scan(step, init, jnp.transpose(x_btd, (1, 0, 2)))
        return h

    h_f = run(emb, params["w_ih_f"], params["w_hh_f"],
              params["b_ih_f"], params["b_hh_f"])
    h_b = run(emb[:, ::-1, :], params["w_ih_b"], params["w_hh_b"],
              params["b_ih_b"], params["b_hh_b"])
    h_cat = jnp.concatenate([h_f, h_b], axis=1)
    return h_cat @ params["w_fc"].T + params["b_fc"]


if __name__ == "__main__":
    VOCAB, EMBED, HIDDEN, CLASSES = 100, 32, 32, 4
    B, T = 2, 8

    key = jax.random.PRNGKey(0)
    k_param, k_ids = jax.random.split(key)

    params = init_params(k_param, VOCAB, EMBED, HIDDEN, CLASSES)
    input_ids = jax.random.randint(k_ids, (B, T), 0, VOCAB, dtype=jnp.int32)
    attention_mask = jnp.ones((B, T), dtype=jnp.int32)

    logits = lstm_classifier_forward(input_ids, attention_mask, params)
    jax.block_until_ready(logits)
    assert logits.shape == (B, CLASSES)

    ref = _reference_forward(input_ids, params)
    assert jnp.allclose(logits, ref, atol=5e-2, rtol=5e-2), (logits, ref)
    print("KERNEL_OK")
</pallas_src>

<mosaic_0001>
module attributes {stable_mosaic.version = 11 : i64} {
  func.func @bilstm_fused_kernel(%arg0: i32, %arg1: memref<64x32xbf16, #tpu.memory_space<vmem>>, %arg2: memref<64x32xbf16, #tpu.memory_space<vmem>>, %arg3: memref<32x512xbf16, #tpu.memory_space<vmem>>, %arg4: memref<32x512xbf16, #tpu.memory_space<vmem>>, %arg5: memref<1x512xf32, #tpu.memory_space<vmem>>, %arg6: memref<1x512xf32, #tpu.memory_space<vmem>>, %arg7: memref<128x512xbf16, #tpu.memory_space<vmem>>, %arg8: memref<128x512xbf16, #tpu.memory_space<vmem>>, %arg9: memref<128x128xbf16, #tpu.memory_space<vmem>>, %arg10: memref<128x128xbf16, #tpu.memory_space<vmem>>, %arg11: memref<1x128xf32, #tpu.memory_space<vmem>>, %arg12: memref<8x128xf32, #tpu.memory_space<vmem>>, %arg13: memref<64x512xf32, #tpu.memory_space<vmem>>, %arg14: memref<64x512xf32, #tpu.memory_space<vmem>>, %arg15: memref<8x128xbf16, #tpu.memory_space<vmem>>, %arg16: memref<8x128xf32, #tpu.memory_space<vmem>>, %arg17: memref<8x128xbf16, #tpu.memory_space<vmem>>, %arg18: memref<8x128xf32, #tpu.memory_space<vmem>>) attributes {dimension_semantics = [#tpu.dimension_semantics<arbitrary>], iteration_bounds = array<i64: 1>, scalar_prefetch = 0 : i64, scratch_operands = 6 : i64, tpu.core_type = #tpu.core_type<tc>, window_params = [{transform_indices = @transform_0, window_bounds = array<i64: 64, 32>}, {transform_indices = @transform_1, window_bounds = array<i64: 64, 32>}, {pipeline_mode = #tpu.pipeline_mode<synchronous>, transform_indices = @transform_2, window_bounds = array<i64: 32, 512>}, {pipeline_mode = #tpu.pipeline_mode<synchronous>, transform_indices = @transform_3, window_bounds = array<i64: 32, 512>}, {pipeline_mode = #tpu.pipeline_mode<synchronous>, transform_indices = @transform_4, window_bounds = array<i64: 1, 512>}, {pipeline_mode = #tpu.pipeline_mode<synchronous>, transform_indices = @transform_5, window_bounds = array<i64: 1, 512>}, {pipeline_mode = #tpu.pipeline_mode<synchronous>, transform_indices = @transform_6, window_bounds = array<i64: 128, 512>}, {pipeline_mode = #tpu.pipeline_mode<synchronous>, transform_indices = @transform_7, window_bounds = array<i64: 128, 512>}, {pipeline_mode = #tpu.pipeline_mode<synchronous>, transform_indices = @transform_8, window_bounds = array<i64: 128, 128>}, {pipeline_mode = #tpu.pipeline_mode<synchronous>, transform_indices = @transform_9, window_bounds = array<i64: 128, 128>}, {pipeline_mode = #tpu.pipeline_mode<synchronous>, transform_indices = @transform_10, window_bounds = array<i64: 1, 128>}, {pipeline_mode = #tpu.pipeline_mode<synchronous>, transform_indices = @transform_11, window_bounds = array<i64: 8, 128>}]} {
    %c0_i32 = arith.constant 0 : i32
    %0 = arith.cmpi eq, %arg0, %c0_i32 : i32
    %1 = arith.extui %0 : i1 to i32
    %c0_i32_0 = arith.constant 0 : i32
    %2 = arith.cmpi ne, %1, %c0_i32_0 : i32
    scf.if %2 {
      %cst_156 = arith.constant 0.000000e+00 : bf16
      %508 = vector.broadcast %cst_156 : bf16 to vector<8x128xbf16>
      %c0_157 = arith.constant 0 : index
      %c0_158 = arith.constant 0 : index
      %509 = vector.load %arg15[%c0_157, %c0_158] : memref<8x128xbf16, #tpu.memory_space<vmem>>, vector<8x128xbf16>
      tpu.vector_store %arg15[%c0_157, %c0_158], %508 {strides = array<i32>} : memref<8x128xbf16, #tpu.memory_space<vmem>>, vector<8x128xbf16>,
      %cst_159 = arith.constant 0.000000e+00 : f32
      %510 = vector.broadcast %cst_159 : f32 to vector<8x128xf32>
      %c0_160 = arith.constant 0 : index
      %c0_161 = arith.constant 0 : index
      %511 = vector.load %arg16[%c0_160, %c0_161] : memref<8x128xf32, #tpu.memory_space<vmem>>, vector<8x128xf32>
      tpu.vector_store %arg16[%c0_160, %c0_161], %510 {strides = array<i32>} : memref<8x128xf32, #tpu.memory_space<vmem>>, vector<8x128xf32>,
      %cst_162 = arith.constant 0.000000e+00 : bf16
      %512 = vector.broadcast %cst_162 : bf16 to vector<8x128xbf16>
      %c0_163 = arith.constant 0 : index
      %c0_164 = arith.constant 0 : index
      %513 = vector.load %arg17[%c0_163, %c0_164] : memref<8x128xbf16, #tpu.memory_space<vmem>>, vector<8x128xbf16>
      tpu.vector_store %arg17[%c0_163, %c0_164], %512 {strides = array<i32>} : memref<8x128xbf16, #tpu.memory_space<vmem>>, vector<8x128xbf16>,
      %cst_165 = arith.constant 0.000000e+00 : f32
      %514 = vector.broadcast %cst_165 : f32 to vector<8x128xf32>
      %c0_166 = arith.constant 0 : index
      %c0_167 = arith.constant 0 : index
      %515 = vector.load %arg18[%c0_166, %c0_167] : memref<8x128xf32, #tpu.memory_space<vmem>>, vector<8x128xf32>
      tpu.vector_store %arg18[%c0_166, %c0_167], %514 {strides = array<i32>} : memref<8x128xf32, #tpu.memory_space<vmem>>, vector<8x128xf32>,
    } else {
    }
    %c0 = arith.constant 0 : index
    %c0_1 = arith.constant 0 : index
    %3 = vector.load %arg1[%c0, %c0_1] : memref<64x32xbf16, #tpu.memory_space<vmem>>, vector<64x32xbf16>
    %c0_2 = arith.constant 0 : index
    %c0_3 = arith.constant 0 : index
    %4 = vector.load %arg3[%c0_2, %c0_3] : memref<32x512xbf16, #tpu.memory_space<vmem>>, vector<32x512xbf16>
    %cst = arith.constant dense<0.000000e+00> : vector<64x512xf32>
    %5 = tpu.matmul %3, %4, %cst {dimension_numbers = #tpu.dot_dimension_numbers<[1], [0], [0], [1], [0, 0, 1, 1], [], []>} : vector<64x32xbf16>, vector<32x512xbf16>, vector<64x512xf32> -> vector<64x512xf32>
    %c0_4 = arith.constant 0 : index
    %c0_5 = arith.constant 0 : index
    %6 = vector.load %arg5[%c0_4, %c0_5] : memref<1x512xf32, #tpu.memory_space<vmem>>, vector<1x512xf32>
    %7 = vector.broadcast %6 : vector<1x512xf32> to vector<64x512xf32>
    %8 = arith.addf %5, %7 : vector<64x512xf32>
    %c0_6 = arith.constant 0 : index
    %c0_7 = arith.constant 0 : index
    %9 = vector.load %arg13[%c0_6, %c0_7] : memref<64x512xf32, #tpu.memory_space<vmem>>, vector<64x512xf32>
    tpu.vector_store %arg13[%c0_6, %c0_7], %8 {strides = array<i32>} : memref<64x512xf32, #tpu.memory_space<vmem>>, vector<64x512xf32>,
    %c0_8 = arith.constant 0 : index
    %c0_9 = arith.constant 0 : index
    %10 = vector.load %arg2[%c0_8, %c0_9] : memref<64x32xbf16, #tpu.memory_space<vmem>>, vector<64x32xbf16>
    %c0_10 = arith.constant 0 : index
    %c0_11 = arith.constant 0 : index
    %11 = vector.load %arg4[%c0_10, %c0_11] : memref<32x512xbf16, #tpu.memory_space<vmem>>, vector<32x512xbf16>
    %cst_12 = arith.constant dense<0.000000e+00> : vector<64x512xf32>
    %12 = tpu.matmul %10, %11, %cst_12 {dimension_numbers = #tpu.dot_dimension_numbers<[1], [0], [0], [1], [0, 0, 1, 1], [], []>} : vector<64x32xbf16>, vector<32x512xbf16>, vector<64x512xf32> -> vector<64x512xf32>
    %c0_13 = arith.constant 0 : index
    %c0_14 = arith.constant 0 : index
    %13 = vector.load %arg6[%c0_13, %c0_14] : memref<1x512xf32, #tpu.memory_space<vmem>>, vector<1x512xf32>
    %14 = vector.broadcast %13 : vector<1x512xf32> to vector<64x512xf32>
    %15 = arith.addf %12, %14 : vector<64x512xf32>
    %c0_15 = arith.constant 0 : index
    %c0_16 = arith.constant 0 : index
    %16 = vector.load %arg14[%c0_15, %c0_16] : memref<64x512xf32, #tpu.memory_space<vmem>>, vector<64x512xf32>
    tpu.vector_store %arg14[%c0_15, %c0_16], %15 {strides = array<i32>} : memref<64x512xf32, #tpu.memory_space<vmem>>, vector<64x512xf32>,
    %c0_17 = arith.constant 0 : index
    %c0_18 = arith.constant 0 : index
    %17 = vector.load %arg15[%c0_17, %c0_18] : memref<8x128xbf16, #tpu.memory_space<vmem>>, vector<8x128xbf16>
    %c0_19 = arith.constant 0 : index
    %c0_20 = arith.constant 0 : index
    %18 = vector.load %arg16[%c0_19, %c0_20] : memref<8x128xf32, #tpu.memory_space<vmem>>, vector<8x128xf32>
    %c0_21 = arith.constant 0 : index
    %c0_22 = arith.constant 0 : index
    %19 = vector.load %arg17[%c0_21, %c0_22] : memref<8x128xbf16, #tpu.memory_space<vmem>>, vector<8x128xbf16>
    %c0_23 = arith.constant 0 : index
    %c0_24 = arith.constant 0 : index
    %20 = vector.load %arg18[%c0_23, %c0_24] : memref<8x128xf32, #tpu.memory_space<vmem>>, vector<8x128xf32>
    %c0_25 = arith.constant 0 : index
    %c0_26 = arith.constant 0 : index
    %21 = vector.load %arg13[%c0_25, %c0_26] : memref<64x512xf32, #tpu.memory_space<vmem>>, vector<8x512xf32>
    %c56 = arith.constant 56 : index
    %c0_27 = arith.constant 0 : index
    %22 = vector.load %arg14[%c56, %c0_27] : memref<64x512xf32, #tpu.memory_space<vmem>>, vector<8x512xf32>
    %c0_28 = arith.constant 0 : index
    %c0_29 = arith.constant 0 : index
    %23 = vector.load %arg7[%c0_28, %c0_29] : memref<128x512xbf16, #tpu.memory_space<vmem>>, vector<128x512xbf16>
    %cst_30 = arith.constant dense<0.000000e+00> : vector<8x512xf32>
    %24 = tpu.matmul %17, %23, %cst_30 {dimension_numbers = #tpu.dot_dimension_numbers<[1], [0], [0], [1], [0, 0, 1, 1], [], []>} : vector<8x128xbf16>, vector<128x512xbf16>, vector<8x512xf32> -> vector<8x512xf32>
    %25 = arith.addf %21, %24 : vector<8x512xf32>
    %26 = vector.extract_strided_slice %25 {offsets = [0, 0], sizes = [8, 128], strides = [1, 1]} : vector<8x512xf32> to vector<8x128xf32>
    %27 = arith.negf %26 : vector<8x128xf32>
    %28 = math.exp %27 : vector<8x128xf32>
    %cst_31 = arith.constant 1.000000e+00 : f32
    %29 = vector.broadcast %cst_31 : f32 to vector<8x128xf32>
    %30 = arith.addf %29, %28 : vector<8x128xf32>
    %31 = arith.divf %29, %30 : vector<8x128xf32>
    %32 = vector.extract_strided_slice %25 {offsets = [0, 128], sizes = [8, 128], strides = [1, 1]} : vector<8x512xf32> to vector<8x128xf32>
    %33 = arith.negf %32 : vector<8x128xf32>
    %34 = math.exp %33 : vector<8x128xf32>
    %cst_32 = arith.constant 1.000000e+00 : f32
    %35 = vector.broadcast %cst_32 : f32 to vector<8x128xf32>
    %36 = arith.addf %35, %34 : vector<8x128xf32>
    %37 = arith.divf %35, %36 : vector<8x128xf32>
    %38 = vector.extract_strided_slice %25 {offsets = [0, 256], sizes = [8, 128], strides = [1, 1]} : vector<8x512xf32> to vector<8x128xf32>
    %39 = math.tanh %38 : vector<8x128xf32>
    %40 = vector.extract_strided_slice %25 {offsets = [0, 384], sizes = [8, 128], strides = [1, 1]} : vector<8x512xf32> to vector<8x128xf32>
    %41 = arith.negf %40 : vector<8x128xf32>
    %42 = math.exp %41 : vector<8x128xf32>
    %cst_33 = arith.constant 1.000000e+00 : f32
    %43 = vector.broadcast %cst_33 : f32 to vector<8x128xf32>
    %44 = arith.addf %43, %42 : vector<8x128xf32>
    %45 = arith.divf %43, %44 : vector<8x128xf32>
    %46 = arith.mulf %37, %18 : vector<8x128xf32>
    %47 = arith.mulf %31, %39 : vector<8x128xf32>
    %48 = arith.addf %46, %47 : vector<8x128xf32>
    %49 = math.tanh %48 : vector<8x128xf32>
    %50 = arith.mulf %45, %49 : vector<8x128xf32>
    %51 = arith.truncf %50 : vector<8x128xf32> to vector<8x128xbf16>
    %c0_34 = arith.constant 0 : index
    %c0_35 = arith.constant 0 : index
    %52 = vector.load %arg8[%c0_34, %c0_35] : memref<128x512xbf16, #tpu.memory_space<vmem>>, vector<128x512xbf16>
    %cst_36 = arith.constant dense<0.000000e+00> : vector<8x512xf32>
    %53 = tpu.matmul %19, %52, %cst_36 {dimension_numbers = #tpu.dot_dimension_numbers<[1], [0], [0], [1], [0, 0, 1, 1], [], []>} : vector<8x128xbf16>, vector<128x512xbf16>, vector<8x512xf32> -> vector<8x512xf32>
    %54 = arith.addf %22, %53 : vector<8x512xf32>
    %55 = vector.extract_strided_slice %54 {offsets = [0, 0], sizes = [8, 128], strides = [1, 1]} : vector<8x512xf32> to vector<8x128xf32>
    %56 = arith.negf %55 : vector<8x128xf32>
    %57 = math.exp %56 : vector<8x128xf32>
    %cst_37 = arith.constant 1.000000e+00 : f32
    %58 = vector.broadcast %cst_37 : f32 to vector<8x128xf32>
    %59 = arith.addf %58, %57 : vector<8x128xf32>
    %60 = arith.divf %58, %59 : vector<8x128xf32>
    %61 = vector.extract_strided_slice %54 {offsets = [0, 128], sizes = [8, 128], strides = [1, 1]} : vector<8x512xf32> to vector<8x128xf32>
    %62 = arith.negf %61 : vector<8x128xf32>
    %63 = math.exp %62 : vector<8x128xf32>
    %cst_38 = arith.constant 1.000000e+00 : f32
    %64 = vector.broadcast %cst_38 : f32 to vector<8x128xf32>
    %65 = arith.addf %64, %63 : vector<8x128xf32>
    %66 = arith.divf %64, %65 : vector<8x128xf32>
    %67 = vector.extract_strided_slice %54 {offsets = [0, 256], sizes = [8, 128], strides = [1, 1]} : vector<8x512xf32> to vector<8x128xf32>
    %68 = math.tanh %67 : vector<8x128xf32>
    %69 = vector.extract_strided_slice %54 {offsets = [0, 384], sizes = [8, 128], strides = [1, 1]} : vector<8x512xf32> to vector<8x128xf32>
    %70 = arith.negf %69 : vector<8x128xf32>
    %71 = math.exp %70 : vector<8x128xf32>
    %cst_39 = arith.constant 1.000000e+00 : f32
    %72 = vector.broadcast %cst_39 : f32 to vector<8x128xf32>
    %73 = arith.addf %72, %71 : vector<8x128xf32>
    %74 = arith.divf %72, %73 : vector<8x128xf32>
    %75 = arith.mulf %66, %20 : vector<8x128xf32>
    %76 = arith.mulf %60, %68 : vector<8x128xf32>
    %77 = arith.addf %75, %76 : vector<8x128xf32>
    %78 = math.tanh %77 : vector<8x128xf32>
    %79 = arith.mulf %74, %78 : vector<8x128xf32>
    %80 = arith.truncf %79 : vector<8x128xf32> to vector<8x128xbf16>
    %c8 = arith.constant 8 : index
    %c0_40 = arith.constant 0 : index
    %81 = vector.load %arg13[%c8, %c0_40] : memref<64x512xf32, #tpu.memory_space<vmem>>, vector<8x512xf32>
    %c48 = arith.constant 48 : index
    %c0_41 = arith.constant 0 : index
    %82 = vector.load %arg14[%c48, %c0_41] : memref<64x512xf32, #tpu.memory_space<vmem>>, vector<8x512xf32>
    %c0_42 = arith.constant 0 : index
    %c0_43 = arith.constant 0 : index
    %83 = vector.load %arg7[%c0_42, %c0_43] : memref<128x512xbf16, #tpu.memory_space<vmem>>, vector<128x512xbf16>
    %cst_44 = arith.constant dense<0.000000e+00> : vector<8x512xf32>
    %84 = tpu.matmul %51, %83, %cst_44 {dimension_numbers = #tpu.dot_dimension_numbers<[1], [0], [0], [1], [0, 0, 1, 1], [], []>} : vector<8x128xbf16>, vector<128x512xbf16>, vector<8x512xf32> -> vector<8x512xf32>
    %85 = arith.addf %81, %84 : vector<8x512xf32>
    %86 = vector.extract_strided_slice %85 {offsets = [0, 0], sizes = [8, 128], strides = [1, 1]} : vector<8x512xf32> to vector<8x128xf32>
    %87 = arith.negf %86 : vector<8x128xf32>
    %88 = math.exp %87 : vector<8x128xf32>
    %cst_45 = arith.constant 1.000000e+00 : f32
    %89 = vector.broadcast %cst_45 : f32 to vector<8x128xf32>
    %90 = arith.addf %89, %88 : vector<8x128xf32>
    %91 = arith.divf %89, %90 : vector<8x128xf32>
    %92 = vector.extract_strided_slice %85 {offsets = [0, 128], sizes = [8, 128], strides = [1, 1]} : vector<8x512xf32> to vector<8x128xf32>
    %93 = arith.negf %92 : vector<8x128xf32>
    %94 = math.exp %93 : vector<8x128xf32>
    %cst_46 = arith.constant 1.000000e+00 : f32
    %95 = vector.broadcast %cst_46 : f32 to vector<8x128xf32>
    %96 = arith.addf %95, %94 : vector<8x128xf32>
    %97 = arith.divf %95, %96 : vector<8x128xf32>
    %98 = vector.extract_strided_slice %85 {offsets = [0, 256], sizes = [8, 128], strides = [1, 1]} : vector<8x512xf32> to vector<8x128xf32>
    %99 = math.tanh %98 : vector<8x128xf32>
    %100 = vector.extract_strided_slice %85 {offsets = [0, 384], sizes = [8, 128], strides = [1, 1]} : vector<8x512xf32> to vector<8x128xf32>
    %101 = arith.negf %100 : vector<8x128xf32>
    %102 = math.exp %101 : vector<8x128xf32>
    %cst_47 = arith.constant 1.000000e+00 : f32
    %103 = vector.broadcast %cst_47 : f32 to vector<8x128xf32>
    %104 = arith.addf %103, %102 : vector<8x128xf32>
    %105 = arith.divf %103, %104 : vector<8x128xf32>
    %106 = arith.mulf %97, %48 : vector<8x128xf32>
    %107 = arith.mulf %91, %99 : vector<8x128xf32>
    %108 = arith.addf %106, %107 : vector<8x128xf32>
    %109 = math.tanh %108 : vector<8x128xf32>
    %110 = arith.mulf %105, %109 : vector<8x128xf32>
    %111 = arith.truncf %110 : vector<8x128xf32> to vector<8x128xbf16>
    %c0_48 = arith.constant 0 : index
    %c0_49 = arith.constant 0 : index
    %112 = vector.load %arg8[%c0_48, %c0_49] : memref<128x512xbf16, #tpu.memory_space<vmem>>, vector<128x512xbf16>
    %cst_50 = arith.constant dense<0.000000e+00> : vector<8x512xf32>
    %113 = tpu.matmul %80, %112, %cst_50 {dimension_numbers = #tpu.dot_dimension_numbers<[1], [0], [0], [1], [0, 0, 1, 1], [], []>} : vector<8x128xbf16>, vector<128x512xbf16>, vector<8x512xf32> -> vector<8x512xf32>
    %114 = arith.addf %82, %113 : vector<8x512xf32>
    %115 = vector.extract_strided_slice %114 {offsets = [0, 0], sizes = [8, 128], strides = [1, 1]} : vector<8x512xf32> to vector<8x128xf32>
    %116 = arith.negf %115 : vector<8x128xf32>
    %117 = math.exp %116 : vector<8x128xf32>
    %cst_51 = arith.constant 1.000000e+00 : f32
    %118 = vector.broadcast %cst_51 : f32 to vector<8x128xf32>
    %119 = arith.addf %118, %117 : vector<8x128xf32>
    %120 = arith.divf %118, %119 : vector<8x128xf32>
    %121 = vector.extract_strided_slice %114 {offsets = [0, 128], sizes = [8, 128], strides = [1, 1]} : vector<8x512xf32> to vector<8x128xf32>
    %122 = arith.negf %121 : vector<8x128xf32>
    %123 = math.exp %122 : vector<8x128xf32>
    %cst_52 = arith.constant 1.000000e+00 : f32
    %124 = vector.broadcast %cst_52 : f32 to vector<8x128xf32>
    %125 = arith.addf %124, %123 : vector<8x128xf32>
    %126 = arith.divf %124, %125 : vector<8x128xf32>
    %127 = vector.extract_strided_slice %114 {offsets = [0, 256], sizes = [8, 128], strides = [1, 1]} : vector<8x512xf32> to vector<8x128xf32>
    %128 = math.tanh %127 : vector<8x128xf32>
    %129 = vector.extract_strided_slice %114 {offsets = [0, 384], sizes = [8, 128], strides = [1, 1]} : vector<8x512xf32> to vector<8x128xf32>
    %130 = arith.negf %129 : vector<8x128xf32>
    %131 = math.exp %130 : vector<8x128xf32>
    %cst_53 = arith.constant 1.000000e+00 : f32
    %132 = vector.broadcast %cst_53 : f32 to vector<8x128xf32>
    %133 = arith.addf %132, %131 : vector<8x128xf32>
    %134 = arith.divf %132, %133 : vector<8x128xf32>
    %135 = arith.mulf %126, %77 : vector<8x128xf32>
    %136 = arith.mulf %120, %128 : vector<8x128xf32>
    %137 = arith.addf %135, %136 : vector<8x128xf32>
    %138 = math.tanh %137 : vector<8x128xf32>
    %139 = arith.mulf %134, %138 : vector<8x128xf32>
    %140 = arith.truncf %139 : vector<8x128xf32> to vector<8x128xbf16>
    %c16 = arith.constant 16 : index
    %c0_54 = arith.constant 0 : index
    %141 = vector.load %arg13[%c16, %c0_54] : memref<64x512xf32, #tpu.memory_space<vmem>>, vector<8x512xf32>
    %c40 = arith.constant 40 : index
    %c0_55 = arith.constant 0 : index
    %142 = vector.load %arg14[%c40, %c0_55] : memref<64x512xf32, #tpu.memory_space<vmem>>, vector<8x512xf32>
    %c0_56 = arith.constant 0 : index
    %c0_57 = arith.constant 0 : index
    %143 = vector.load %arg7[%c0_56, %c0_57] : memref<128x512xbf16, #tpu.memory_space<vmem>>, vector<128x512xbf16>
    %cst_58 = arith.constant dense<0.000000e+00> : vector<8x512xf32>
    %144 = tpu.matmul %111, %143, %cst_58 {dimension_numbers = #tpu.dot_dimension_numbers<[1], [0], [0], [1], [0, 0, 1, 1], [], []>} : vector<8x128xbf16>, vector<128x512xbf16>, vector<8x512xf32> -> vector<8x512xf32>
    %145 = arith.addf %141, %144 : vector<8x512xf32>
    %146 = vector.extract_strided_slice %145 {offsets = [0, 0], sizes = [8, 128], strides = [1, 1]} : vector<8x512xf32> to vector<8x128xf32>
    %147 = arith.negf %146 : vector<8x128xf32>
    %148 = math.exp %147 : vector<8x128xf32>
    %cst_59 = arith.constant 1.000000e+00 : f32
    %149 = vector.broadcast %cst_59 : f32 to vector<8x128xf32>
    %150 = arith.addf %149, %148 : vector<8x128xf32>
    %151 = arith.divf %149, %150 : vector<8x128xf32>
    %152 = vector.extract_strided_slice %145 {offsets = [0, 128], sizes = [8, 128], strides = [1, 1]} : vector<8x512xf32> to vector<8x128xf32>
    %153 = arith.negf %152 : vector<8x128xf32>
    %154 = math.exp %153 : vector<8x128xf32>
    %cst_60 = arith.constant 1.000000e+00 : f32
    %155 = vector.broadcast %cst_60 : f32 to vector<8x128xf32>
    %156 = arith.addf %155, %154 : vector<8x128xf32>
    %157 = arith.divf %155, %156 : vector<8x128xf32>
    %158 = vector.extract_strided_slice %145 {offsets = [0, 256], sizes = [8, 128], strides = [1, 1]} : vector<8x512xf32> to vector<8x128xf32>
    %159 = math.tanh %158 : vector<8x128xf32>
    %160 = vector.extract_strided_slice %145 {offsets = [0, 384], sizes = [8, 128], strides = [1, 1]} : vector<8x512xf32> to vector<8x128xf32>
    %161 = arith.negf %160 : vector<8x128xf32>
    %162 = math.exp %161 : vector<8x128xf32>
    %cst_61 = arith.constant 1.000000e+00 : f32
    %163 = vector.broadcast %cst_61 : f32 to vector<8x128xf32>
    %164 = arith.addf %163, %162 : vector<8x128xf32>
    %165 = arith.divf %163, %164 : vector<8x128xf32>
    %166 = arith.mulf %157, %108 : vector<8x128xf32>
    %167 = arith.mulf %151, %159 : vector<8x128xf32>
    %168 = arith.addf %166, %167 : vector<8x128xf32>
    %169 = math.tanh %168 : vector<8x128xf32>
    %170 = arith.mulf %165, %169 : vector<8x128xf32>
    %171 = arith.truncf %170 : vector<8x128xf32> to vector<8x128xbf16>
    %c0_62 = arith.constant 0 : index
    %c0_63 = arith.constant 0 : index
    %172 = vector.load %arg8[%c0_62, %c0_63] : memref<128x512xbf16, #tpu.memory_space<vmem>>, vector<128x512xbf16>
    %cst_64 = arith.constant dense<0.000000e+00> : vector<8x512xf32>
    %173 = tpu.matmul %140, %172, %cst_64 {dimension_numbers = #tpu.dot_dimension_numbers<[1], [0], [0], [1], [0, 0, 1, 1], [], []>} : vector<8x128xbf16>, vector<128x512xbf16>, vector<8x512xf32> -> vector<8x512xf32>
    %174 = arith.addf %142, %173 : vector<8x512xf32>
    %175 = vector.extract_strided_slice %174 {offsets = [0, 0], sizes = [8, 128], strides = [1, 1]} : vector<8x512xf32> to vector<8x128xf32>
    %176 = arith.negf %175 : vector<8x128xf32>
    %177 = math.exp %176 : vector<8x128xf32>
    %cst_65 = arith.constant 1.000000e+00 : f32
    %178 = vector.broadcast %cst_65 : f32 to vector<8x128xf32>
    %179 = arith.addf %178, %177 : vector<8x128xf32>
    %180 = arith.divf %178, %179 : vector<8x128xf32>
    %181 = vector.extract_strided_slice %174 {offsets = [0, 128], sizes = [8, 128], strides = [1, 1]} : vector<8x512xf32> to vector<8x128xf32>
    %182 = arith.negf %181 : vector<8x128xf32>
    %183 = math.exp %182 : vector<8x128xf32>
    %cst_66 = arith.constant 1.000000e+00 : f32
    %184 = vector.broadcast %cst_66 : f32 to vector<8x128xf32>
    %185 = arith.addf %184, %183 : vector<8x128xf32>
    %186 = arith.divf %184, %185 : vector<8x128xf32>
    %187 = vector.extract_strided_slice %174 {offsets = [0, 256], sizes = [8, 128], strides = [1, 1]} : vector<8x512xf32> to vector<8x128xf32>
    %188 = math.tanh %187 : vector<8x128xf32>
    %189 = vector.extract_strided_slice %174 {offsets = [0, 384], sizes = [8, 128], strides = [1, 1]} : vector<8x512xf32> to vector<8x128xf32>
    %190 = arith.negf %189 : vector<8x128xf32>
    %191 = math.exp %190 : vector<8x128xf32>
    %cst_67 = arith.constant 1.000000e+00 : f32
    %192 = vector.broadcast %cst_67 : f32 to vector<8x128xf32>
    %193 = arith.addf %192, %191 : vector<8x128xf32>
    %194 = arith.divf %192, %193 : vector<8x128xf32>
    %195 = arith.mulf %186, %137 : vector<8x128xf32>
    %196 = arith.mulf %180, %188 : vector<8x128xf32>
    %197 = arith.addf %195, %196 : vector<8x128xf32>
    %198 = math.tanh %197 : vector<8x128xf32>
    %199 = arith.mulf %194, %198 : vector<8x128xf32>
    %200 = arith.truncf %199 : vector<8x128xf32> to vector<8x128xbf16>
    %c24 = arith.constant 24 : index
    %c0_68 = arith.constant 0 : index
    %201 = vector.load %arg13[%c24, %c0_68] : memref<64x512xf32, #tpu.memory_space<vmem>>, vector<8x512xf32>
    %c32 = arith.constant 32 : index
    %c0_69 = arith.constant 0 : index
    %202 = vector.load %arg14[%c32, %c0_69] : memref<64x512xf32, #tpu.memory_space<vmem>>, vector<8x512xf32>
    %c0_70 = arith.constant 0 : index
    %c0_71 = arith.constant 0 : index
    %203 = vector.load %arg7[%c0_70, %c0_71] : memref<128x512xbf16, #tpu.memory_space<vmem>>, vector<128x512xbf16>
    %cst_72 = arith.constant dense<0.000000e+00> : vector<8x512xf32>
    %204 = tpu.matmul %171, %203, %cst_72 {dimension_numbers = #tpu.dot_dimension_numbers<[1], [0], [0], [1], [0, 0, 1, 1], [], []>} : vector<8x128xbf16>, vector<128x512xbf16>, vector<8x512xf32> -> vector<8x512xf32>
    %205 = arith.addf %201, %204 : vector<8x512xf32>
    %206 = vector.extract_strided_slice %205 {offsets = [0, 0], sizes = [8, 128], strides = [1, 1]} : vector<8x512xf32> to vector<8x128xf32>
    %207 = arith.negf %206 : vector<8x128xf32>
    %208 = math.exp %207 : vector<8x128xf32>
    %cst_73 = arith.constant 1.000000e+00 : f32
    %209 = vector.broadcast %cst_73 : f32 to vector<8x128xf32>
    %210 = arith.addf %209, %208 : vector<8x128xf32>
    %211 = arith.divf %209, %210 : vector<8x128xf32>
    %212 = vector.extract_strided_slice %205 {offsets = [0, 128], sizes = [8, 128], strides = [1, 1]} : vector<8x512xf32> to vector<8x128xf32>
    %213 = arith.negf %212 : vector<8x128xf32>
    %214 = math.exp %213 : vector<8x128xf32>
    %cst_74 = arith.constant 1.000000e+00 : f32
    %215 = vector.broadcast %cst_74 : f32 to vector<8x128xf32>
    %216 = arith.addf %215, %214 : vector<8x128xf32>
    %217 = arith.divf %215, %216 : vector<8x128xf32>
    %218 = vector.extract_strided_slice %205 {offsets = [0, 256], sizes = [8, 128], strides = [1, 1]} : vector<8x512xf32> to vector<8x128xf32>
    %219 = math.tanh %218 : vector<8x128xf32>
    %220 = vector.extract_strided_slice %205 {offsets = [0, 384], sizes = [8, 128], strides = [1, 1]} : vector<8x512xf32> to vector<8x128xf32>
    %221 = arith.negf %220 : vector<8x128xf32>
    %222 = math.exp %221 : vector<8x128xf32>
    %cst_75 = arith.constant 1.000000e+00 : f32
    %223 = vector.broadcast %cst_75 : f32 to vector<8x128xf32>
    %224 = arith.addf %223, %222 : vector<8x128xf32>
    %225 = arith.divf %223, %224 : vector<8x128xf32>
    %226 = arith.mulf %217, %168 : vector<8x128xf32>
    %227 = arith.mulf %211, %219 : vector<8x128xf32>
    %228 = arith.addf %226, %227 : vector<8x128xf32>
    %229 = math.tanh %228 : vector<8x128xf32>
    %230 = arith.mulf %225, %229 : vector<8x128xf32>
    %231 = arith.truncf %230 : vector<8x128xf32> to vector<8x128xbf16>
    %c0_76 = arith.constant 0 : index
    %c0_77 = arith.constant 0 : index
    %232 = vector.load %arg8[%c0_76, %c0_77] : memref<128x512xbf16, #tpu.memory_space<vmem>>, vector<128x512xbf16>
    %cst_78 = arith.constant dense<0.000000e+00> : vector<8x512xf32>
    %233 = tpu.matmul %200, %232, %cst_78 {dimension_numbers = #tpu.dot_dimension_numbers<[1], [0], [0], [1], [0, 0, 1, 1], [], []>} : vector<8x128xbf16>, vector<128x512xbf16>, vector<8x512xf32> -> vector<8x512xf32>
    %234 = arith.addf %202, %233 : vector<8x512xf32>
    %235 = vector.extract_strided_slice %234 {offsets = [0, 0], sizes = [8, 128], strides = [1, 1]} : vector<8x512xf32> to vector<8x128xf32>
    %236 = arith.negf %235 : vector<8x128xf32>
    %237 = math.exp %236 : vector<8x128xf32>
    %cst_79 = arith.constant 1.000000e+00 : f32
    %238 = vector.broadcast %cst_79 : f32 to vector<8x128xf32>
    %239 = arith.addf %238, %237 : vector<8x128xf32>
    %240 = arith.divf %238, %239 : vector<8x128xf32>
    %241 = vector.extract_strided_slice %234 {offsets = [0, 128], sizes = [8, 128], strides = [1, 1]} : vector<8x512xf32> to vector<8x128xf32>
    %242 = arith.negf %241 : vector<8x128xf32>
    %243 = math.exp %242 : vector<8x128xf32>
    %cst_80 = arith.constant 1.000000e+00 : f32
    %244 = vector.broadcast %cst_80 : f32 to vector<8x128xf32>
    %245 = arith.addf %244, %243 : vector<8x128xf32>
    %246 = arith.divf %244, %245 : vector<8x128xf32>
    %247 = vector.extract_strided_slice %234 {offsets = [0, 256], sizes = [8, 128], strides = [1, 1]} : vector<8x512xf32> to vector<8x128xf32>
    %248 = math.tanh %247 : vector<8x128xf32>
    %249 = vector.extract_strided_slice %234 {offsets = [0, 384], sizes = [8, 128], strides = [1, 1]} : vector<8x512xf32> to vector<8x128xf32>
    %250 = arith.negf %249 : vector<8x128xf32>
    %251 = math.exp %250 : vector<8x128xf32>
    %cst_81 = arith.constant 1.000000e+00 : f32
    %252 = vector.broadcast %cst_81 : f32 to vector<8x128xf32>
    %253 = arith.addf %252, %251 : vector<8x128xf32>
    %254 = arith.divf %252, %253 : vector<8x128xf32>
    %255 = arith.mulf %246, %197 : vector<8x128xf32>
    %256 = arith.mulf %240, %248 : vector<8x128xf32>
    %257 = arith.addf %255, %256 : vector<8x128xf32>
    %258 = math.tanh %257 : vector<8x128xf32>
    %259 = arith.mulf %254, %258 : vector<8x128xf32>
    %260 = arith.truncf %259 : vector<8x128xf32> to vector<8x128xbf16>
    %c32_82 = arith.constant 32 : index
    %c0_83 = arith.constant 0 : index
    %261 = vector.load %arg13[%c32_82, %c0_83] : memref<64x512xf32, #tpu.memory_space<vmem>>, vector<8x512xf32>
    %c24_84 = arith.constant 24 : index
    %c0_85 = arith.constant 0 : index
    %262 = vector.load %arg14[%c24_84, %c0_85] : memref<64x512xf32, #tpu.memory_space<vmem>>, vector<8x512xf32>
    %c0_86 = arith.constant 0 : index
    %c0_87 = arith.constant 0 : index
    %263 = vector.load %arg7[%c0_86, %c0_87] : memref<128x512xbf16, #tpu.memory_space<vmem>>, vector<128x512xbf16>
    %cst_88 = arith.constant dense<0.000000e+00> : vector<8x512xf32>
    %264 = tpu.matmul %231, %263, %cst_88 {dimension_numbers = #tpu.dot_dimension_numbers<[1], [0], [0], [1], [0, 0, 1, 1], [], []>} : vector<8x128xbf16>, vector<128x512xbf16>, vector<8x512xf32> -> vector<8x512xf32>
    %265 = arith.addf %261, %264 : vector<8x512xf32>
    %266 = vector.extract_strided_slice %265 {offsets = [0, 0], sizes = [8, 128], strides = [1, 1]} : vector<8x512xf32> to vector<8x128xf32>
    %267 = arith.negf %266 : vector<8x128xf32>
    %268 = math.exp %267 : vector<8x128xf32>
    %cst_89 = arith.constant 1.000000e+00 : f32
    %269 = vector.broadcast %cst_89 : f32 to vector<8x128xf32>
    %270 = arith.addf %269, %268 : vector<8x128xf32>
    %271 = arith.divf %269, %270 : vector<8x128xf32>
    %272 = vector.extract_strided_slice %265 {offsets = [0, 128], sizes = [8, 128], strides = [1, 1]} : vector<8x512xf32> to vector<8x128xf32>
    %273 = arith.negf %272 : vector<8x128xf32>
    %274 = math.exp %273 : vector<8x128xf32>
    %cst_90 = arith.constant 1.000000e+00 : f32
    %275 = vector.broadcast %cst_90 : f32 to vector<8x128xf32>
    %276 = arith.addf %275, %274 : vector<8x128xf32>
    %277 = arith.divf %275, %276 : vector<8x128xf32>
    %278 = vector.extract_strided_slice %265 {offsets = [0, 256], sizes = [8, 128], strides = [1, 1]} : vector<8x512xf32> to vector<8x128xf32>
    %279 = math.tanh %278 : vector<8x128xf32>
    %280 = vector.extract_strided_slice %265 {offsets = [0, 384], sizes = [8, 128], strides = [1, 1]} : vector<8x512xf32> to vector<8x128xf32>
    %281 = arith.negf %280 : vector<8x128xf32>
    %282 = math.exp %281 : vector<8x128xf32>
    %cst_91 = arith.constant 1.000000e+00 : f32
    %283 = vector.broadcast %cst_91 : f32 to vector<8x128xf32>
    %284 = arith.addf %283, %282 : vector<8x128xf32>
    %285 = arith.divf %283, %284 : vector<8x128xf32>
    %286 = arith.mulf %277, %228 : vector<8x128xf32>
    %287 = arith.mulf %271, %279 : vector<8x128xf32>
    %288 = arith.addf %286, %287 : vector<8x128xf32>
    %289 = math.tanh %288 : vector<8x128xf32>
    %290 = arith.mulf %285, %289 : vector<8x128xf32>
    %291 = arith.truncf %290 : vector<8x128xf32> to vector<8x128xbf16>
    %c0_92 = arith.constant 0 : index
    %c0_93 = arith.constant 0 : index
    %292 = vector.load %arg8[%c0_92, %c0_93] : memref<128x512xbf16, #tpu.memory_space<vmem>>, vector<128x512xbf16>
    %cst_94 = arith.constant dense<0.000000e+00> : vector<8x512xf32>
    %293 = tpu.matmul %260, %292, %cst_94 {dimension_numbers = #tpu.dot_dimension_numbers<[1], [0], [0], [1], [0, 0, 1, 1], [], []>} : vector<8x128xbf16>, vector<128x512xbf16>, vector<8x512xf32> -> vector<8x512xf32>
    %294 = arith.addf %262, %293 : vector<8x512xf32>
    %295 = vector.extract_strided_slice %294 {offsets = [0, 0], sizes = [8, 128], strides = [1, 1]} : vector<8x512xf32> to vector<8x128xf32>
    %296 = arith.negf %295 : vector<8x128xf32>
    %297 = math.exp %296 : vector<8x128xf32>
    %cst_95 = arith.constant 1.000000e+00 : f32
    %298 = vector.broadcast %cst_95 : f32 to vector<8x128xf32>
    %299 = arith.addf %298, %297 : vector<8x128xf32>
    %300 = arith.divf %298, %299 : vector<8x128xf32>
    %301 = vector.extract_strided_slice %294 {offsets = [0, 128], sizes = [8, 128], strides = [1, 1]} : vector<8x512xf32> to vector<8x128xf32>
    %302 = arith.negf %301 : vector<8x128xf32>
    %303 = math.exp %302 : vector<8x128xf32>
    %cst_96 = arith.constant 1.000000e+00 : f32
    %304 = vector.broadcast %cst_96 : f32 to vector<8x128xf32>
    %305 = arith.addf %304, %303 : vector<8x128xf32>
    %306 = arith.divf %304, %305 : vector<8x128xf32>
    %307 = vector.extract_strided_slice %294 {offsets = [0, 256], sizes = [8, 128], strides = [1, 1]} : vector<8x512xf32> to vector<8x128xf32>
    %308 = math.tanh %307 : vector<8x128xf32>
    %309 = vector.extract_strided_slice %294 {offsets = [0, 384], sizes = [8, 128], strides = [1, 1]} : vector<8x512xf32> to vector<8x128xf32>
    %310 = arith.negf %309 : vector<8x128xf32>
    %311 = math.exp %310 : vector<8x128xf32>
    %cst_97 = arith.constant 1.000000e+00 : f32
    %312 = vector.broadcast %cst_97 : f32 to vector<8x128xf32>
    %313 = arith.addf %312, %311 : vector<8x128xf32>
    %314 = arith.divf %312, %313 : vector<8x128xf32>
    %315 = arith.mulf %306, %257 : vector<8x128xf32>
    %316 = arith.mulf %300, %308 : vector<8x128xf32>
    %317 = arith.addf %315, %316 : vector<8x128xf32>
    %318 = math.tanh %317 : vector<8x128xf32>
    %319 = arith.mulf %314, %318 : vector<8x128xf32>
    %320 = arith.truncf %319 : vector<8x128xf32> to vector<8x128xbf16>
    %c40_98 = arith.constant 40 : index
    %c0_99 = arith.constant 0 : index
    %321 = vector.load %arg13[%c40_98, %c0_99] : memref<64x512xf32, #tpu.memory_space<vmem>>, vector<8x512xf32>
    %c16_100 = arith.constant 16 : index
    %c0_101 = arith.constant 0 : index
    %322 = vector.load %arg14[%c16_100, %c0_101] : memref<64x512xf32, #tpu.memory_space<vmem>>, vector<8x512xf32>
    %c0_102 = arith.constant 0 : index
    %c0_103 = arith.constant 0 : index
    %323 = vector.load %arg7[%c0_102, %c0_103] : memref<128x512xbf16, #tpu.memory_space<vmem>>, vector<128x512xbf16>
    %cst_104 = arith.constant dense<0.000000e+00> : vector<8x512xf32>
    %324 = tpu.matmul %291, %323, %cst_104 {dimension_numbers = #tpu.dot_dimension_numbers<[1], [0], [0], [1], [0, 0, 1, 1], [], []>} : vector<8x128xbf16>, vector<128x512xbf16>, vector<8x512xf32> -> vector<8x512xf32>
    %325 = arith.addf %321, %324 : vector<8x512xf32>
    %326 = vector.extract_strided_slice %325 {offsets = [0, 0], sizes = [8, 128], strides = [1, 1]} : vector<8x512xf32> to vector<8x128xf32>
    %327 = arith.negf %326 : vector<8x128xf32>
    %328 = math.exp %327 : vector<8x128xf32>
    %cst_105 = arith.constant 1.000000e+00 : f32
    %329 = vector.broadcast %cst_105 : f32 to vector<8x128xf32>
    %330 = arith.addf %329, %328 : vector<8x128xf32>
    %331 = arith.divf %329, %330 : vector<8x128xf32>
    %332 = vector.extract_strided_slice %325 {offsets = [0, 128], sizes = [8, 128], strides = [1, 1]} : vector<8x512xf32> to vector<8x128xf32>
    %333 = arith.negf %332 : vector<8x128xf32>
    %334 = math.exp %333 : vector<8x128xf32>
    %cst_106 = arith.constant 1.000000e+00 : f32
    %335 = vector.broadcast %cst_106 : f32 to vector<8x128xf32>
    %336 = arith.addf %335, %334 : vector<8x128xf32>
    %337 = arith.divf %335, %336 : vector<8x128xf32>
    %338 = vector.extract_strided_slice %325 {offsets = [0, 256], sizes = [8, 128], strides = [1, 1]} : vector<8x512xf32> to vector<8x128xf32>
    %339 = math.tanh %338 : vector<8x128xf32>
    %340 = vector.extract_strided_slice %325 {offsets = [0, 384], sizes = [8, 128], strides = [1, 1]} : vector<8x512xf32> to vector<8x128xf32>
    %341 = arith.negf %340 : vector<8x128xf32>
    %342 = math.exp %341 : vector<8x128xf32>
    %cst_107 = arith.constant 1.000000e+00 : f32
    %343 = vector.broadcast %cst_107 : f32 to vector<8x128xf32>
    %344 = arith.addf %343, %342 : vector<8x128xf32>
    %345 = arith.divf %343, %344 : vector<8x128xf32>
    %346 = arith.mulf %337, %288 : vector<8x128xf32>
    %347 = arith.mulf %331, %339 : vector<8x128xf32>
    %348 = arith.addf %346, %347 : vector<8x128xf32>
    %349 = math.tanh %348 : vector<8x128xf32>
    %350 = arith.mulf %345, %349 : vector<8x128xf32>
    %351 = arith.truncf %350 : vector<8x128xf32> to vector<8x128xbf16>
    %c0_108 = arith.constant 0 : index
    %c0_109 = arith.constant 0 : index
    %352 = vector.load %arg8[%c0_108, %c0_109] : memref<128x512xbf16, #tpu.memory_space<vmem>>, vector<128x512xbf16>
    %cst_110 = arith.constant dense<0.000000e+00> : vector<8x512xf32>
    %353 = tpu.matmul %320, %352, %cst_110 {dimension_numbers = #tpu.dot_dimension_numbers<[1], [0], [0], [1], [0, 0, 1, 1], [], []>} : vector<8x128xbf16>, vector<128x512xbf16>, vector<8x512xf32> -> vector<8x512xf32>
    %354 = arith.addf %322, %353 : vector<8x512xf32>
    %355 = vector.extract_strided_slice %354 {offsets = [0, 0], sizes = [8, 128], strides = [1, 1]} : vector<8x512xf32> to vector<8x128xf32>
    %356 = arith.negf %355 : vector<8x128xf32>
    %357 = math.exp %356 : vector<8x128xf32>
    %cst_111 = arith.constant 1.000000e+00 : f32
    %358 = vector.broadcast %cst_111 : f32 to vector<8x128xf32>
    %359 = arith.addf %358, %357 : vector<8x128xf32>
    %360 = arith.divf %358, %359 : vector<8x128xf32>
    %361 = vector.extract_strided_slice %354 {offsets = [0, 128], sizes = [8, 128], strides = [1, 1]} : vector<8x512xf32> to vector<8x128xf32>
    %362 = arith.negf %361 : vector<8x128xf32>
    %363 = math.exp %362 : vector<8x128xf32>
    %cst_112 = arith.constant 1.000000e+00 : f32
    %364 = vector.broadcast %cst_112 : f32 to vector<8x128xf32>
    %365 = arith.addf %364, %363 : vector<8x128xf32>
    %366 = arith.divf %364, %365 : vector<8x128xf32>
    %367 = vector.extract_strided_slice %354 {offsets = [0, 256], sizes = [8, 128], strides = [1, 1]} : vector<8x512xf32> to vector<8x128xf32>
    %368 = math.tanh %367 : vector<8x128xf32>
    %369 = vector.extract_strided_slice %354 {offsets = [0, 384], sizes = [8, 128], strides = [1, 1]} : vector<8x512xf32> to vector<8x128xf32>
    %370 = arith.negf %369 : vector<8x128xf32>
    %371 = math.exp %370 : vector<8x128xf32>
    %cst_113 = arith.constant 1.000000e+00 : f32
    %372 = vector.broadcast %cst_113 : f32 to vector<8x128xf32>
    %373 = arith.addf %372, %371 : vector<8x128xf32>
    %374 = arith.divf %372, %373 : vector<8x128xf32>
    %375 = arith.mulf %366, %317 : vector<8x128xf32>
    %376 = arith.mulf %360, %368 : vector<8x128xf32>
    %377 = arith.addf %375, %376 : vector<8x128xf32>
    %378 = math.tanh %377 : vector<8x128xf32>
    %379 = arith.mulf %374, %378 : vector<8x128xf32>
    %380 = arith.truncf %379 : vector<8x128xf32> to vector<8x128xbf16>
    %c48_114 = arith.constant 48 : index
    %c0_115 = arith.constant 0 : index
    %381 = vector.load %arg13[%c48_114, %c0_115] : memref<64x512xf32, #tpu.memory_space<vmem>>, vector<8x512xf32>
    %c8_116 = arith.constant 8 : index
    %c0_117 = arith.constant 0 : index
    %382 = vector.load %arg14[%c8_116, %c0_117] : memref<64x512xf32, #tpu.memory_space<vmem>>, vector<8x512xf32>
    %c0_118 = arith.constant 0 : index
    %c0_119 = arith.constant 0 : index
    %383 = vector.load %arg7[%c0_118, %c0_119] : memref<128x512xbf16, #tpu.memory_space<vmem>>, vector<128x512xbf16>
    %cst_120 = arith.constant dense<0.000000e+00> : vector<8x512xf32>
    %384 = tpu.matmul %351, %383, %cst_120 {dimension_numbers = #tpu.dot_dimension_numbers<[1], [0], [0], [1], [0, 0, 1, 1], [], []>} : vector<8x128xbf16>, vector<128x512xbf16>, vector<8x512xf32> -> vector<8x512xf32>
    %385 = arith.addf %381, %384 : vector<8x512xf32>
    %386 = vector.extract_strided_slice %385 {offsets = [0, 0], sizes = [8, 128], strides = [1, 1]} : vector<8x512xf32> to vector<8x128xf32>
    %387 = arith.negf %386 : vector<8x128xf32>
    %388 = math.exp %387 : vector<8x128xf32>
    %cst_121 = arith.constant 1.000000e+00 : f32
    %389 = vector.broadcast %cst_121 : f32 to vector<8x128xf32>
    %390 = arith.addf %389, %388 : vector<8x128xf32>
    %391 = arith.divf %389, %390 : vector<8x128xf32>
    %392 = vector.extract_strided_slice %385 {offsets = [0, 128], sizes = [8, 128], strides = [1, 1]} : vector<8x512xf32> to vector<8x128xf32>
    %393 = arith.negf %392 : vector<8x128xf32>
    %394 = math.exp %393 : vector<8x128xf32>
    %cst_122 = arith.constant 1.000000e+00 : f32
    %395 = vector.broadcast %cst_122 : f32 to vector<8x128xf32>
    %396 = arith.addf %395, %394 : vector<8x128xf32>
    %397 = arith.divf %395, %396 : vector<8x128xf32>
    %398 = vector.extract_strided_slice %385 {offsets = [0, 256], sizes = [8, 128], strides = [1, 1]} : vector<8x512xf32> to vector<8x128xf32>
    %399 = math.tanh %398 : vector<8x128xf32>
    %400 = vector.extract_strided_slice %385 {offsets = [0, 384], sizes = [8, 128], strides = [1, 1]} : vector<8x512xf32> to vector<8x128xf32>
    %401 = arith.negf %400 : vector<8x128xf32>
    %402 = math.exp %401 : vector<8x128xf32>
    %cst_123 = arith.constant 1.000000e+00 : f32
    %403 = vector.broadcast %cst_123 : f32 to vector<8x128xf32>
    %404 = arith.addf %403, %402 : vector<8x128xf32>
    %405 = arith.divf %403, %404 : vector<8x128xf32>
    %406 = arith.mulf %397, %348 : vector<8x128xf32>
    %407 = arith.mulf %391, %399 : vector<8x128xf32>
    %408 = arith.addf %406, %407 : vector<8x128xf32>
    %409 = math.tanh %408 : vector<8x128xf32>
    %410 = arith.mulf %405, %409 : vector<8x128xf32>
    %411 = arith.truncf %410 : vector<8x128xf32> to vector<8x128xbf16>
    %c0_124 = arith.constant 0 : index
    %c0_125 = arith.constant 0 : index
    %412 = vector.load %arg8[%c0_124, %c0_125] : memref<128x512xbf16, #tpu.memory_space<vmem>>, vector<128x512xbf16>
    %cst_126 = arith.constant dense<0.000000e+00> : vector<8x512xf32>
    %413 = tpu.matmul %380, %412, %cst_126 {dimension_numbers = #tpu.dot_dimension_numbers<[1], [0], [0], [1], [0, 0, 1, 1], [], []>} : vector<8x128xbf16>, vector<128x512xbf16>, vector<8x512xf32> -> vector<8x512xf32>
    %414 = arith.addf %382, %413 : vector<8x512xf32>
    %415 = vector.extract_strided_slice %414 {offsets = [0, 0], sizes = [8, 128], strides = [1, 1]} : vector<8x512xf32> to vector<8x128xf32>
    %416 = arith.negf %415 : vector<8x128xf32>
    %417 = math.exp %416 : vector<8x128xf32>
    %cst_127 = arith.constant 1.000000e+00 : f32
    %418 = vector.broadcast %cst_127 : f32 to vector<8x128xf32>
    %419 = arith.addf %418, %417 : vector<8x128xf32>
    %420 = arith.divf %418, %419 : vector<8x128xf32>
    %421 = vector.extract_strided_slice %414 {offsets = [0, 128], sizes = [8, 128], strides = [1, 1]} : vector<8x512xf32> to vector<8x128xf32>
    %422 = arith.negf %421 : vector<8x128xf32>
    %423 = math.exp %422 : vector<8x128xf32>
    %cst_128 = arith.constant 1.000000e+00 : f32
    %424 = vector.broadcast %cst_128 : f32 to vector<8x128xf32>
    %425 = arith.addf %424, %423 : vector<8x128xf32>
    %426 = arith.divf %424, %425 : vector<8x128xf32>
    %427 = vector.extract_strided_slice %414 {offsets = [0, 256], sizes = [8, 128], strides = [1, 1]} : vector<8x512xf32> to vector<8x128xf32>
    %428 = math.tanh %427 : vector<8x128xf32>
    %429 = vector.extract_strided_slice %414 {offsets = [0, 384], sizes = [8, 128], strides = [1, 1]} : vector<8x512xf32> to vector<8x128xf32>
    %430 = arith.negf %429 : vector<8x128xf32>
    %431 = math.exp %430 : vector<8x128xf32>
    %cst_129 = arith.constant 1.000000e+00 : f32
    %432 = vector.broadcast %cst_129 : f32 to vector<8x128xf32>
    %433 = arith.addf %432, %431 : vector<8x128xf32>
    %434 = arith.divf %432, %433 : vector<8x128xf32>
    %435 = arith.mulf %426, %377 : vector<8x128xf32>
    %436 = arith.mulf %420, %428 : vector<8x128xf32>
    %437 = arith.addf %435, %436 : vector<8x128xf32>
    %438 = math.tanh %437 : vector<8x128xf32>
    %439 = arith.mulf %434, %438 : vector<8x128xf32>
    %440 = arith.truncf %439 : vector<8x128xf32> to vector<8x128xbf16>
    %c56_130 = arith.constant 56 : index
    %c0_131 = arith.constant 0 : index
    %441 = vector.load %arg13[%c56_130, %c0_131] : memref<64x512xf32, #tpu.memory_space<vmem>>, vector<8x512xf32>
    %c0_132 = arith.constant 0 : index
    %c0_133 = arith.constant 0 : index
    %442 = vector.load %arg14[%c0_132, %c0_133] : memref<64x512xf32, #tpu.memory_space<vmem>>, vector<8x512xf32>
    %c0_134 = arith.constant 0 : index
    %c0_135 = arith.constant 0 : index
    %443 = vector.load %arg7[%c0_134, %c0_135] : memref<128x512xbf16, #tpu.memory_space<vmem>>, vector<128x512xbf16>
    %cst_136 = arith.constant dense<0.000000e+00> : vector<8x512xf32>
    %444 = tpu.matmul %411, %443, %cst_136 {dimension_numbers = #tpu.dot_dimension_numbers<[1], [0], [0], [1], [0, 0, 1, 1], [], []>} : vector<8x128xbf16>, vector<128x512xbf16>, vector<8x512xf32> -> vector<8x512xf32>
    %445 = arith.addf %441, %444 : vector<8x512xf32>
    %446 = vector.extract_strided_slice %445 {offsets = [0, 0], sizes = [8, 128], strides = [1, 1]} : vector<8x512xf32> to vector<8x128xf32>
    %447 = arith.negf %446 : vector<8x128xf32>
    %448 = math.exp %447 : vector<8x128xf32>
    %cst_137 = arith.constant 1.000000e+00 : f32
    %449 = vector.broadcast %cst_137 : f32 to vector<8x128xf32>
    %450 = arith.addf %449, %448 : vector<8x128xf32>
    %451 = arith.divf %449, %450 : vector<8x128xf32>
    %452 = vector.extract_strided_slice %445 {offsets = [0, 128], sizes = [8, 128], strides = [1, 1]} : vector<8x512xf32> to vector<8x128xf32>
    %453 = arith.negf %452 : vector<8x128xf32>
    %454 = math.exp %453 : vector<8x128xf32>
    %cst_138 = arith.constant 1.000000e+00 : f32
    %455 = vector.broadcast %cst_138 : f32 to vector<8x128xf32>
    %456 = arith.addf %455, %454 : vector<8x128xf32>
    %457 = arith.divf %455, %456 : vector<8x128xf32>
    %458 = vector.extract_strided_slice %445 {offsets = [0, 256], sizes = [8, 128], strides = [1, 1]} : vector<8x512xf32> to vector<8x128xf32>
    %459 = math.tanh %458 : vector<8x128xf32>
    %460 = vector.extract_strided_slice %445 {offsets = [0, 384], sizes = [8, 128], strides = [1, 1]} : vector<8x512xf32> to vector<8x128xf32>
    %461 = arith.negf %460 : vector<8x128xf32>
    %462 = math.exp %461 : vector<8x128xf32>
    %cst_139 = arith.constant 1.000000e+00 : f32
    %463 = vector.broadcast %cst_139 : f32 to vector<8x128xf32>
    %464 = arith.addf %463, %462 : vector<8x128xf32>
    %465 = arith.divf %463, %464 : vector<8x128xf32>
    %466 = arith.mulf %457, %408 : vector<8x128xf32>
    %467 = arith.mulf %451, %459 : vector<8x128xf32>
    %468 = arith.addf %466, %467 : vector<8x128xf32>
    %469 = math.tanh %468 : vector<8x128xf32>
    %470 = arith.mulf %465, %469 : vector<8x128xf32>
    %471 = arith.truncf %470 : vector<8x128xf32> to vector<8x128xbf16>
    %c0_140 = arith.constant 0 : index
    %c0_141 = arith.constant 0 : index
    %472 = vector.load %arg8[%c0_140, %c0_141] : memref<128x512xbf16, #tpu.memory_space<vmem>>, vector<128x512xbf16>
    %cst_142 = arith.constant dense<0.000000e+00> : vector<8x512xf32>
    %473 = tpu.matmul %440, %472, %cst_142 {dimension_numbers = #tpu.dot_dimension_numbers<[1], [0], [0], [1], [0, 0, 1, 1], [], []>} : vector<8x128xbf16>, vector<128x512xbf16>, vector<8x512xf32> -> vector<8x512xf32>
    %474 = arith.addf %442, %473 : vector<8x512xf32>
    %475 = vector.extract_strided_slice %474 {offsets = [0, 0], sizes = [8, 128], strides = [1, 1]} : vector<8x512xf32> to vector<8x128xf32>
    %476 = arith.negf %475 : vector<8x128xf32>
    %477 = math.exp %476 : vector<8x128xf32>
    %cst_143 = arith.constant 1.000000e+00 : f32
    %478 = vector.broadcast %cst_143 : f32 to vector<8x128xf32>
    %479 = arith.addf %478, %477 : vector<8x128xf32>
    %480 = arith.divf %478, %479 : vector<8x128xf32>
    %481 = vector.extract_strided_slice %474 {offsets = [0, 128], sizes = [8, 128], strides = [1, 1]} : vector<8x512xf32> to vector<8x128xf32>
    %482 = arith.negf %481 : vector<8x128xf32>
    %483 = math.exp %482 : vector<8x128xf32>
    %cst_144 = arith.constant 1.000000e+00 : f32
    %484 = vector.broadcast %cst_144 : f32 to vector<8x128xf32>
    %485 = arith.addf %484, %483 : vector<8x128xf32>
    %486 = arith.divf %484, %485 : vector<8x128xf32>
    %487 = vector.extract_strided_slice %474 {offsets = [0, 256], sizes = [8, 128], strides = [1, 1]} : vector<8x512xf32> to vector<8x128xf32>
    %488 = math.tanh %487 : vector<8x128xf32>
    %489 = vector.extract_strided_slice %474 {offsets = [0, 384], sizes = [8, 128], strides = [1, 1]} : vector<8x512xf32> to vector<8x128xf32>
    %490 = arith.negf %489 : vector<8x128xf32>
    %491 = math.exp %490 : vector<8x128xf32>
    %cst_145 = arith.constant 1.000000e+00 : f32
    %492 = vector.broadcast %cst_145 : f32 to vector<8x128xf32>
    %493 = arith.addf %492, %491 : vector<8x128xf32>
    %494 = arith.divf %492, %493 : vector<8x128xf32>
    %495 = arith.mulf %486, %437 : vector<8x128xf32>
    %496 = arith.mulf %480, %488 : vector<8x128xf32>
    %497 = arith.addf %495, %496 : vector<8x128xf32>
    %498 = math.tanh %497 : vector<8x128xf32>
    %499 = arith.mulf %494, %498 : vector<8x128xf32>
    %500 = arith.truncf %499 : vector<8x128xf32> to vector<8x128xbf16>
    %c0_146 = arith.constant 0 : index
    %c0_147 = arith.constant 0 : index
    %501 = vector.load %arg15[%c0_146, %c0_147] : memref<8x128xbf16, #tpu.memory_space<vmem>>, vector<8x128xbf16>
    tpu.vector_store %arg15[%c0_146, %c0_147], %471 {strides = array<i32>} : memref<8x128xbf16, #tpu.memory_space<vmem>>, vector<8x128xbf16>,
    %c0_148 = arith.constant 0 : index
    %c0_149 = arith.constant 0 : index
    %502 = vector.load %arg16[%c0_148, %c0_149] : memref<8x128xf32, #tpu.memory_space<vmem>>, vector<8x128xf32>
    tpu.vector_store %arg16[%c0_148, %c0_149], %468 {strides = array<i32>} : memref<8x128xf32, #tpu.memory_space<vmem>>, vector<8x128xf32>,
    %c0_150 = arith.constant 0 : index
    %c0_151 = arith.constant 0 : index
    %503 = vector.load %arg17[%c0_150, %c0_151] : memref<8x128xbf16, #tpu.memory_space<vmem>>, vector<8x128xbf16>
    tpu.vector_store %arg17[%c0_150, %c0_151], %500 {strides = array<i32>} : memref<8x128xbf16, #tpu.memory_space<vmem>>, vector<8x128xbf16>,
    %c0_152 = arith.constant 0 : index
    %c0_153 = arith.constant 0 : index
    %504 = vector.load %arg18[%c0_152, %c0_153] : memref<8x128xf32, #tpu.memory_space<vmem>>, vector<8x128xf32>
    tpu.vector_store %arg18[%c0_152, %c0_153], %497 {strides = array<i32>} : memref<8x128xf32, #tpu.memory_space<vmem>>, vector<8x128xf32>,
    %c0_i32_154 = arith.constant 0 : i32
    %505 = arith.cmpi eq, %arg0, %c0_i32_154 : i32
    %506 = arith.extui %505 : i1 to i32
    %c0_i32_155 = arith.constant 0 : i32
    %507 = arith.cmpi ne, %506, %c0_i32_155 : i32
    scf.if %507 {
      %c0_156 = arith.constant 0 : index
      %c0_157 = arith.constant 0 : index
      %508 = vector.load %arg9[%c0_156, %c0_157] : memref<128x128xbf16, #tpu.memory_space<vmem>>, vector<128x128xbf16>
      %cst_158 = arith.constant dense<0.000000e+00> : vector<8x128xf32>
      %509 = tpu.matmul %471, %508, %cst_158 {dimension_numbers = #tpu.dot_dimension_numbers<[1], [0], [0], [1], [0, 0, 1, 1], [], []>} : vector<8x128xbf16>, vector<128x128xbf16>, vector<8x128xf32> -> vector<8x128xf32>
      %c0_159 = arith.constant 0 : index
      %c0_160 = arith.constant 0 : index
      %510 = vector.load %arg10[%c0_159, %c0_160] : memref<128x128xbf16, #tpu.memory_space<vmem>>, vector<128x128xbf16>
      %cst_161 = arith.constant dense<0.000000e+00> : vector<8x128xf32>
      %511 = tpu.matmul %500, %510, %cst_161 {dimension_numbers = #tpu.dot_dimension_numbers<[1], [0], [0], [1], [0, 0, 1, 1], [], []>} : vector<8x128xbf16>, vector<128x128xbf16>, vector<8x128xf32> -> vector<8x128xf32>
      %512 = arith.addf %509, %511 : vector<8x128xf32>
      %c0_162 = arith.constant 0 : index
      %c0_163 = arith.constant 0 : index
      %513 = vector.load %arg11[%c0_162, %c0_163] : memref<1x128xf32, #tpu.memory_space<vmem>>, vector<1x128xf32>
      %514 = vector.broadcast %513 : vector<1x128xf32> to vector<8x128xf32>
      %515 = arith.addf %512, %514 : vector<8x128xf32>
      %c0_164 = arith.constant 0 : index
      %c0_165 = arith.constant 0 : index
      %516 = vector.load %arg12[%c0_164, %c0_165] : memref<8x128xf32, #tpu.memory_space<vmem>>, vector<8x128xf32>
      tpu.vector_store %arg12[%c0_164, %c0_165], %515 {strides = array<i32>} : memref<8x128xf32, #tpu.memory_space<vmem>>, vector<8x128xf32>,
    } else {
    }
    return
  }
  func.func @transform_0(%arg0: i32) -> (i32, i32) {
    %c0_i32 = arith.constant 0 : i32
    %c0_i32_0 = arith.constant 0 : i32
    return %arg0, %c0_i32 : i32, i32
  }
  func.func @transform_1(%arg0: i32) -> (i32, i32) {
    %c0_i32 = arith.constant 0 : i32
    %0 = arith.subi %c0_i32, %arg0 : i32
    %c0_i32_0 = arith.constant 0 : i32
    %c0_i32_1 = arith.constant 0 : i32
    return %0, %c0_i32_0 : i32, i32
  }
  func.func @transform_2(%arg0: i32) -> (i32, i32) {
    %c0_i32 = arith.constant 0 : i32
    %c0_i32_0 = arith.constant 0 : i32
    %c0_i32_1 = arith.constant 0 : i32
    return %c0_i32, %c0_i32_0 : i32, i32
  }
  func.func @transform_3(%arg0: i32) -> (i32, i32) {
    %c0_i32 = arith.constant 0 : i32
    %c0_i32_0 = arith.constant 0 : i32
    %c0_i32_1 = arith.constant 0 : i32
    return %c0_i32, %c0_i32_0 : i32, i32
  }
  func.func @transform_4(%arg0: i32) -> (i32, i32) {
    %c0_i32 = arith.constant 0 : i32
    %c0_i32_0 = arith.constant 0 : i32
    %c0_i32_1 = arith.constant 0 : i32
    return %c0_i32, %c0_i32_0 : i32, i32
  }
  func.func @transform_5(%arg0: i32) -> (i32, i32) {
    %c0_i32 = arith.constant 0 : i32
    %c0_i32_0 = arith.constant 0 : i32
    %c0_i32_1 = arith.constant 0 : i32
    return %c0_i32, %c0_i32_0 : i32, i32
  }
  func.func @transform_6(%arg0: i32) -> (i32, i32) {
    %c0_i32 = arith.constant 0 : i32
    %c0_i32_0 = arith.constant 0 : i32
    %c0_i32_1 = arith.constant 0 : i32
    return %c0_i32, %c0_i32_0 : i32, i32
  }
  func.func @transform_7(%arg0: i32) -> (i32, i32) {
    %c0_i32 = arith.constant 0 : i32
    %c0_i32_0 = arith.constant 0 : i32
    %c0_i32_1 = arith.constant 0 : i32
    return %c0_i32, %c0_i32_0 : i32, i32
  }
  func.func @transform_8(%arg0: i32) -> (i32, i32) {
    %c0_i32 = arith.constant 0 : i32
    %c0_i32_0 = arith.constant 0 : i32
    %c0_i32_1 = arith.constant 0 : i32
    return %c0_i32, %c0_i32_0 : i32, i32
  }
  func.func @transform_9(%arg0: i32) -> (i32, i32) {
    %c0_i32 = arith.constant 0 : i32
    %c0_i32_0 = arith.constant 0 : i32
    %c0_i32_1 = arith.constant 0 : i32
    return %c0_i32, %c0_i32_0 : i32, i32
  }
  func.func @transform_10(%arg0: i32) -> (i32, i32) {
    %c0_i32 = arith.constant 0 : i32
    %c0_i32_0 = arith.constant 0 : i32
    %c0_i32_1 = arith.constant 0 : i32
    return %c0_i32, %c0_i32_0 : i32, i32
  }
  func.func @transform_11(%arg0: i32) -> (i32, i32) {
    %c0_i32 = arith.constant 0 : i32
    %c0_i32_0 = arith.constant 0 : i32
    %c0_i32_1 = arith.constant 0 : i32
    return %c0_i32, %c0_i32_0 : i32, i32
  }
}

</mosaic_0001>

<llo_original>
// kernel: tpu_custom_call.1
$region0: #{tpu_custom_call.1}
  #allocation0 [shape = 'u32[]', space=smem, size = 0x4, offset = 0x4, fixed_abs, tag = 'smem constant byte address 0x4 - core index']
  #allocation1 [shape = 'u32[144,128]{1,0:T(1,128)}', space=vmem, size = 0x12000, scoped, tag = 'internal scratch']
  #allocation2 [shape = 'f32[64,512]{1,0:T(8,128)}', space=vmem, size = 0x20000, scoped, tag = 'scratch operand']
  #allocation3 [shape = 'f32[64,512]{1,0:T(8,128)}', space=vmem, size = 0x20000, scoped, tag = 'scratch operand']
  #allocation4 [shape = 'bf16[8,128]{1,0:T(8,128)(2,1)}', space=vmem, size = 0x800, scoped, tag = 'scratch operand']
  #allocation5 [shape = 'f32[8,128]{1,0:T(8,128)}', space=vmem, size = 0x1000, scoped, tag = 'scratch operand']
  #allocation6 [shape = 'bf16[8,128]{1,0:T(8,128)(2,1)}', space=vmem, size = 0x800, scoped, tag = 'scratch operand']
  #allocation7 [shape = 'f32[8,128]{1,0:T(8,128)}', space=vmem, size = 0x1000, scoped, tag = 'scratch operand']
  %s0 = inlined_call_operand.vmem [shape: bf16[64,32], index: 0, kind: input, shape index: {}]
  %s1 = inlined_call_operand.vmem [shape: bf16[64,32], index: 1, kind: input, shape index: {}]
  %s2 = inlined_call_operand.vmem [shape: bf16[32,512], index: 2, kind: input, shape index: {}]
  %s3 = inlined_call_operand.hbm [shape: bf16[32,512], index: 3, kind: input, shape index: {}]
  %s4 = inlined_call_operand.hbm [shape: f32[1,512], index: 4, kind: input, shape index: {}]
  %s5 = inlined_call_operand.hbm [shape: f32[1,512], index: 5, kind: input, shape index: {}]
  %s6 = inlined_call_operand.hbm [shape: bf16[128,512], index: 6, kind: input, shape index: {}]
  %s7 = inlined_call_operand.hbm [shape: bf16[128,512], index: 7, kind: input, shape index: {}]
  %s8 = inlined_call_operand.hbm [shape: bf16[128,128], index: 8, kind: input, shape index: {}]
  %s9 = inlined_call_operand.vmem [shape: bf16[128,128], index: 9, kind: input, shape index: {}]
  %s10 = inlined_call_operand.vmem [shape: f32[1,128], index: 10, kind: input, shape index: {}]
  %s11 = inlined_call_operand.hbm [shape: f32[8,128], index: 11, kind: output, shape index: {}]
  %s12 = sld [smem:[#allocation0]]
  $region86: #{tpu_custom_call.1} parent=0
    _
  %s14 = ssub.s32 1, %s12
  %s15 = scalar_select 0, %s14, %s12
  $region1: #{tpu_custom_call.1} parent=0
    #allocation8 [shape = 'u8[32768]{0}', space=vmem, size = 0x8000, scoped, tag = 'input window, operand 3, single buffered']
    #allocation9 [shape = 's32[1]{0}', space=sflag, size = 0x4, scoped, tag = 'scoped memory for tpu_custom_call.1']
    #allocation10 [shape = 's32[1]{0}', space=sflag, size = 0x4, scoped, tag = 'scoped memory for tpu_custom_call.1']
    #allocation11 [shape = 'u8[2048]{0}', space=vmem, size = 0x800, scoped, tag = 'input window, operand 4, single buffered']
    #allocation12 [shape = 's32[1]{0}', space=sflag, size = 0x4, scoped, tag = 'scoped memory for tpu_custom_call.1']
    #allocation13 [shape = 'u8[2048]{0}', space=vmem, size = 0x800, scoped, tag = 'input window, operand 5, single buffered']
    #allocation14 [shape = 'u8[131072]{0}', space=vmem, size = 0x20000, scoped, tag = 'input window, operand 6, single buffered']
    #allocation15 [shape = 's32[1]{0}', space=sflag, size = 0x4, scoped, tag = 'scoped memory for tpu_custom_call.1']
    #allocation16 [shape = 'u8[131072]{0}', space=vmem, size = 0x20000, scoped, tag = 'input window, operand 7, single buffered']
    #allocation17 [shape = 'u8[32768]{0}', space=vmem, size = 0x8000, scoped, tag = 'input window, operand 8, single buffered']
    #allocation18 [shape = 's32[1]{0}', space=sflag, size = 0x4, scoped, tag = 'scoped memory for tpu_custom_call.1']
    #allocation19 [shape = 'u8[4096]{0}', space=vmem, size = 0x1000, scoped, tag = 'output window, operand 0, single buffered']
    %16 = vsyncpa [#allocation9], 0
    %17 = vsyncpa [#allocation12], 0
    %18 = vsyncpa [#allocation15], 0
    %19 = vsyncpa [#allocation18], 0
    %20 = vsyncpa [#allocation10], 0
    // Predicated region
    $region2: #{tpu_custom_call.1} parent=1 // pred_check
      _
    $region3: #{tpu_custom_call.1} parent=1 // pred_check_branch
      %22 = sbr.rel (0) target = $region5
    $region4: #{tpu_custom_call.1} parent=1 // pred_region
      _
    $region5: #{tpu_custom_call.1} parent=1 // pred_fallthru
      _
    // Predicated region
    $region6: #{tpu_custom_call.1} parent=1 // pred_check
      _
    $region7: #{tpu_custom_call.1} parent=1 // pred_check_branch
      %24 = sbr.rel (0) target = $region9
    $region8: #{tpu_custom_call.1} parent=1 // pred_region
      %s25 = ssub.s32 0, 0
      %s26 = smul.u32 8, %s25
      %p27 = scmp.lt.s32.totalorder %s26, 7
      %s28 = scalar_select %p27, %s26, 7
      %s29 = smul.addr %s28, 4
      %s30 = scalar_lea.vmem %s1, %s29
      %s31 = ssub.s32 0, 0
      %s32 = smul.u32 8, %s31
    $region9: #{tpu_custom_call.1} parent=1 // pred_fallthru
      _
    // Predicated region
    $region10: #{tpu_custom_call.1} parent=1 // pred_check
      _
    $region11: #{tpu_custom_call.1} parent=1 // pred_check_branch
      %34 = sbr.rel (0) target = $region13
    $region12: #{tpu_custom_call.1} parent=1 // pred_region
      _
    $region13: #{tpu_custom_call.1} parent=1 // pred_fallthru
      _
    // Predicated region
    $region14: #{tpu_custom_call.1} parent=1 // pred_check
      _
    $region15: #{tpu_custom_call.1} parent=1 // pred_check_branch
      %36 = sbr.rel (0) target = $region17
    $region16: #{tpu_custom_call.1} parent=1 // pred_region
      %s38 = ssub.s32 1024, 1024
      %39 = vsyncadd [#allocation9], %s38
      %s40 = sshll.u32 [#allocation8], 4
      %s41 = int_to_ptr.vmem [resolvable:$true] %s40
      %46 = dma.hbm_to_vmem [thread:$0]  %s3, 1024, %s41, [#allocation9], 256, 256, 16
    $region17: #{tpu_custom_call.1} parent=1 // pred_fallthru
      _
    // Predicated region
    $region18: #{tpu_custom_call.1} parent=1 // pred_check
      _
    $region19: #{tpu_custom_call.1} parent=1 // pred_check_branch
      %48 = sbr.rel (0) target = $region21
    $region20: #{tpu_custom_call.1} parent=1 // pred_region
      %s50 = ssub.s32 64, 64
      %51 = vsyncadd [#allocation12], %s50
      %s53 = sshll.u32 [#allocation11], 4
      %s54 = int_to_ptr.vmem [resolvable:$true] %s53
      %56 = dma.hbm_to_vmem [thread:$0]  %s4, 64, %s54, [#allocation12]
    $region21: #{tpu_custom_call.1} parent=1 // pred_fallthru
      _
    // Predicated region
    $region22: #{tpu_custom_call.1} parent=1 // pred_check
      _
    $region23: #{tpu_custom_call.1} parent=1 // pred_check_branch
      %58 = sbr.rel (0) target = $region25
    $region24: #{tpu_custom_call.1} parent=1 // pred_region
      %s60 = ssub.s32 64, 64
      %61 = vsyncadd [#allocation12], %s60
      %s63 = sshll.u32 [#allocation13], 4
      %s64 = int_to_ptr.vmem [resolvable:$true] %s63
      %66 = dma.hbm_to_vmem [thread:$0]  %s5, 64, %s64, [#allocation12]
    $region25: #{tpu_custom_call.1} parent=1 // pred_fallthru
      _
    // Predicated region
    $region26: #{tpu_custom_call.1} parent=1 // pred_check
      _
    $region27: #{tpu_custom_call.1} parent=1 // pred_check_branch
      %68 = sbr.rel (0) target = $region29
    $region28: #{tpu_custom_call.1} parent=1 // pred_region
      %s70 = ssub.s32 4096, 4096
      %71 = vsyncadd [#allocation15], %s70
      %s72 = sshll.u32 [#allocation14], 4
      %s73 = int_to_ptr.vmem [resolvable:$true] %s72
      %78 = dma.hbm_to_vmem [thread:$0]  %s6, 4096, %s73, [#allocation15], 256, 256, 16
    $region29: #{tpu_custom_call.1} parent=1 // pred_fallthru
      _
    // Predicated region
    $region30: #{tpu_custom_call.1} parent=1 // pred_check
      _
    $region31: #{tpu_custom_call.1} parent=1 // pred_check_branch
      %80 = sbr.rel (0) target = $region33
    $region32: #{tpu_custom_call.1} parent=1 // pred_region
      %s82 = ssub.s32 4096, 4096
      %83 = vsyncadd [#allocation15], %s82
      %s84 = sshll.u32 [#allocation16], 4
      %s85 = int_to_ptr.vmem [resolvable:$true] %s84
      %90 = dma.hbm_to_vmem [thread:$0]  %s7, 4096, %s85, [#allocation15], 256, 256, 16
    $region33: #{tpu_custom_call.1} parent=1 // pred_fallthru
      _
    // Predicated region
    $region34: #{tpu_custom_call.1} parent=1 // pred_check
      _
    $region35: #{tpu_custom_call.1} parent=1 // pred_check_branch
      %92 = sbr.rel (0) target = $region37
    $region36: #{tpu_custom_call.1} parent=1 // pred_region
      %s94 = ssub.s32 1024, 1024
      %95 = vsyncadd [#allocation18], %s94
      %s96 = sshll.u32 [#allocation17], 4
      %s97 = int_to_ptr.vmem [resolvable:$true] %s96
      %102 = dma.hbm_to_vmem [thread:$0]  %s8, 1024, %s97, [#allocation18], 64, 64, 4
    $region37: #{tpu_custom_call.1} parent=1 // pred_fallthru
      _
    // Predicated region
    $region38: #{tpu_custom_call.1} parent=1 // pred_check
      _
    $region39: #{tpu_custom_call.1} parent=1 // pred_check_branch
      %104 = sbr.rel (0) target = $region41
    $region40: #{tpu_custom_call.1} parent=1 // pred_region
      _
    $region41: #{tpu_custom_call.1} parent=1 // pred_fallthru
      _
    // Predicated region
    $region42: #{tpu_custom_call.1} parent=1 // pred_check
      _
    $region43: #{tpu_custom_call.1} parent=1 // pred_check_branch
      %106 = sbr.rel (0) target = $region45
    $region44: #{tpu_custom_call.1} parent=1 // pred_region
      _
    $region45: #{tpu_custom_call.1} parent=1 // pred_fallthru
      _
    // Predicated region
    $region46: #{tpu_custom_call.1} parent=1 // pred_check
      _
    $region47: #{tpu_custom_call.1} parent=1 // pred_check_branch
      %108 = sbr.rel (0) target = $region49
    $region48: #{tpu_custom_call.1} parent=1 // pred_region
      %109 = dma.done [#allocation9], 1024
    $region49: #{tpu_custom_call.1} parent=1 // pred_fallthru
      _
    // Predicated region
    $region50: #{tpu_custom_call.1} parent=1 // pred_check
      _
    $region51: #{tpu_custom_call.1} parent=1 // pred_check_branch
      %111 = sbr.rel (0) target = $region53
    $region52: #{tpu_custom_call.1} parent=1 // pred_region
      %112 = dma.done [#allocation12], 64
    $region53: #{tpu_custom_call.1} parent=1 // pred_fallthru
      _
    // Predicated region
    $region54: #{tpu_custom_call.1} parent=1 // pred_check
      _
    $region55: #{tpu_custom_call.1} parent=1 // pred_check_branch
      %114 = sbr.rel (0) target = $region57
    $region56: #{tpu_custom_call.1} parent=1 // pred_region
      %115 = dma.done [#allocation12], 64
    $region57: #{tpu_custom_call.1} parent=1 // pred_fallthru
      _
    // Predicated region
    $region58: #{tpu_custom_call.1} parent=1 // pred_check
      _
    $region59: #{tpu_custom_call.1} parent=1 // pred_check_branch
      %117 = sbr.rel (0) target = $region61
    $region60: #{tpu_custom_call.1} parent=1 // pred_region
      %118 = dma.done [#allocation15], 4096
    $region61: #{tpu_custom_call.1} parent=1 // pred_fallthru
      _
    // Predicated region
    $region62: #{tpu_custom_call.1} parent=1 // pred_check
      _
    $region63: #{tpu_custom_call.1} parent=1 // pred_check_branch
      %120 = sbr.rel (0) target = $region65
    $region64: #{tpu_custom_call.1} parent=1 // pred_region
      %121 = dma.done [#allocation15], 4096
    $region65: #{tpu_custom_call.1} parent=1 // pred_fallthru
      _
    // Predicated region
    $region66: #{tpu_custom_call.1} parent=1 // pred_check
      _
    $region67: #{tpu_custom_call.1} parent=1 // pred_check_branch
      %123 = sbr.rel (0) target = $region69
    $region68: #{tpu_custom_call.1} parent=1 // pred_region
      %124 = dma.done [#allocation18], 1024
    $region69: #{tpu_custom_call.1} parent=1 // pred_fallthru
      _
    %s125 = ssub.s32 0, 0
    %s126 = smul.u32 8, %s125
    %p127 = scmp.lt.s32.totalorder %s126, 7
    %s128 = scalar_select %p127, %s126, 7
    %s129 = smul.addr %s128, 4
    %s130 = scalar_lea.vmem %s1, %s129
    %s131 = ssub.s32 0, 0
    %s132 = smul.u32 8, %s131
    %p133 = scmp.lt.s32.totalorder %s132, 7
    %s134 = scalar_select %p133, %s132, 7
    %s135 = smul.addr %s134, 4
    %s136 = scalar_lea.vmem %s1, %s135
    %s137 = ssub.s32 0, 0
    %s138 = smul.u32 8, %s137
    %p140 = scmp.eq.s32.totalorder 0, 0
    // Predicated region
    $region70: #{tpu_custom_call.1} parent=1 // pred_check
      %p141 = pneg %p140
    $region71: #{tpu_custom_call.1} parent=1 // pred_check_branch
      %143 = sbr.rel (%p141) target = $region73
    $region72: #{tpu_custom_call.1} parent=1 // pred_region
      %144 = vst [vmem:[#allocation4] sm:$0xf] 0
      %145 = vst [vmem:[#allocation5] sm:$0xff] 0.0
      %146 = vst [vmem:[#allocation6] sm:$0xf] 0
      %147 = vst [vmem:[#allocation7] sm:$0xff] 0.0
    $region73: #{tpu_custom_call.1} parent=1 // pred_fallthru
      _
    %v148 = vld [vmem:[%s0] sm:$0xf]
    %v149 = vld [vmem:[%s0 + $0x4] sm:$0xf]
    %v150 = vld [vmem:[%s0 + $0x8] sm:$0xf]
    %v151 = vld [vmem:[%s0 + $0xc] sm:$0xf]
    %v152 = vld [vmem:[%s0 + $0x10] sm:$0xf]
    %v153 = vld [vmem:[%s0 + $0x14] sm:$0xf]
    %v154 = vld [vmem:[%s0 + $0x18] sm:$0xf]
    %v155 = vld [vmem:[%s0 + $0x1c] sm:$0xf]
    %v156 = vld [vmem:[%s2] sm:$0xff]
    %v157 = vld [vmem:[%s2 + $0x8] sm:$0xff]
    %v158 = vld [vmem:[%s2 + $0x10] sm:$0xff]
    %v159 = vld [vmem:[%s2 + $0x18] sm:$0xff]
    %v160 = vld [vmem:[%s2 + $0x20] sm:$0xff]
    %v161 = vld [vmem:[%s2 + $0x28] sm:$0xff]
    %v162 = vld [vmem:[%s2 + $0x30] sm:$0xff]
    %v163 = vld [vmem:[%s2 + $0x38] sm:$0xff]
    %v164 = vld [vmem:[#allocation11] sm:$0xf]
    %v166 = vlaneseq
    %v167 = vshrl.u32 %v166, 7
    %v168 = vsub.s32 0, %v167
    %v169 = vrot.slane %v164, %v168
    %v170 = vlaneseq
    %v171 = vshrl.u32 %v170, 7
    %v172 = vsub.s32 1, %v171
    %v173 = vrot.slane %v164, %v172
    %v174 = vlaneseq
    %v175 = vshrl.u32 %v174, 7
    %v176 = vsub.s32 2, %v175
    %v177 = vrot.slane %v164, %v176
    %v178 = vlaneseq
    %v179 = vshrl.u32 %v178, 7
    %v180 = vsub.s32 3, %v179
    %v181 = vrot.slane %v164, %v180
    %v194 = vunpack.c.l.b16 %v148
    %v195 = vunpack.c.l.b16 %v149
    %v196 = vunpack.c.l.b16 %v150
    %v197 = vunpack.c.l.b16 %v151
    %v198 = vunpack.c.l.b16 %v152
    %v199 = vunpack.c.l.b16 %v153
    %v200 = vunpack.c.l.b16 %v154
    %v201 = vunpack.c.l.b16 %v155
    %v202 = vpack.c.b16 %v195, %v194
    %v203 = vpack.c.b16 %v197, %v196
    %v204 = vpack.c.b16 %v199, %v198
    %v205 = vpack.c.b16 %v201, %v200
    %v214 = vunpack.c.l.b16 %v156
    %v215 = vunpack.c.h.b16 %v156
    %v216 = vunpack.c.l.b16 %v157
    %v217 = vunpack.c.h.b16 %v157
    %v218 = vunpack.c.l.b16 %v158
    %v219 = vunpack.c.h.b16 %v158
    %v220 = vunpack.c.l.b16 %v159
    %v221 = vunpack.c.h.b16 %v159
    %v222 = vunpack.c.l.b16 %v160
    %v223 = vunpack.c.h.b16 %v160
    %v224 = vunpack.c.l.b16 %v161
    %v225 = vunpack.c.h.b16 %v161
    %v226 = vunpack.c.l.b16 %v162
    %v227 = vunpack.c.h.b16 %v162
    %v228 = vunpack.c.l.b16 %v163
    %v229 = vunpack.c.h.b16 %v163
    %v230 = vpack.c.b16 %v218, %v214
    %v231 = vpack.c.b16 %v219, %v215
    %v232 = vpack.c.b16 %v220, %v216
    %v233 = vpack.c.b16 %v221, %v217
    %v234 = vpack.c.b16 %v226, %v222
    %v235 = vpack.c.b16 %v227, %v223
    %v236 = vpack.c.b16 %v228, %v224
    %v237 = vpack.c.b16 %v229, %v225
    %vm246 = vcmask 261120
    %v248 = vsel %vm246, %v202, 0
    %v251 = vsel %vm246, %v203, 0
    %v254 = vsel %vm246, %v204, 0
    %v257 = vsel %vm246, %v205, 0
    %259 = vmatprep.subr.bf16.mxu0 %v231
    %260 = vmatpush1.bf16.msra.mxu0 %v230
    %261 = vmatprep.subr.bf16.mxu0 %v235
    %262 = vmatpush1.bf16.msra.mxu0 %v234
    %263 = vmatprep.subr.bf16.mxu0 0
    %264 = vmatpush1.bf16.msra.mxu0 0
    %265 = vmatprep.subr.bf16.mxu0 0
    %266 = vmatpush1.bf16.msra.mxu0 0
    %267 = vmatprep.subr.bf16.mxu0 0
    %268 = vmatpush1.bf16.msra.mxu0 0
    %269 = vmatprep.subr.bf16.mxu0 0
    %270 = vmatpush1.bf16.msra.mxu0 0
    %271 = vmatprep.subr.bf16.mxu0 0
    %272 = vmatpush1.bf16.msra.mxu0 0
    %273 = vmatprep.subr.bf16.mxu0 0
    %274 = vmatpush1.bf16.msra.mxu0 0
    %275 = vmatprep.subr.bf16.mxu0 0
    %276 = vmatpush1.bf16.msra.mxu0 0
    %277 = vmatprep.subr.bf16.mxu0 0
    %278 = vmatpush1.bf16.msra.mxu0 0
    %279 = vmatprep.subr.bf16.mxu0 0
    %280 = vmatpush1.bf16.msra.mxu0 0
    %281 = vmatprep.subr.bf16.mxu0 0
    %282 = vmatpush1.bf16.msra.mxu0 0
    %283 = vmatprep.subr.bf16.mxu0 0
    %284 = vmatpush1.bf16.msra.mxu0 0
    %285 = vmatprep.subr.bf16.mxu0 0
    %286 = vmatpush1.bf16.msra.mxu0 0
    %287 = vmatprep.subr.bf16.mxu0 0
    %288 = vmatpush1.bf16.msra.mxu0 0
    %289 = vmatprep.subr.bf16.mxu0 0
    %290 = vmatpush1.bf16.msra.mxu0 0
    %291 = vmatprep.mubr.bf16.mxu0 0
    %292 = vmatmul.mubr.bf16.gmra.mrb[0].mxu0 %v248
    %v293 = vpop.f32.mrb[0].mxu0
    %v294 = vadd.f32 %v169, %v293
    %v295 = vpop.f32.mrb[0].mxu0
    %v296 = vadd.f32 %v173, %v295
    %v297 = vpop.f32.mrb[0].mxu0
    %v298 = vadd.f32 %v169, %v297
    %v299 = vpop.f32.mrb[0].mxu0
    %v300 = vadd.f32 %v173, %v299
    %301 = vmatprep.mubr.bf16.mxu0 0
    %302 = vmatmul.mubr.bf16.gmra.mrb[0].mxu0 %v251
    %v303 = vpop.f32.mrb[0].mxu0
    %v304 = vadd.f32 %v169, %v303
    %v305 = vpop.f32.mrb[0].mxu0
    %v306 = vadd.f32 %v173, %v305
    %v307 = vpop.f32.mrb[0].mxu0
    %v308 = vadd.f32 %v169, %v307
    %v309 = vpop.f32.mrb[0].mxu0
    %v310 = vadd.f32 %v173, %v309
    %311 = vmatprep.mubr.bf16.mxu0 0
    %312 = vmatmul.mubr.bf16.gmra.mrb[0].mxu0 %v254
    %v313 = vpop.f32.mrb[0].mxu0
    %v314 = vadd.f32 %v169, %v313
    %v315 = vpop.f32.mrb[0].mxu0
    %v316 = vadd.f32 %v173, %v315
    %v317 = vpop.f32.mrb[0].mxu0
    %v318 = vadd.f32 %v169, %v317
    %v319 = vpop.f32.mrb[0].mxu0
    %v320 = vadd.f32 %v173, %v319
    %321 = vmatprep.mubr.bf16.mxu0 0
    %322 = vmatmul.mubr.bf16.gmra.mrb[0].mxu0 %v257
    %v323 = vpop.f32.mrb[0].mxu0
    %v324 = vadd.f32 %v169, %v323
    %v325 = vpop.f32.mrb[0].mxu0
    %v326 = vadd.f32 %v173, %v325
    %v327 = vpop.f32.mrb[0].mxu0
    %v328 = vadd.f32 %v169, %v327
    %v329 = vpop.f32.mrb[0].mxu0
    %v330 = vadd.f32 %v173, %v329
    %331 = vdwg.mxu0
    %332 = vmatprep.subr.bf16.mxu0 %v233
    %333 = vmatpush1.bf16.msra.mxu0 %v232
    %334 = vmatprep.subr.bf16.mxu0 %v237
    %335 = vmatpush1.bf16.msra.mxu0 %v236
    %336 = vmatprep.subr.bf16.mxu0 0
    %337 = vmatpush1.bf16.msra.mxu0 0
    %338 = vmatprep.subr.bf16.mxu0 0
    %339 = vmatpush1.bf16.msra.mxu0 0
    %340 = vmatprep.subr.bf16.mxu0 0
    %341 = vmatpush1.bf16.msra.mxu0 0
    %342 = vmatprep.subr.bf16.mxu0 0
    %343 = vmatpush1.bf16.msra.mxu0 0
    %344 = vmatprep.subr.bf16.mxu0 0
    %345 = vmatpush1.bf16.msra.mxu0 0
    %346 = vmatprep.subr.bf16.mxu0 0
    %347 = vmatpush1.bf16.msra.mxu0 0
    %348 = vmatprep.subr.bf16.mxu0 0
    %349 = vmatpush1.bf16.msra.mxu0 0
    %350 = vmatprep.subr.bf16.mxu0 0
    %351 = vmatpush1.bf16.msra.mxu0 0
    %352 = vmatprep.subr.bf16.mxu0 0
    %353 = vmatpush1.bf16.msra.mxu0 0
    %354 = vmatprep.subr.bf16.mxu0 0
    %355 = vmatpush1.bf16.msra.mxu0 0
    %356 = vmatprep.subr.bf16.mxu0 0
    %357 = vmatpush1.bf16.msra.mxu0 0
    %358 = vmatprep.subr.bf16.mxu0 0
    %359 = vmatpush1.bf16.msra.mxu0 0
    %360 = vmatprep.subr.bf16.mxu0 0
    %361 = vmatpush1.bf16.msra.mxu0 0
    %362 = vmatprep.subr.bf16.mxu0 0
    %363 = vmatpush1.bf16.msra.mxu0 0
    %364 = vmatprep.mubr.bf16.mxu0 0
    %365 = vmatmul.mubr.bf16.gmra.mrb[0].mxu0 %v248
    %v366 = vpop.f32.mrb[0].mxu0
    %v367 = vadd.f32 %v177, %v366
    %v368 = vpop.f32.mrb[0].mxu0
    %v369 = vadd.f32 %v181, %v368
    %v370 = vpop.f32.mrb[0].mxu0
    %v371 = vadd.f32 %v177, %v370
    %v372 = vpop.f32.mrb[0].mxu0
    %v373 = vadd.f32 %v181, %v372
    %374 = vmatprep.mubr.bf16.mxu0 0
    %375 = vmatmul.mubr.bf16.gmra.mrb[0].mxu0 %v251
    %v376 = vpop.f32.mrb[0].mxu0
    %v377 = vadd.f32 %v177, %v376
    %v378 = vpop.f32.mrb[0].mxu0
    %v379 = vadd.f32 %v181, %v378
    %v380 = vpop.f32.mrb[0].mxu0
    %v381 = vadd.f32 %v177, %v380
    %v382 = vpop.f32.mrb[0].mxu0
    %v383 = vadd.f32 %v181, %v382
    %384 = vmatprep.mubr.bf16.mxu0 0
    %385 = vmatmul.mubr.bf16.gmra.mrb[0].mxu0 %v254
    %v386 = vpop.f32.mrb[0].mxu0
    %v387 = vadd.f32 %v177, %v386
    %v388 = vpop.f32.mrb[0].mxu0
    %v389 = vadd.f32 %v181, %v388
    %v390 = vpop.f32.mrb[0].mxu0
    %v391 = vadd.f32 %v177, %v390
    %v392 = vpop.f32.mrb[0].mxu0
    %v393 = vadd.f32 %v181, %v392
    %394 = vmatprep.mubr.bf16.mxu0 0
    %395 = vmatmul.mubr.bf16.gmra.mrb[0].mxu0 %v257
    %v396 = vpop.f32.mrb[0].mxu0
    %v397 = vadd.f32 %v177, %v396
    %v398 = vpop.f32.mrb[0].mxu0
    %v399 = vadd.f32 %v181, %v398
    %v400 = vpop.f32.mrb[0].mxu0
    %v401 = vadd.f32 %v177, %v400
    %v402 = vpop.f32.mrb[0].mxu0
    %v403 = vadd.f32 %v181, %v402
    %404 = vdwg.mxu0
    %405 = vst [vmem:[#allocation2] sm:$0xff] %v294
    %406 = vst [vmem:[#allocation2 + $0x8] sm:$0xff] %v296
    %407 = vst [vmem:[#allocation2 + $0x10] sm:$0xff] %v367
    %408 = vst [vmem:[#allocation2 + $0x18] sm:$0xff] %v369
    %409 = vst [vmem:[#allocation2 + $0x20] sm:$0xff] %v298
    %410 = vst [vmem:[#allocation2 + $0x28] sm:$0xff] %v300
    %411 = vst [vmem:[#allocation2 + $0x30] sm:$0xff] %v371
    %412 = vst [vmem:[#allocation2 + $0x38] sm:$0xff] %v373
    %413 = vst [vmem:[#allocation2 + $0x40] sm:$0xff] %v304
    %414 = vst [vmem:[#allocation2 + $0x48] sm:$0xff] %v306
    %415 = vst [vmem:[#allocation2 + $0x50] sm:$0xff] %v377
    %416 = vst [vmem:[#allocation2 + $0x58] sm:$0xff] %v379
    %417 = vst [vmem:[#allocation2 + $0x60] sm:$0xff] %v308
    %418 = vst [vmem:[#allocation2 + $0x68] sm:$0xff] %v310
    %419 = vst [vmem:[#allocation2 + $0x70] sm:$0xff] %v381
    %420 = vst [vmem:[#allocation2 + $0x78] sm:$0xff] %v383
    %421 = vst [vmem:[#allocation2 + $0x80] sm:$0xff] %v314
    %422 = vst [vmem:[#allocation2 + $0x88] sm:$0xff] %v316
    %423 = vst [vmem:[#allocation2 + $0x90] sm:$0xff] %v387
    %424 = vst [vmem:[#allocation2 + $0x98] sm:$0xff] %v389
    %425 = vst [vmem:[#allocation2 + $0xa0] sm:$0xff] %v318
    %426 = vst [vmem:[#allocation2 + $0xa8] sm:$0xff] %v320
    %427 = vst [vmem:[#allocation2 + $0xb0] sm:$0xff] %v391
    %428 = vst [vmem:[#allocation2 + $0xb8] sm:$0xff] %v393
    %429 = vst [vmem:[#allocation2 + $0xc0] sm:$0xff] %v324
    %430 = vst [vmem:[#allocation2 + $0xc8] sm:$0xff] %v326
    %431 = vst [vmem:[#allocation2 + $0xd0] sm:$0xff] %v397
    %432 = vst [vmem:[#allocation2 + $0xd8] sm:$0xff] %v399
    %433 = vst [vmem:[#allocation2 + $0xe0] sm:$0xff] %v328
    %434 = vst [vmem:[#allocation2 + $0xe8] sm:$0xff] %v330
    %435 = vst [vmem:[#allocation2 + $0xf0] sm:$0xff] %v401
    %436 = vst [vmem:[#allocation2 + $0xf8] sm:$0xff] %v403
    %v437 = vld [vmem:[%s136] sm:$0xf]
    %v438 = vld [vmem:[%s136 + $0x4] sm:$0xf]
    %v439 = vld [vmem:[%s136 + $0x8] sm:$0xf]
    %v440 = vld [vmem:[%s136 + $0xc] sm:$0xf]
    %v441 = vld [vmem:[%s136 + $0x10] sm:$0xf]
    %v442 = vld [vmem:[%s136 + $0x14] sm:$0xf]
    %v443 = vld [vmem:[%s136 + $0x18] sm:$0xf]
    %v444 = vld [vmem:[%s136 + $0x1c] sm:$0xf]
    %v445 = vld [vmem:[#allocation8] sm:$0xff]
    %v446 = vld [vmem:[#allocation8 + $0x8] sm:$0xff]
    %v447 = vld [vmem:[#allocation8 + $0x10] sm:$0xff]
    %v448 = vld [vmem:[#allocation8 + $0x18] sm:$0xff]
    %v449 = vld [vmem:[#allocation8 + $0x20] sm:$0xff]
    %v450 = vld [vmem:[#allocation8 + $0x28] sm:$0xff]
    %v451 = vld [vmem:[#allocation8 + $0x30] sm:$0xff]
    %v452 = vld [vmem:[#allocation8 + $0x38] sm:$0xff]
    %v453 = vld [vmem:[#allocation13] sm:$0xf]
    %v455 = vlaneseq
    %v456 = vshrl.u32 %v455, 7
    %v457 = vsub.s32 0, %v456
    %v458 = vrot.slane %v453, %v457
    %v459 = vlaneseq
    %v460 = vshrl.u32 %v459, 7
    %v461 = vsub.s32 1, %v460
    %v462 = vrot.slane %v453, %v461
    %v463 = vlaneseq
    %v464 = vshrl.u32 %v463, 7
    %v465 = vsub.s32 2, %v464
    %v466 = vrot.slane %v453, %v465
    %v467 = vlaneseq
    %v468 = vshrl.u32 %v467, 7
    %v469 = vsub.s32 3, %v468
    %v470 = vrot.slane %v453, %v469
    %v483 = vunpack.c.l.b16 %v437
    %v484 = vunpack.c.l.b16 %v438
    %v485 = vunpack.c.l.b16 %v439
    %v486 = vunpack.c.l.b16 %v440
    %v487 = vunpack.c.l.b16 %v441
    %v488 = vunpack.c.l.b16 %v442
    %v489 = vunpack.c.l.b16 %v443
    %v490 = vunpack.c.l.b16 %v444
    %v491 = vpack.c.b16 %v484, %v483
    %v492 = vpack.c.b16 %v486, %v485
    %v493 = vpack.c.b16 %v488, %v487
    %v494 = vpack.c.b16 %v490, %v489
    %v503 = vunpack.c.l.b16 %v445
    %v504 = vunpack.c.h.b16 %v445
    %v505 = vunpack.c.l.b16 %v446
    %v506 = vunpack.c.h.b16 %v446
    %v507 = vunpack.c.l.b16 %v447
    %v508 = vunpack.c.h.b16 %v447
    %v509 = vunpack.c.l.b16 %v448
    %v510 = vunpack.c.h.b16 %v448
    %v511 = vunpack.c.l.b16 %v449
    %v512 = vunpack.c.h.b16 %v449
    %v513 = vunpack.c.l.b16 %v450
    %v514 = vunpack.c.h.b16 %v450
    %v515 = vunpack.c.l.b16 %v451
    %v516 = vunpack.c.h.b16 %v451
    %v517 = vunpack.c.l.b16 %v452
    %v518 = vunpack.c.h.b16 %v452
    %v519 = vpack.c.b16 %v507, %v503
    %v520 = vpack.c.b16 %v508, %v504
    %v521 = vpack.c.b16 %v509, %v505
    %v522 = vpack.c.b16 %v510, %v506
    %v523 = vpack.c.b16 %v515, %v511
    %v524 = vpack.c.b16 %v516, %v512
    %v525 = vpack.c.b16 %v517, %v513
    %v526 = vpack.c.b16 %v518, %v514
    %v536 = vsel %vm246, %v491, 0
    %v539 = vsel %vm246, %v492, 0
    %v542 = vsel %vm246, %v493, 0
    %v545 = vsel %vm246, %v494, 0
    %547 = vmatprep.subr.bf16.mxu0 %v520
    %548 = vmatpush1.bf16.msra.mxu0 %v519
    %549 = vmatprep.subr.bf16.mxu0 %v524
    %550 = vmatpush1.bf16.msra.mxu0 %v523
    %551 = vmatprep.subr.bf16.mxu0 0
    %552 = vmatpush1.bf16.msra.mxu0 0
    %553 = vmatprep.subr.bf16.mxu0 0
    %554 = vmatpush1.bf16.msra.mxu0 0
    %555 = vmatprep.subr.bf16.mxu0 0
    %556 = vmatpush1.bf16.msra.mxu0 0
    %557 = vmatprep.subr.bf16.mxu0 0
    %558 = vmatpush1.bf16.msra.mxu0 0
    %559 = vmatprep.subr.bf16.mxu0 0
    %560 = vmatpush1.bf16.msra.mxu0 0
    %561 = vmatprep.subr.bf16.mxu0 0
    %562 = vmatpush1.bf16.msra.mxu0 0
    %563 = vmatprep.subr.bf16.mxu0 0
    %564 = vmatpush1.bf16.msra.mxu0 0
    %565 = vmatprep.subr.bf16.mxu0 0
    %566 = vmatpush1.bf16.msra.mxu0 0
    %567 = vmatprep.subr.bf16.mxu0 0
    %568 = vmatpush1.bf16.msra.mxu0 0
    %569 = vmatprep.subr.bf16.mxu0 0
    %570 = vmatpush1.bf16.msra.mxu0 0
    %571 = vmatprep.subr.bf16.mxu0 0
    %572 = vmatpush1.bf16.msra.mxu0 0
    %573 = vmatprep.subr.bf16.mxu0 0
    %574 = vmatpush1.bf16.msra.mxu0 0
    %575 = vmatprep.subr.bf16.mxu0 0
    %576 = vmatpush1.bf16.msra.mxu0 0
    %577 = vmatprep.subr.bf16.mxu0 0
    %578 = vmatpush1.bf16.msra.mxu0 0
    %579 = vmatprep.mubr.bf16.mxu0 0
    %580 = vmatmul.mubr.bf16.gmra.mrb[0].mxu0 %v536
    %v581 = vpop.f32.mrb[0].mxu0
    %v582 = vadd.f32 %v458, %v581
    %v583 = vpop.f32.mrb[0].mxu0
    %v584 = vadd.f32 %v462, %v583
    %v585 = vpop.f32.mrb[0].mxu0
    %v586 = vadd.f32 %v458, %v585
    %v587 = vpop.f32.mrb[0].mxu0
    %v588 = vadd.f32 %v462, %v587
    %589 = vmatprep.mubr.bf16.mxu0 0
    %590 = vmatmul.mubr.bf16.gmra.mrb[0].mxu0 %v539
    %v591 = vpop.f32.mrb[0].mxu0
    %v592 = vadd.f32 %v458, %v591
    %v593 = vpop.f32.mrb[0].mxu0
    %v594 = vadd.f32 %v462, %v593
    %v595 = vpop.f32.mrb[0].mxu0
    %v596 = vadd.f32 %v458, %v595
    %v597 = vpop.f32.mrb[0].mxu0
    %v598 = vadd.f32 %v462, %v597
    %599 = vmatprep.mubr.bf16.mxu0 0
    %600 = vmatmul.mubr.bf16.gmra.mrb[0].mxu0 %v542
    %v601 = vpop.f32.mrb[0].mxu0
    %v602 = vadd.f32 %v458, %v601
    %v603 = vpop.f32.mrb[0].mxu0
    %v604 = vadd.f32 %v462, %v603
    %v605 = vpop.f32.mrb[0].mxu0
    %v606 = vadd.f32 %v458, %v605
    %v607 = vpop.f32.mrb[0].mxu0
    %v608 = vadd.f32 %v462, %v607
    %609 = vmatprep.mubr.bf16.mxu0 0
    %610 = vmatmul.mubr.bf16.gmra.mrb[0].mxu0 %v545
    %v611 = vpop.f32.mrb[0].mxu0
    %v612 = vadd.f32 %v458, %v611
    %v613 = vpop.f32.mrb[0].mxu0
    %v614 = vadd.f32 %v462, %v613
    %v615 = vpop.f32.mrb[0].mxu0
    %v616 = vadd.f32 %v458, %v615
    %v617 = vpop.f32.mrb[0].mxu0
    %v618 = vadd.f32 %v462, %v617
    %619 = vdwg.mxu0
    %620 = vmatprep.subr.bf16.mxu0 %v522
    %621 = vmatpush1.bf16.msra.mxu0 %v521
    %622 = vmatprep.subr.bf16.mxu0 %v526
    %623 = vmatpush1.bf16.msra.mxu0 %v525
    %624 = vmatprep.subr.bf16.mxu0 0
    %625 = vmatpush1.bf16.msra.mxu0 0
    %626 = vmatprep.subr.bf16.mxu0 0
    %627 = vmatpush1.bf16.msra.mxu0 0
    %628 = vmatprep.subr.bf16.mxu0 0
    %629 = vmatpush1.bf16.msra.mxu0 0
    %630 = vmatprep.subr.bf16.mxu0 0
    %631 = vmatpush1.bf16.msra.mxu0 0
    %632 = vmatprep.subr.bf16.mxu0 0
    %633 = vmatpush1.bf16.msra.mxu0 0
    %634 = vmatprep.subr.bf16.mxu0 0
    %635 = vmatpush1.bf16.msra.mxu0 0
    %636 = vmatprep.subr.bf16.mxu0 0
    %637 = vmatpush1.bf16.msra.mxu0 0
    %638 = vmatprep.subr.bf16.mxu0 0
    %639 = vmatpush1.bf16.msra.mxu0 0
    %640 = vmatprep.subr.bf16.mxu0 0
    %641 = vmatpush1.bf16.msra.mxu0 0
    %642 = vmatprep.subr.bf16.mxu0 0
    %643 = vmatpush1.bf16.msra.mxu0 0
    %644 = vmatprep.subr.bf16.mxu0 0
    %645 = vmatpush1.bf16.msra.mxu0 0
    %646 = vmatprep.subr.bf16.mxu0 0
    %647 = vmatpush1.bf16.msra.mxu0 0
    %648 = vmatprep.subr.bf16.mxu0 0
    %649 = vmatpush1.bf16.msra.mxu0 0
    %650 = vmatprep.subr.bf16.mxu0 0
    %651 = vmatpush1.bf16.msra.mxu0 0
    %652 = vmatprep.mubr.bf16.mxu0 0
    %653 = vmatmul.mubr.bf16.gmra.mrb[0].mxu0 %v536
    %v654 = vpop.f32.mrb[0].mxu0
    %v655 = vadd.f32 %v466, %v654
    %v656 = vpop.f32.mrb[0].mxu0
    %v657 = vadd.f32 %v470, %v656
    %v658 = vpop.f32.mrb[0].mxu0
    %v659 = vadd.f32 %v466, %v658
    %v660 = vpop.f32.mrb[0].mxu0
    %v661 = vadd.f32 %v470, %v660
    %662 = vmatprep.mubr.bf16.mxu0 0
    %663 = vmatmul.mubr.bf16.gmra.mrb[0].mxu0 %v539
    %v664 = vpop.f32.mrb[0].mxu0
    %v665 = vadd.f32 %v466, %v664
    %v666 = vpop.f32.mrb[0].mxu0
    %v667 = vadd.f32 %v470, %v666
    %v668 = vpop.f32.mrb[0].mxu0
    %v669 = vadd.f32 %v466, %v668
    %v670 = vpop.f32.mrb[0].mxu0
    %v671 = vadd.f32 %v470, %v670
    %672 = vmatprep.mubr.bf16.mxu0 0
    %673 = vmatmul.mubr.bf16.gmra.mrb[0].mxu0 %v542
    %v674 = vpop.f32.mrb[0].mxu0
    %v675 = vadd.f32 %v466, %v674
    %v676 = vpop.f32.mrb[0].mxu0
    %v677 = vadd.f32 %v470, %v676
    %v678 = vpop.f32.mrb[0].mxu0
    %v679 = vadd.f32 %v466, %v678
    %v680 = vpop.f32.mrb[0].mxu0
    %v681 = vadd.f32 %v470, %v680
    %682 = vmatprep.mubr.bf16.mxu0 0
    %683 = vmatmul.mubr.bf16.gmra.mrb[0].mxu0 %v545
    %v684 = vpop.f32.mrb[0].mxu0
    %v685 = vadd.f32 %v466, %v684
    %v686 = vpop.f32.mrb[0].mxu0
    %v687 = vadd.f32 %v470, %v686
    %v688 = vpop.f32.mrb[0].mxu0
    %v689 = vadd.f32 %v466, %v688
    %v690 = vpop.f32.mrb[0].mxu0
    %v691 = vadd.f32 %v470, %v690
    %692 = vdwg.mxu0
    %693 = vst [vmem:[#allocation3] sm:$0xff] %v582
    %694 = vst [vmem:[#allocation3 + $0x8] sm:$0xff] %v584
    %695 = vst [vmem:[#allocation3 + $0x10] sm:$0xff] %v655
    %696 = vst [vmem:[#allocation3 + $0x18] sm:$0xff] %v657
    %697 = vst [vmem:[#allocation3 + $0x20] sm:$0xff] %v586
    %698 = vst [vmem:[#allocation3 + $0x28] sm:$0xff] %v588
    %699 = vst [vmem:[#allocation3 + $0x30] sm:$0xff] %v659
    %700 = vst [vmem:[#allocation3 + $0x38] sm:$0xff] %v661
    %701 = vst [vmem:[#allocation3 + $0x40] sm:$0xff] %v592
    %702 = vst [vmem:[#allocation3 + $0x48] sm:$0xff] %v594
    %703 = vst [vmem:[#allocation3 + $0x50] sm:$0xff] %v665
    %704 = vst [vmem:[#allocation3 + $0x58] sm:$0xff] %v667
    %705 = vst [vmem:[#allocation3 + $0x60] sm:$0xff] %v596
    %706 = vst [vmem:[#allocation3 + $0x68] sm:$0xff] %v598
    %707 = vst [vmem:[#allocation3 + $0x70] sm:$0xff] %v669
    %708 = vst [vmem:[#allocation3 + $0x78] sm:$0xff] %v671
    %709 = vst [vmem:[#allocation3 + $0x80] sm:$0xff] %v602
    %710 = vst [vmem:[#allocation3 + $0x88] sm:$0xff] %v604
    %711 = vst [vmem:[#allocation3 + $0x90] sm:$0xff] %v675
    %712 = vst [vmem:[#allocation3 + $0x98] sm:$0xff] %v677
    %713 = vst [vmem:[#allocation3 + $0xa0] sm:$0xff] %v606
    %714 = vst [vmem:[#allocation3 + $0xa8] sm:$0xff] %v608
    %715 = vst [vmem:[#allocation3 + $0xb0] sm:$0xff] %v679
    %716 = vst [vmem:[#allocation3 + $0xb8] sm:$0xff] %v681
    %717 = vst [vmem:[#allocation3 + $0xc0] sm:$0xff] %v612
    %718 = vst [vmem:[#allocation3 + $0xc8] sm:$0xff] %v614
    %719 = vst [vmem:[#allocation3 + $0xd0] sm:$0xff] %v685
    %720 = vst [vmem:[#allocation3 + $0xd8] sm:$0xff] %v687
    %721 = vst [vmem:[#allocation3 + $0xe0] sm:$0xff] %v616
    %722 = vst [vmem:[#allocation3 + $0xe8] sm:$0xff] %v618
    %723 = vst [vmem:[#allocation3 + $0xf0] sm:$0xff] %v689
    %724 = vst [vmem:[#allocation3 + $0xf8] sm:$0xff] %v691
    %v725 = vld [vmem:[#allocation4] sm:$0xf]
    %v726 = vld [vmem:[#allocation5] sm:$0xff]
    %v727 = vld [vmem:[#allocation6] sm:$0xf]
    %v728 = vld [vmem:[#allocation7] sm:$0xff]
    %v729 = vld [vmem:[#allocation2] sm:$0xff]
    %v730 = vld [vmem:[#allocation2 + $0x8] sm:$0xff]
    %v731 = vld [vmem:[#allocation2 + $0x10] sm:$0xff]
    %v732 = vld [vmem:[#allocation2 + $0x18] sm:$0xff]
    %v733 = vld [vmem:[#allocation3 + $0xe0] sm:$0xff]
    %v734 = vld [vmem:[#allocation3 + $0xe8] sm:$0xff]
    %v735 = vld [vmem:[#allocation3 + $0xf0] sm:$0xff]
    %v736 = vld [vmem:[#allocation3 + $0xf8] sm:$0xff]
    %v737 = vld [vmem:[#allocation14] sm:$0xff]
    %v738 = vld [vmem:[#allocation14 + $0x8] sm:$0xff]
    %v739 = vld [vmem:[#allocation14 + $0x10] sm:$0xff]
    %v740 = vld [vmem:[#allocation14 + $0x18] sm:$0xff]
    %v741 = vld [vmem:[#allocation14 + $0x20] sm:$0xff]
    %v742 = vld [vmem:[#allocation14 + $0x28] sm:$0xff]
    %v743 = vld [vmem:[#allocation14 + $0x30] sm:$0xff]
    %v744 = vld [vmem:[#allocation14 + $0x38] sm:$0xff]
    %v745 = vld [vmem:[#allocation14 + $0x40] sm:$0xff]
    %v746 = vld [vmem:[#allocation14 + $0x48] sm:$0xff]
    %v747 = vld [vmem:[#allocation14 + $0x50] sm:$0xff]
    %v748 = vld [vmem:[#allocation14 + $0x58] sm:$0xff]
    %v749 = vld [vmem:[#allocation14 + $0x60] sm:$0xff]
    %v750 = vld [vmem:[#allocation14 + $0x68] sm:$0xff]
    %v751 = vld [vmem:[#allocation14 + $0x70] sm:$0xff]
    %v752 = vld [vmem:[#allocation14 + $0x78] sm:$0xff]
    %v753 = vld [vmem:[#allocation14 + $0x80] sm:$0xff]
    %v754 = vld [vmem:[#allocation14 + $0x88] sm:$0xff]
    %v755 = vld [vmem:[#allocation14 + $0x90] sm:$0xff]
    %v756 = vld [vmem:[#allocation14 + $0x98] sm:$0xff]
    %v757 = vld [vmem:[#allocation14 + $0xa0] sm:$0xff]
    %v758 = vld [vmem:[#allocation14 + $0xa8] sm:$0xff]
    %v759 = vld [vmem:[#allocation14 + $0xb0] sm:$0xff]
    %v760 = vld [vmem:[#allocation14 + $0xb8] sm:$0xff]
    %v761 = vld [vmem:[#allocation14 + $0xc0] sm:$0xff]
    %v762 = vld [vmem:[#allocation14 + $0xc8] sm:$0xff]
    %v763 = vld [vmem:[#allocation14 + $0xd0] sm:$0xff]
    %v764 = vld [vmem:[#allocation14 + $0xd8] sm:$0xff]
    %v765 = vld [vmem:[#allocation14 + $0xe0] sm:$0xff]
    %v766 = vld [vmem:[#allocation14 + $0xe8] sm:$0xff]
    %v767 = vld [vmem:[#allocation14 + $0xf0] sm:$0xff]
    %v768 = vld [vmem:[#allocation14 + $0xf8] sm:$0xff]
    %v801 = vunpack.c.l.b16 %v737
    %v802 = vunpack.c.h.b16 %v737
    %v803 = vunpack.c.l.b16 %v738
    %v804 = vunpack.c.h.b16 %v738
    %v805 = vunpack.c.l.b16 %v739
    %v806 = vunpack.c.h.b16 %v739
    %v807 = vunpack.c.l.b16 %v740
    %v808 = vunpack.c.h.b16 %v740
    %v809 = vunpack.c.l.b16 %v741
    %v810 = vunpack.c.h.b16 %v741
    %v811 = vunpack.c.l.b16 %v742
    %v812 = vunpack.c.h.b16 %v742
    %v813 = vunpack.c.l.b16 %v743
    %v814 = vunpack.c.h.b16 %v743
    %v815 = vunpack.c.l.b16 %v744
    %v816 = vunpack.c.h.b16 %v744
    %v817 = vunpack.c.l.b16 %v745
    %v818 = vunpack.c.h.b16 %v745
    %v819 = vunpack.c.l.b16 %v746
    %v820 = vunpack.c.h.b16 %v746
    %v821 = vunpack.c.l.b16 %v747
    %v822 = vunpack.c.h.b16 %v747
    %v823 = vunpack.c.l.b16 %v748
    %v824 = vunpack.c.h.b16 %v748
    %v825 = vunpack.c.l.b16 %v749
    %v826 = vunpack.c.h.b16 %v749
    %v827 = vunpack.c.l.b16 %v750
    %v828 = vunpack.c.h.b16 %v750
    %v829 = vunpack.c.l.b16 %v751
    %v830 = vunpack.c.h.b16 %v751
    %v831 = vunpack.c.l.b16 %v752
    %v832 = vunpack.c.h.b16 %v752
    %v833 = vunpack.c.l.b16 %v753
    %v834 = vunpack.c.h.b16 %v753
    %v835 = vunpack.c.l.b16 %v754
    %v836 = vunpack.c.h.b16 %v754
    %v837 = vunpack.c.l.b16 %v755
    %v838 = vunpack.c.h.b16 %v755
    %v839 = vunpack.c.l.b16 %v756
    %v840 = vunpack.c.h.b16 %v756
    %v841 = vunpack.c.l.b16 %v757
    %v842 = vunpack.c.h.b16 %v757
    %v843 = vunpack.c.l.b16 %v758
    %v844 = vunpack.c.h.b16 %v758
    %v845 = vunpack.c.l.b16 %v759
    %v846 = vunpack.c.h.b16 %v759
    %v847 = vunpack.c.l.b16 %v760
    %v848 = vunpack.c.h.b16 %v760
    %v849 = vunpack.c.l.b16 %v761
    %v850 = vunpack.c.h.b16 %v761
    %v851 = vunpack.c.l.b16 %v762
    %v852 = vunpack.c.h.b16 %v762
    %v853 = vunpack.c.l.b16 %v763
    %v854 = vunpack.c.h.b16 %v763
    %v855 = vunpack.c.l.b16 %v764
    %v856 = vunpack.c.h.b16 %v764
    %v857 = vunpack.c.l.b16 %v765
    %v858 = vunpack.c.h.b16 %v765
    %v859 = vunpack.c.l.b16 %v766
    %v860 = vunpack.c.h.b16 %v766
    %v861 = vunpack.c.l.b16 %v767
    %v862 = vunpack.c.h.b16 %v767
    %v863 = vunpack.c.l.b16 %v768
    %v864 = vunpack.c.h.b16 %v768
    %v865 = vpack.c.b16 %v805, %v801
    %v866 = vpack.c.b16 %v806, %v802
    %v867 = vpack.c.b16 %v807, %v803
    %v868 = vpack.c.b16 %v808, %v804
    %v869 = vpack.c.b16 %v813, %v809
    %v870 = vpack.c.b16 %v814, %v810
    %v871 = vpack.c.b16 %v815, %v811
    %v872 = vpack.c.b16 %v816, %v812
    %v873 = vpack.c.b16 %v821, %v817
    %v874 = vpack.c.b16 %v822, %v818
    %v875 = vpack.c.b16 %v823, %v819
    %v876 = vpack.c.b16 %v824, %v820
    %v877 = vpack.c.b16 %v829, %v825
    %v878 = vpack.c.b16 %v830, %v826
    %v879 = vpack.c.b16 %v831, %v827
    %v880 = vpack.c.b16 %v832, %v828
    %v881 = vpack.c.b16 %v837, %v833
    %v882 = vpack.c.b16 %v838, %v834
    %v883 = vpack.c.b16 %v839, %v835
    %v884 = vpack.c.b16 %v840, %v836
    %v885 = vpack.c.b16 %v845, %v841
    %v886 = vpack.c.b16 %v846, %v842
    %v887 = vpack.c.b16 %v847, %v843
    %v888 = vpack.c.b16 %v848, %v844
    %v889 = vpack.c.b16 %v853, %v849
    %v890 = vpack.c.b16 %v854, %v850
    %v891 = vpack.c.b16 %v855, %v851
    %v892 = vpack.c.b16 %v856, %v852
    %v893 = vpack.c.b16 %v861, %v857
    %v894 = vpack.c.b16 %v862, %v858
    %v895 = vpack.c.b16 %v863, %v859
    %v896 = vpack.c.b16 %v864, %v860
    %929 = vmatprep.subr.bf16.mxu0 %v866
    %930 = vmatpush1.bf16.msra.mxu0 %v865
    %931 = vmatprep.subr.bf16.mxu0 %v870
    %932 = vmatpush1.bf16.msra.mxu0 %v869
    %933 = vmatprep.subr.bf16.mxu0 %v874
    %934 = vmatpush1.bf16.msra.mxu0 %v873
    %935 = vmatprep.subr.bf16.mxu0 %v878
    %936 = vmatpush1.bf16.msra.mxu0 %v877
    %937 = vmatprep.subr.bf16.mxu0 %v882
    %938 = vmatpush1.bf16.msra.mxu0 %v881
    %939 = vmatprep.subr.bf16.mxu0 %v886
    %940 = vmatpush1.bf16.msra.mxu0 %v885
    %941 = vmatprep.subr.bf16.mxu0 %v890
    %942 = vmatpush1.bf16.msra.mxu0 %v889
    %943 = vmatprep.subr.bf16.mxu0 %v894
    %944 = vmatpush1.bf16.msra.mxu0 %v893
    %945 = vmatprep.subr.bf16.mxu0 0
    %946 = vmatpush1.bf16.msra.mxu0 0
    %947 = vmatprep.subr.bf16.mxu0 0
    %948 = vmatpush1.bf16.msra.mxu0 0
    %949 = vmatprep.subr.bf16.mxu0 0
    %950 = vmatpush1.bf16.msra.mxu0 0
    %951 = vmatprep.subr.bf16.mxu0 0
    %952 = vmatpush1.bf16.msra.mxu0 0
    %953 = vmatprep.subr.bf16.mxu0 0
    %954 = vmatpush1.bf16.msra.mxu0 0
    %955 = vmatprep.subr.bf16.mxu0 0
    %956 = vmatpush1.bf16.msra.mxu0 0
    %957 = vmatprep.subr.bf16.mxu0 0
    %958 = vmatpush1.bf16.msra.mxu0 0
    %959 = vmatprep.subr.bf16.mxu0 0
    %960 = vmatpush1.bf16.msra.mxu0 0
    %961 = vmatprep.mubr.bf16.mxu0 0
    %962 = vmatmul.mubr.bf16.gmra.mrb[0].mxu0 %v725
    %v963 = vpop.f32.mrb[0].mxu0
    %v964 = vadd.f32 0.0, %v963
    %v965 = vpop.f32.mrb[0].mxu0
    %v966 = vadd.f32 0.0, %v965
    %v967 = vpop.f32.mrb[0].mxu0
    %v968 = vpop.f32.mrb[0].mxu0
    %969 = vdwg.mxu0
    %970 = vmatprep.subr.bf16.mxu0 %v868
    %971 = vmatpush1.bf16.msra.mxu0 %v867
    %972 = vmatprep.subr.bf16.mxu0 %v872
    %973 = vmatpush1.bf16.msra.mxu0 %v871
    %974 = vmatprep.subr.bf16.mxu0 %v876
    %975 = vmatpush1.bf16.msra.mxu0 %v875
    %976 = vmatprep.subr.bf16.mxu0 %v880
    %977 = vmatpush1.bf16.msra.mxu0 %v879
    %978 = vmatprep.subr.bf16.mxu0 %v884
    %979 = vmatpush1.bf16.msra.mxu0 %v883
    %980 = vmatprep.subr.bf16.mxu0 %v888
    %981 = vmatpush1.bf16.msra.mxu0 %v887
    %982 = vmatprep.subr.bf16.mxu0 %v892
    %983 = vmatpush1.bf16.msra.mxu0 %v891
    %984 = vmatprep.subr.bf16.mxu0 %v896
    %985 = vmatpush1.bf16.msra.mxu0 %v895
    %986 = vmatprep.subr.bf16.mxu0 0
    %987 = vmatpush1.bf16.msra.mxu0 0
    %988 = vmatprep.subr.bf16.mxu0 0
    %989 = vmatpush1.bf16.msra.mxu0 0
    %990 = vmatprep.subr.bf16.mxu0 0
    %991 = vmatpush1.bf16.msra.mxu0 0
    %992 = vmatprep.subr.bf16.mxu0 0
    %993 = vmatpush1.bf16.msra.mxu0 0
    %994 = vmatprep.subr.bf16.mxu0 0
    %995 = vmatpush1.bf16.msra.mxu0 0
    %996 = vmatprep.subr.bf16.mxu0 0
    %997 = vmatpush1.bf16.msra.mxu0 0
    %998 = vmatprep.subr.bf16.mxu0 0
    %999 = vmatpush1.bf16.msra.mxu0 0
    %1000 = vmatprep.subr.bf16.mxu0 0
    %1001 = vmatpush1.bf16.msra.mxu0 0
    %1002 = vmatprep.mubr.bf16.mxu0 0
    %1003 = vmatmul.mubr.bf16.gmra.mrb[0].mxu0 %v725
    %v1004 = vpop.f32.mrb[0].mxu0
    %v1005 = vadd.f32 0.0, %v1004
    %v1006 = vpop.f32.mrb[0].mxu0
    %v1007 = vadd.f32 0.0, %v1006
    %v1008 = vpop.f32.mrb[0].mxu0
    %v1009 = vpop.f32.mrb[0].mxu0
    %1010 = vdwg.mxu0
    %v1011 = vadd.f32 %v729, %v964
    %v1012 = vadd.f32 %v730, %v966
    %v1013 = vadd.f32 %v731, %v1005
    %v1014 = vadd.f32 %v732, %v1007
    %v1015 = vxor.u32 %v1011, 2147483648
    %v1016 = vmul.f32 %v1015, 1.442695
    %v1017 = vpow.pop %v1016
    %v1018 = vadd.f32 %v1017, 1.0
    %v1019 = vrcp.pop %v1018
    %v1020 = vmul.f32 1.0, %v1019
    %v1021 = vxor.u32 %v1012, 2147483648
    %v1022 = vmul.f32 %v1021, 1.442695
    %v1023 = vpow.pop %v1022
    %v1024 = vadd.f32 %v1023, 1.0
    %v1025 = vrcp.pop %v1024
    %v1026 = vmul.f32 1.0, %v1025
    %v1027 = vtanh.pop %v1013
    %v1028 = vxor.u32 %v1014, 2147483648
    %v1029 = vmul.f32 %v1028, 1.442695
    %v1030 = vpow.pop %v1029
    %v1031 = vadd.f32 %v1030, 1.0
    %v1032 = vrcp.pop %v1031
    %v1033 = vmul.f32 1.0, %v1032
    %v1034 = vmul.f32 %v1026, %v726
    %v1035 = vmul.f32 %v1020, %v1027
    %v1036 = vadd.f32 %v1034, %v1035
    %v1037 = vtanh.pop %v1036
    %v1038 = vmul.f32 %v1033, %v1037
    %v1039 = vpack.c.bf16 %v1038, %v1038
    %v1040 = vld [vmem:[#allocation16] sm:$0xff]
    %v1041 = vld [vmem:[#allocation16 + $0x8] sm:$0xff]
    %v1042 = vld [vmem:[#allocation16 + $0x10] sm:$0xff]
    %v1043 = vld [vmem:[#allocation16 + $0x18] sm:$0xff]
    %v1044 = vld [vmem:[#allocation16 + $0x20] sm:$0xff]
    %v1045 = vld [vmem:[#allocation16 + $0x28] sm:$0xff]
    %v1046 = vld [vmem:[#allocation16 + $0x30] sm:$0xff]
    %v1047 = vld [vmem:[#allocation16 + $0x38] sm:$0xff]
    %v1048 = vld [vmem:[#allocation16 + $0x40] sm:$0xff]
    %v1049 = vld [vmem:[#allocation16 + $0x48] sm:$0xff]
    %v1050 = vld [vmem:[#allocation16 + $0x50] sm:$0xff]
    %v1051 = vld [vmem:[#allocation16 + $0x58] sm:$0xff]
    %v1052 = vld [vmem:[#allocation16 + $0x60] sm:$0xff]
    %v1053 = vld [vmem:[#allocation16 + $0x68] sm:$0xff]
    %v1054 = vld [vmem:[#allocation16 + $0x70] sm:$0xff]
    %v1055 = vld [vmem:[#allocation16 + $0x78] sm:$0xff]
    %v1056 = vld [vmem:[#allocation16 + $0x80] sm:$0xff]
    %v1057 = vld [vmem:[#allocation16 + $0x88] sm:$0xff]
    %v1058 = vld [vmem:[#allocation16 + $0x90] sm:$0xff]
    %v1059 = vld [vmem:[#allocation16 + $0x98] sm:$0xff]
    %v1060 = vld [vmem:[#allocation16 + $0xa0] sm:$0xff]
    %v1061 = vld [vmem:[#allocation16 + $0xa8] sm:$0xff]
    %v1062 = vld [vmem:[#allocation16 + $0xb0] sm:$0xff]
    %v1063 = vld [vmem:[#allocation16 + $0xb8] sm:$0xff]
    %v1064 = vld [vmem:[#allocation16 + $0xc0] sm:$0xff]
    %v1065 = vld [vmem:[#allocation16 + $0xc8] sm:$0xff]
    %v1066 = vld [vmem:[#allocation16 + $0xd0] sm:$0xff]
    %v1067 = vld [vmem:[#allocation16 + $0xd8] sm:$0xff]
    %v1068 = vld [vmem:[#allocation16 + $0xe0] sm:$0xff]
    %v1069 = vld [vmem:[#allocation16 + $0xe8] sm:$0xff]
    %v1070 = vld [vmem:[#allocation16 + $0xf0] sm:$0xff]
    %v1071 = vld [vmem:[#allocation16 + $0xf8] sm:$0xff]
    %v1104 = vunpack.c.l.b16 %v1040
    %v1105 = vunpack.c.h.b16 %v1040
    %v1106 = vunpack.c.l.b16 %v1041
    %v1107 = vunpack.c.h.b16 %v1041
    %v1108 = vunpack.c.l.b16 %v1042
    %v1109 = vunpack.c.h.b16 %v1042
    %v1110 = vunpack.c.l.b16 %v1043
    %v1111 = vunpack.c.h.b16 %v1043
    %v1112 = vunpack.c.l.b16 %v1044
    %v1113 = vunpack.c.h.b16 %v1044
    %v1114 = vunpack.c.l.b16 %v1045
    %v1115 = vunpack.c.h.b16 %v1045
    %v1116 = vunpack.c.l.b16 %v1046
    %v1117 = vunpack.c.h.b16 %v1046
    %v1118 = vunpack.c.l.b16 %v1047
    %v1119 = vunpack.c.h.b16 %v1047
    %v1120 = vunpack.c.l.b16 %v1048
    %v1121 = vunpack.c.h.b16 %v1048
    %v1122 = vunpack.c.l.b16 %v1049
    %v1123 = vunpack.c.h.b16 %v1049
    %v1124 = vunpack.c.l.b16 %v1050
    %v1125 = vunpack.c.h.b16 %v1050
    %v1126 = vunpack.c.l.b16 %v1051
    %v1127 = vunpack.c.h.b16 %v1051
    %v1128 = vunpack.c.l.b16 %v1052
    %v1129 = vunpack.c.h.b16 %v1052
    %v1130 = vunpack.c.l.b16 %v1053
    %v1131 = vunpack.c.h.b16 %v1053
    %v1132 = vunpack.c.l.b16 %v1054
    %v1133 = vunpack.c.h.b16 %v1054
    %v1134 = vunpack.c.l.b16 %v1055
    %v1135 = vunpack.c.h.b16 %v1055
    %v1136 = vunpack.c.l.b16 %v1056
    %v1137 = vunpack.c.h.b16 %v1056
    %v1138 = vunpack.c.l.b16 %v1057
    %v1139 = vunpack.c.h.b16 %v1057
    %v1140 = vunpack.c.l.b16 %v1058
    %v1141 = vunpack.c.h.b16 %v1058
    %v1142 = vunpack.c.l.b16 %v1059
    %v1143 = vunpack.c.h.b16 %v1059
    %v1144 = vunpack.c.l.b16 %v1060
    %v1145 = vunpack.c.h.b16 %v1060
    %v1146 = vunpack.c.l.b16 %v1061
    %v1147 = vunpack.c.h.b16 %v1061
    %v1148 = vunpack.c.l.b16 %v1062
    %v1149 = vunpack.c.h.b16 %v1062
    %v1150 = vunpack.c.l.b16 %v1063
    %v1151 = vunpack.c.h.b16 %v1063
    %v1152 = vunpack.c.l.b16 %v1064
    %v1153 = vunpack.c.h.b16 %v1064
    %v1154 = vunpack.c.l.b16 %v1065
    %v1155 = vunpack.c.h.b16 %v1065
    %v1156 = vunpack.c.l.b16 %v1066
    %v1157 = vunpack.c.h.b16 %v1066
    %v1158 = vunpack.c.l.b16 %v1067
    %v1159 = vunpack.c.h.b16 %v1067
    %v1160 = vunpack.c.l.b16 %v1068
    %v1161 = vunpack.c.h.b16 %v1068
    %v1162 = vunpack.c.l.b16 %v1069
    %v1163 = vunpack.c.h.b16 %v1069
    %v1164 = vunpack.c.l.b16 %v1070
    %v1165 = vunpack.c.h.b16 %v1070
    %v1166 = vunpack.c.l.b16 %v1071
    %v1167 = vunpack.c.h.b16 %v1071
    %v1168 = vpack.c.b16 %v1108, %v1104
    %v1169 = vpack.c.b16 %v1109, %v1105
    %v1170 = vpack.c.b16 %v1110, %v1106
    %v1171 = vpack.c.b16 %v1111, %v1107
    %v1172 = vpack.c.b16 %v1116, %v1112
    %v1173 = vpack.c.b16 %v1117, %v1113
    %v1174 = vpack.c.b16 %v1118, %v1114
    %v1175 = vpack.c.b16 %v1119, %v1115
    %v1176 = vpack.c.b16 %v1124, %v1120
    %v1177 = vpack.c.b16 %v1125, %v1121
    %v1178 = vpack.c.b16 %v1126, %v1122
    %v1179 = vpack.c.b16 %v1127, %v1123
    %v1180 = vpack.c.b16 %v1132, %v1128
    %v1181 = vpack.c.b16 %v1133, %v1129
    %v1182 = vpack.c.b16 %v1134, %v1130
    %v1183 = vpack.c.b16 %v1135, %v1131
    %v1184 = vpack.c.b16 %v1140, %v1136
    %v1185 = vpack.c.b16 %v1141, %v1137
    %v1186 = vpack.c.b16 %v1142, %v1138
    %v1187 = vpack.c.b16 %v1143, %v1139
    %v1188 = vpack.c.b16 %v1148, %v1144
    %v1189 = vpack.c.b16 %v1149, %v1145
    %v1190 = vpack.c.b16 %v1150, %v1146
    %v1191 = vpack.c.b16 %v1151, %v1147
    %v1192 = vpack.c.b16 %v1156, %v1152
    %v1193 = vpack.c.b16 %v1157, %v1153
    %v1194 = vpack.c.b16 %v1158, %v1154
    %v1195 = vpack.c.b16 %v1159, %v1155
    %v1196 = vpack.c.b16 %v1164, %v1160
    %v1197 = vpack.c.b16 %v1165, %v1161
    %v1198 = vpack.c.b16 %v1166, %v1162
    %v1199 = vpack.c.b16 %v1167, %v1163
    %1232 = vmatprep.subr.bf16.mxu0 %v1169
    %1233 = vmatpush1.bf16.msra.mxu0 %v1168
    %1234 = vmatprep.subr.bf16.mxu0 %v1173
    %1235 = vmatpush1.bf16.msra.mxu0 %v1172
    %1236 = vmatprep.subr.bf16.mxu0 %v1177
    %1237 = vmatpush1.bf16.msra.mxu0 %v1176
    %1238 = vmatprep.subr.bf16.mxu0 %v1181
    %1239 = vmatpush1.bf16.msra.mxu0 %v1180
    %1240 = vmatprep.subr.bf16.mxu0 %v1185
    %1241 = vmatpush1.bf16.msra.mxu0 %v1184
    %1242 = vmatprep.subr.bf16.mxu0 %v1189
    %1243 = vmatpush1.bf16.msra.mxu0 %v1188
    %1244 = vmatprep.subr.bf16.mxu0 %v1193
    %1245 = vmatpush1.bf16.msra.mxu0 %v1192
    %1246 = vmatprep.subr.bf16.mxu0 %v1197
    %1247 = vmatpush1.bf16.msra.mxu0 %v1196
    %1248 = vmatprep.subr.bf16.mxu0 0
    %1249 = vmatpush1.bf16.msra.mxu0 0
    %1250 = vmatprep.subr.bf16.mxu0 0
    %1251 = vmatpush1.bf16.msra.mxu0 0
    %1252 = vmatprep.subr.bf16.mxu0 0
    %1253 = vmatpush1.bf16.msra.mxu0 0
    %1254 = vmatprep.subr.bf16.mxu0 0
    %1255 = vmatpush1.bf16.msra.mxu0 0
    %1256 = vmatprep.subr.bf16.mxu0 0
    %1257 = vmatpush1.bf16.msra.mxu0 0
    %1258 = vmatprep.subr.bf16.mxu0 0
    %1259 = vmatpush1.bf16.msra.mxu0 0
    %1260 = vmatprep.subr.bf16.mxu0 0
    %1261 = vmatpush1.bf16.msra.mxu0 0
    %1262 = vmatprep.subr.bf16.mxu0 0
    %1263 = vmatpush1.bf16.msra.mxu0 0
    %1264 = vmatprep.mubr.bf16.mxu0 0
    %1265 = vmatmul.mubr.bf16.gmra.mrb[0].mxu0 %v727
    %v1266 = vpop.f32.mrb[0].mxu0
    %v1267 = vadd.f32 0.0, %v1266
    %v1268 = vpop.f32.mrb[0].mxu0
    %v1269 = vadd.f32 0.0, %v1268
    %v1270 = vpop.f32.mrb[0].mxu0
    %v1271 = vpop.f32.mrb[0].mxu0
    %1272 = vdwg.mxu0
    %1273 = vmatprep.subr.bf16.mxu0 %v1171
    %1274 = vmatpush1.bf16.msra.mxu0 %v1170
    %1275 = vmatprep.subr.bf16.mxu0 %v1175
    %1276 = vmatpush1.bf16.msra.mxu0 %v1174
    %1277 = vmatprep.subr.bf16.mxu0 %v1179
    %1278 = vmatpush1.bf16.msra.mxu0 %v1178
    %1279 = vmatprep.subr.bf16.mxu0 %v1183
    %1280 = vmatpush1.bf16.msra.mxu0 %v1182
    %1281 = vmatprep.subr.bf16.mxu0 %v1187
    %1282 = vmatpush1.bf16.msra.mxu0 %v1186
    %1283 = vmatprep.subr.bf16.mxu0 %v1191
    %1284 = vmatpush1.bf16.msra.mxu0 %v1190
    %1285 = vmatprep.subr.bf16.mxu0 %v1195
    %1286 = vmatpush1.bf16.msra.mxu0 %v1194
    %1287 = vmatprep.subr.bf16.mxu0 %v1199
    %1288 = vmatpush1.bf16.msra.mxu0 %v1198
    %1289 = vmatprep.subr.bf16.mxu0 0
    %1290 = vmatpush1.bf16.msra.mxu0 0
    %1291 = vmatprep.subr.bf16.mxu0 0
    %1292 = vmatpush1.bf16.msra.mxu0 0
    %1293 = vmatprep.subr.bf16.mxu0 0
    %1294 = vmatpush1.bf16.msra.mxu0 0
    %1295 = vmatprep.subr.bf16.mxu0 0
    %1296 = vmatpush1.bf16.msra.mxu0 0
    %1297 = vmatprep.subr.bf16.mxu0 0
    %1298 = vmatpush1.bf16.msra.mxu0 0
    %1299 = vmatprep.subr.bf16.mxu0 0
    %1300 = vmatpush1.bf16.msra.mxu0 0
    %1301 = vmatprep.subr.bf16.mxu0 0
    %1302 = vmatpush1.bf16.msra.mxu0 0
    %1303 = vmatprep.subr.bf16.mxu0 0
    %1304 = vmatpush1.bf16.msra.mxu0 0
    %1305 = vmatprep.mubr.bf16.mxu0 0
    %1306 = vmatmul.mubr.bf16.gmra.mrb[0].mxu0 %v727
    %v1307 = vpop.f32.mrb[0].mxu0
    %v1308 = vadd.f32 0.0, %v1307
    %v1309 = vpop.f32.mrb[0].mxu0
    %v1310 = vadd.f32 0.0, %v1309
    %v1311 = vpop.f32.mrb[0].mxu0
    %v1312 = vpop.f32.mrb[0].mxu0
    %1313 = vdwg.mxu0
    %v1314 = vadd.f32 %v733, %v1267
    %v1315 = vadd.f32 %v734, %v1269
    %v1316 = vadd.f32 %v735, %v1308
    %v1317 = vadd.f32 %v736, %v1310
    %v1318 = vxor.u32 %v1314, 2147483648
    %v1319 = vmul.f32 %v1318, 1.442695
    %v1320 = vpow.pop %v1319
    %v1321 = vadd.f32 %v1320, 1.0
    %v1322 = vrcp.pop %v1321
    %v1323 = vmul.f32 1.0, %v1322
    %v1324 = vxor.u32 %v1315, 2147483648
    %v1325 = vmul.f32 %v1324, 1.442695
    %v1326 = vpow.pop %v1325
    %v1327 = vadd.f32 %v1326, 1.0
    %v1328 = vrcp.pop %v1327
    %v1329 = vmul.f32 1.0, %v1328
    %v1330 = vtanh.pop %v1316
    %v1331 = vxor.u32 %v1317, 2147483648
    %v1332 = vmul.f32 %v1331, 1.442695
    %v1333 = vpow.pop %v1332
    %v1334 = vadd.f32 %v1333, 1.0
    %v1335 = vrcp.pop %v1334
    %v1336 = vmul.f32 1.0, %v1335
    %v1337 = vmul.f32 %v1329, %v728
    %v1338 = vmul.f32 %v1323, %v1330
    %v1339 = vadd.f32 %v1337, %v1338
    %v1340 = vtanh.pop %v1339
    %v1341 = vmul.f32 %v1336, %v1340
    %v1342 = vpack.c.bf16 %v1341, %v1341
    %v1343 = vld [vmem:[#allocation2 + $0x20] sm:$0xff]
    %v1344 = vld [vmem:[#allocation2 + $0x28] sm:$0xff]
    %v1345 = vld [vmem:[#allocation2 + $0x30] sm:$0xff]
    %v1346 = vld [vmem:[#allocation2 + $0x38] sm:$0xff]
    %v1347 = vld [vmem:[#allocation3 + $0xc0] sm:$0xff]
    %v1348 = vld [vmem:[#allocation3 + $0xc8] sm:$0xff]
    %v1349 = vld [vmem:[#allocation3 + $0xd0] sm:$0xff]
    %v1350 = vld [vmem:[#allocation3 + $0xd8] sm:$0xff]
    %1351 = vmatprep.subr.bf16.mxu0 %v866
    %1352 = vmatpush1.bf16.msra.mxu0 %v865
    %1353 = vmatprep.subr.bf16.mxu0 %v870
    %1354 = vmatpush1.bf16.msra.mxu0 %v869
    %1355 = vmatprep.subr.bf16.mxu0 %v874
    %1356 = vmatpush1.bf16.msra.mxu0 %v873
    %1357 = vmatprep.subr.bf16.mxu0 %v878
    %1358 = vmatpush1.bf16.msra.mxu0 %v877
    %1359 = vmatprep.subr.bf16.mxu0 %v882
    %1360 = vmatpush1.bf16.msra.mxu0 %v881
    %1361 = vmatprep.subr.bf16.mxu0 %v886
    %1362 = vmatpush1.bf16.msra.mxu0 %v885
    %1363 = vmatprep.subr.bf16.mxu0 %v890
    %1364 = vmatpush1.bf16.msra.mxu0 %v889
    %1365 = vmatprep.subr.bf16.mxu0 %v894
    %1366 = vmatpush1.bf16.msra.mxu0 %v893
    %1367 = vmatprep.subr.bf16.mxu0 0
    %1368 = vmatpush1.bf16.msra.mxu0 0
    %1369 = vmatprep.subr.bf16.mxu0 0
    %1370 = vmatpush1.bf16.msra.mxu0 0
    %1371 = vmatprep.subr.bf16.mxu0 0
    %1372 = vmatpush1.bf16.msra.mxu0 0
    %1373 = vmatprep.subr.bf16.mxu0 0
    %1374 = vmatpush1.bf16.msra.mxu0 0
    %1375 = vmatprep.subr.bf16.mxu0 0
    %1376 = vmatpush1.bf16.msra.mxu0 0
    %1377 = vmatprep.subr.bf16.mxu0 0
    %1378 = vmatpush1.bf16.msra.mxu0 0
    %1379 = vmatprep.subr.bf16.mxu0 0
    %1380 = vmatpush1.bf16.msra.mxu0 0
    %1381 = vmatprep.subr.bf16.mxu0 0
    %1382 = vmatpush1.bf16.msra.mxu0 0
    %1383 = vmatprep.mubr.bf16.mxu0 0
    %1384 = vmatmul.mubr.bf16.gmra.mrb[0].mxu0 %v1039
    %v1385 = vpop.f32.mrb[0].mxu0
    %v1386 = vadd.f32 0.0, %v1385
    %v1387 = vpop.f32.mrb[0].mxu0
    %v1388 = vadd.f32 0.0, %v1387
    %v1389 = vpop.f32.mrb[0].mxu0
    %v1390 = vpop.f32.mrb[0].mxu0
    %1391 = vdwg.mxu0
    %1392 = vmatprep.subr.bf16.mxu0 %v868
    %1393 = vmatpush1.bf16.msra.mxu0 %v867
    %1394 = vmatprep.subr.bf16.mxu0 %v872
    %1395 = vmatpush1.bf16.msra.mxu0 %v871
    %1396 = vmatprep.subr.bf16.mxu0 %v876
    %1397 = vmatpush1.bf16.msra.mxu0 %v875
    %1398 = vmatprep.subr.bf16.mxu0 %v880
    %1399 = vmatpush1.bf16.msra.mxu0 %v879
    %1400 = vmatprep.subr.bf16.mxu0 %v884
    %1401 = vmatpush1.bf16.msra.mxu0 %v883
    %1402 = vmatprep.subr.bf16.mxu0 %v888
    %1403 = vmatpush1.bf16.msra.mxu0 %v887
    %1404 = vmatprep.subr.bf16.mxu0 %v892
    %1405 = vmatpush1.bf16.msra.mxu0 %v891
    %1406 = vmatprep.subr.bf16.mxu0 %v896
    %1407 = vmatpush1.bf16.msra.mxu0 %v895
    %1408 = vmatprep.subr.bf16.mxu0 0
    %1409 = vmatpush1.bf16.msra.mxu0 0
    %1410 = vmatprep.subr.bf16.mxu0 0
    %1411 = vmatpush1.bf16.msra.mxu0 0
    %1412 = vmatprep.subr.bf16.mxu0 0
    %1413 = vmatpush1.bf16.msra.mxu0 0
    %1414 = vmatprep.subr.bf16.mxu0 0
    %1415 = vmatpush1.bf16.msra.mxu0 0
    %1416 = vmatprep.subr.bf16.mxu0 0
    %1417 = vmatpush1.bf16.msra.mxu0 0
    %1418 = vmatprep.subr.bf16.mxu0 0
    %1419 = vmatpush1.bf16.msra.mxu0 0
    %1420 = vmatprep.subr.bf16.mxu0 0
    %1421 = vmatpush1.bf16.msra.mxu0 0
    %1422 = vmatprep.subr.bf16.mxu0 0
    %1423 = vmatpush1.bf16.msra.mxu0 0
    %1424 = vmatprep.mubr.bf16.mxu0 0
    %1425 = vmatmul.mubr.bf16.gmra.mrb[0].mxu0 %v1039
    %v1426 = vpop.f32.mrb[0].mxu0
    %v1427 = vadd.f32 0.0, %v1426
    %v1428 = vpop.f32.mrb[0].mxu0
    %v1429 = vadd.f32 0.0, %v1428
    %v1430 = vpop.f32.mrb[0].mxu0
    %v1431 = vpop.f32.mrb[0].mxu0
    %1432 = vdwg.mxu0
    %v1433 = vadd.f32 %v1343, %v1386
    %v1434 = vadd.f32 %v1344, %v1388
    %v1435 = vadd.f32 %v1345, %v1427
    %v1436 = vadd.f32 %v1346, %v1429
    %v1437 = vxor.u32 %v1433, 2147483648
    %v1438 = vmul.f32 %v1437, 1.442695
    %v1439 = vpow.pop %v1438
    %v1440 = vadd.f32 %v1439, 1.0
    %v1441 = vrcp.pop %v1440
    %v1442 = vmul.f32 1.0, %v1441
    %v1443 = vxor.u32 %v1434, 2147483648
    %v1444 = vmul.f32 %v1443, 1.442695
    %v1445 = vpow.pop %v1444
    %v1446 = vadd.f32 %v1445, 1.0
    %v1447 = vrcp.pop %v1446
    %v1448 = vmul.f32 1.0, %v1447
    %v1449 = vtanh.pop %v1435
    %v1450 = vxor.u32 %v1436, 2147483648
    %v1451 = vmul.f32 %v1450, 1.442695
    %v1452 = vpow.pop %v1451
    %v1453 = vadd.f32 %v1452, 1.0
    %v1454 = vrcp.pop %v1453
    %v1455 = vmul.f32 1.0, %v1454
    %v1456 = vmul.f32 %v1448, %v1036
    %v1457 = vmul.f32 %v1442, %v1449
    %v1458 = vadd.f32 %v1456, %v1457
    %v1459 = vtanh.pop %v1458
    %v1460 = vmul.f32 %v1455, %v1459
    %v1461 = vpack.c.bf16 %v1460, %v1460
    %1462 = vmatprep.subr.bf16.mxu0 %v1169
    %1463 = vmatpush1.bf16.msra.mxu0 %v1168
    %1464 = vmatprep.subr.bf16.mxu0 %v1173
    %1465 = vmatpush1.bf16.msra.mxu0 %v1172
    %1466 = vmatprep.subr.bf16.mxu0 %v1177
    %1467 = vmatpush1.bf16.msra.mxu0 %v1176
    %1468 = vmatprep.subr.bf16.mxu0 %v1181
    %1469 = vmatpush1.bf16.msra.mxu0 %v1180
    %1470 = vmatprep.subr.bf16.mxu0 %v1185
    %1471 = vmatpush1.bf16.msra.mxu0 %v1184
    %1472 = vmatprep.subr.bf16.mxu0 %v1189
    %1473 = vmatpush1.bf16.msra.mxu0 %v1188
    %1474 = vmatprep.subr.bf16.mxu0 %v1193
    %1475 = vmatpush1.bf16.msra.mxu0 %v1192
    %1476 = vmatprep.subr.bf16.mxu0 %v1197
    %1477 = vmatpush1.bf16.msra.mxu0 %v1196
    %1478 = vmatprep.subr.bf16.mxu0 0
    %1479 = vmatpush1.bf16.msra.mxu0 0
    %1480 = vmatprep.subr.bf16.mxu0 0
    %1481 = vmatpush1.bf16.msra.mxu0 0
    %1482 = vmatprep.subr.bf16.mxu0 0
    %1483 = vmatpush1.bf16.msra.mxu0 0
    %1484 = vmatprep.subr.bf16.mxu0 0
    %1485 = vmatpush1.bf16.msra.mxu0 0
    %1486 = vmatprep.subr.bf16.mxu0 0
    %1487 = vmatpush1.bf16.msra.mxu0 0
    %1488 = vmatprep.subr.bf16.mxu0 0
    %1489 = vmatpush1.bf16.msra.mxu0 0
    %1490 = vmatprep.subr.bf16.mxu0 0
    %1491 = vmatpush1.bf16.msra.mxu0 0
    %1492 = vmatprep.subr.bf16.mxu0 0
    %1493 = vmatpush1.bf16.msra.mxu0 0
    %1494 = vmatprep.mubr.bf16.mxu0 0
    %1495 = vmatmul.mubr.bf16.gmra.mrb[0].mxu0 %v1342
    %v1496 = vpop.f32.mrb[0].mxu0
    %v1497 = vadd.f32 0.0, %v1496
    %v1498 = vpop.f32.mrb[0].mxu0
    %v1499 = vadd.f32 0.0, %v1498
    %v1500 = vpop.f32.mrb[0].mxu0
    %v1501 = vpop.f32.mrb[0].mxu0
    %1502 = vdwg.mxu0
    %1503 = vmatprep.subr.bf16.mxu0 %v1171
    %1504 = vmatpush1.bf16.msra.mxu0 %v1170
    %1505 = vmatprep.subr.bf16.mxu0 %v1175
    %1506 = vmatpush1.bf16.msra.mxu0 %v1174
    %1507 = vmatprep.subr.bf16.mxu0 %v1179
    %1508 = vmatpush1.bf16.msra.mxu0 %v1178
    %1509 = vmatprep.subr.bf16.mxu0 %v1183
    %1510 = vmatpush1.bf16.msra.mxu0 %v1182
    %1511 = vmatprep.subr.bf16.mxu0 %v1187
    %1512 = vmatpush1.bf16.msra.mxu0 %v1186
    %1513 = vmatprep.subr.bf16.mxu0 %v1191
    %1514 = vmatpush1.bf16.msra.mxu0 %v1190
    %1515 = vmatprep.subr.bf16.mxu0 %v1195
    %1516 = vmatpush1.bf16.msra.mxu0 %v1194
    %1517 = vmatprep.subr.bf16.mxu0 %v1199
    %1518 = vmatpush1.bf16.msra.mxu0 %v1198
    %1519 = vmatprep.subr.bf16.mxu0 0
    %1520 = vmatpush1.bf16.msra.mxu0 0
    %1521 = vmatprep.subr.bf16.mxu0 0
    %1522 = vmatpush1.bf16.msra.mxu0 0
    %1523 = vmatprep.subr.bf16.mxu0 0
    %1524 = vmatpush1.bf16.msra.mxu0 0
    %1525 = vmatprep.subr.bf16.mxu0 0
    %1526 = vmatpush1.bf16.msra.mxu0 0
    %1527 = vmatprep.subr.bf16.mxu0 0
    %1528 = vmatpush1.bf16.msra.mxu0 0
    %1529 = vmatprep.subr.bf16.mxu0 0
    %1530 = vmatpush1.bf16.msra.mxu0 0
    %1531 = vmatprep.subr.bf16.mxu0 0
    %1532 = vmatpush1.bf16.msra.mxu0 0
    %1533 = vmatprep.subr.bf16.mxu0 0
    %1534 = vmatpush1.bf16.msra.mxu0 0
    %1535 = vmatprep.mubr.bf16.mxu0 0
    %1536 = vmatmul.mubr.bf16.gmra.mrb[0].mxu0 %v1342
    %v1537 = vpop.f32.mrb[0].mxu0
    %v1538 = vadd.f32 0.0, %v1537
    %v1539 = vpop.f32.mrb[0].mxu0
    %v1540 = vadd.f32 0.0, %v1539
    %v1541 = vpop.f32.mrb[0].mxu0
    %v1542 = vpop.f32.mrb[0].mxu0
    %1543 = vdwg.mxu0
    %v1544 = vadd.f32 %v1347, %v1497
    %v1545 = vadd.f32 %v1348, %v1499
    %v1546 = vadd.f32 %v1349, %v1538
    %v1547 = vadd.f32 %v1350, %v1540
    %v1548 = vxor.u32 %v1544, 2147483648
    %v1549 = vmul.f32 %v1548, 1.442695
    %v1550 = vpow.pop %v1549
    %v1551 = vadd.f32 %v1550, 1.0
    %v1552 = vrcp.pop %v1551
    %v1553 = vmul.f32 1.0, %v1552
    %v1554 = vxor.u32 %v1545, 2147483648
    %v1555 = vmul.f32 %v1554, 1.442695
    %v1556 = vpow.pop %v1555
    %v1557 = vadd.f32 %v1556, 1.0
    %v1558 = vrcp.pop %v1557
    %v1559 = vmul.f32 1.0, %v1558
    %v1560 = vtanh.pop %v1546
    %v1561 = vxor.u32 %v1547, 2147483648
    %v1562 = vmul.f32 %v1561, 1.442695
    %v1563 = vpow.pop %v1562
    %v1564 = vadd.f32 %v1563, 1.0
    %v1565 = vrcp.pop %v1564
    %v1566 = vmul.f32 1.0, %v1565
    %v1567 = vmul.f32 %v1559, %v1339
    %v1568 = vmul.f32 %v1553, %v1560
    %v1569 = vadd.f32 %v1567, %v1568
    %v1570 = vtanh.pop %v1569
    %v1571 = vmul.f32 %v1566, %v1570
    %v1572 = vpack.c.bf16 %v1571, %v1571
    %v1573 = vld [vmem:[#allocation2 + $0x40] sm:$0xff]
    %v1574 = vld [vmem:[#allocation2 + $0x48] sm:$0xff]
    %v1575 = vld [vmem:[#allocation2 + $0x50] sm:$0xff]
    %v1576 = vld [vmem:[#allocation2 + $0x58] sm:$0xff]
    %v1577 = vld [vmem:[#allocation3 + $0xa0] sm:$0xff]
    %v1578 = vld [vmem:[#allocation3 + $0xa8] sm:$0xff]
    %v1579 = vld [vmem:[#allocation3 + $0xb0] sm:$0xff]
    %v1580 = vld [vmem:[#allocation3 + $0xb8] sm:$0xff]
    %1581 = vmatprep.subr.bf16.mxu0 %v866
    %1582 = vmatpush1.bf16.msra.mxu0 %v865
    %1583 = vmatprep.subr.bf16.mxu0 %v870
    %1584 = vmatpush1.bf16.msra.mxu0 %v869
    %1585 = vmatprep.subr.bf16.mxu0 %v874
    %1586 = vmatpush1.bf16.msra.mxu0 %v873
    %1587 = vmatprep.subr.bf16.mxu0 %v878
    %1588 = vmatpush1.bf16.msra.mxu0 %v877
    %1589 = vmatprep.subr.bf16.mxu0 %v882
    %1590 = vmatpush1.bf16.msra.mxu0 %v881
    %1591 = vmatprep.subr.bf16.mxu0 %v886
    %1592 = vmatpush1.bf16.msra.mxu0 %v885
    %1593 = vmatprep.subr.bf16.mxu0 %v890
    %1594 = vmatpush1.bf16.msra.mxu0 %v889
    %1595 = vmatprep.subr.bf16.mxu0 %v894
    %1596 = vmatpush1.bf16.msra.mxu0 %v893
    %1597 = vmatprep.subr.bf16.mxu0 0
    %1598 = vmatpush1.bf16.msra.mxu0 0
    %1599 = vmatprep.subr.bf16.mxu0 0
    %1600 = vmatpush1.bf16.msra.mxu0 0
    %1601 = vmatprep.subr.bf16.mxu0 0
    %1602 = vmatpush1.bf16.msra.mxu0 0
    %1603 = vmatprep.subr.bf16.mxu0 0
    %1604 = vmatpush1.bf16.msra.mxu0 0
    %1605 = vmatprep.subr.bf16.mxu0 0
    %1606 = vmatpush1.bf16.msra.mxu0 0
    %1607 = vmatprep.subr.bf16.mxu0 0
    %1608 = vmatpush1.bf16.msra.mxu0 0
    %1609 = vmatprep.subr.bf16.mxu0 0
    %1610 = vmatpush1.bf16.msra.mxu0 0
    %1611 = vmatprep.subr.bf16.mxu0 0
    %1612 = vmatpush1.bf16.msra.mxu0 0
    %1613 = vmatprep.mubr.bf16.mxu0 0
    %1614 = vmatmul.mubr.bf16.gmra.mrb[0].mxu0 %v1461
    %v1615 = vpop.f32.mrb[0].mxu0
    %v1616 = vadd.f32 0.0, %v1615
    %v1617 = vpop.f32.mrb[0].mxu0
    %v1618 = vadd.f32 0.0, %v1617
    %v1619 = vpop.f32.mrb[0].mxu0
    %v1620 = vpop.f32.mrb[0].mxu0
    %1621 = vdwg.mxu0
    %1622 = vmatprep.subr.bf16.mxu0 %v868
    %1623 = vmatpush1.bf16.msra.mxu0 %v867
    %1624 = vmatprep.subr.bf16.mxu0 %v872
    %1625 = vmatpush1.bf16.msra.mxu0 %v871
    %1626 = vmatprep.subr.bf16.mxu0 %v876
    %1627 = vmatpush1.bf16.msra.mxu0 %v875
    %1628 = vmatprep.subr.bf16.mxu0 %v880
    %1629 = vmatpush1.bf16.msra.mxu0 %v879
    %1630 = vmatprep.subr.bf16.mxu0 %v884
    %1631 = vmatpush1.bf16.msra.mxu0 %v883
    %1632 = vmatprep.subr.bf16.mxu0 %v888
    %1633 = vmatpush1.bf16.msra.mxu0 %v887
    %1634 = vmatprep.subr.bf16.mxu0 %v892
    %1635 = vmatpush1.bf16.msra.mxu0 %v891
    %1636 = vmatprep.subr.bf16.mxu0 %v896
    %1637 = vmatpush1.bf16.msra.mxu0 %v895
    %1638 = vmatprep.subr.bf16.mxu0 0
    %1639 = vmatpush1.bf16.msra.mxu0 0
    %1640 = vmatprep.subr.bf16.mxu0 0
    %1641 = vmatpush1.bf16.msra.mxu0 0
    %1642 = vmatprep.subr.bf16.mxu0 0
    %1643 = vmatpush1.bf16.msra.mxu0 0
    %1644 = vmatprep.subr.bf16.mxu0 0
    %1645 = vmatpush1.bf16.msra.mxu0 0
    %1646 = vmatprep.subr.bf16.mxu0 0
    %1647 = vmatpush1.bf16.msra.mxu0 0
    %1648 = vmatprep.subr.bf16.mxu0 0
    %1649 = vmatpush1.bf16.msra.mxu0 0
    %1650 = vmatprep.subr.bf16.mxu0 0
    %1651 = vmatpush1.bf16.msra.mxu0 0
    %1652 = vmatprep.subr.bf16.mxu0 0
    %1653 = vmatpush1.bf16.msra.mxu0 0
    %1654 = vmatprep.mubr.bf16.mxu0 0
    %1655 = vmatmul.mubr.bf16.gmra.mrb[0].mxu0 %v1461
    %v1656 = vpop.f32.mrb[0].mxu0
    %v1657 = vadd.f32 0.0, %v1656
    %v1658 = vpop.f32.mrb[0].mxu0
    %v1659 = vadd.f32 0.0, %v1658
    %v1660 = vpop.f32.mrb[0].mxu0
    %v1661 = vpop.f32.mrb[0].mxu0
    %1662 = vdwg.mxu0
    %v1663 = vadd.f32 %v1573, %v1616
    %v1664 = vadd.f32 %v1574, %v1618
    %v1665 = vadd.f32 %v1575, %v1657
    %v1666 = vadd.f32 %v1576, %v1659
    %v1667 = vxor.u32 %v1663, 2147483648
    %v1668 = vmul.f32 %v1667, 1.442695
    %v1669 = vpow.pop %v1668
    %v1670 = vadd.f32 %v1669, 1.0
    %v1671 = vrcp.pop %v1670
    %v1672 = vmul.f32 1.0, %v1671
    %v1673 = vxor.u32 %v1664, 2147483648
    %v1674 = vmul.f32 %v1673, 1.442695
    %v1675 = vpow.pop %v1674
    %v1676 = vadd.f32 %v1675, 1.0
    %v1677 = vrcp.pop %v1676
    %v1678 = vmul.f32 1.0, %v1677
    %v1679 = vtanh.pop %v1665
    %v1680 = vxor.u32 %v1666, 2147483648
    %v1681 = vmul.f32 %v1680, 1.442695
    %v1682 = vpow.pop %v1681
    %v1683 = vadd.f32 %v1682, 1.0
    %v1684 = vrcp.pop %v1683
    %v1685 = vmul.f32 1.0, %v1684
    %v1686 = vmul.f32 %v1678, %v1458
    %v1687 = vmul.f32 %v1672, %v1679
    %v1688 = vadd.f32 %v1686, %v1687
    %v1689 = vtanh.pop %v1688
    %v1690 = vmul.f32 %v1685, %v1689
    %v1691 = vpack.c.bf16 %v1690, %v1690
    %1692 = vmatprep.subr.bf16.mxu0 %v1169
    %1693 = vmatpush1.bf16.msra.mxu0 %v1168
    %1694 = vmatprep.subr.bf16.mxu0 %v1173
    %1695 = vmatpush1.bf16.msra.mxu0 %v1172
    %1696 = vmatprep.subr.bf16.mxu0 %v1177
    %1697 = vmatpush1.bf16.msra.mxu0 %v1176
    %1698 = vmatprep.subr.bf16.mxu0 %v1181
    %1699 = vmatpush1.bf16.msra.mxu0 %v1180
    %1700 = vmatprep.subr.bf16.mxu0 %v1185
    %1701 = vmatpush1.bf16.msra.mxu0 %v1184
    %1702 = vmatprep.subr.bf16.mxu0 %v1189
    %1703 = vmatpush1.bf16.msra.mxu0 %v1188
    %1704 = vmatprep.subr.bf16.mxu0 %v1193
    %1705 = vmatpush1.bf16.msra.mxu0 %v1192
    %1706 = vmatprep.subr.bf16.mxu0 %v1197
    %1707 = vmatpush1.bf16.msra.mxu0 %v1196
    %1708 = vmatprep.subr.bf16.mxu0 0
    %1709 = vmatpush1.bf16.msra.mxu0 0
    %1710 = vmatprep.subr.bf16.mxu0 0
    %1711 = vmatpush1.bf16.msra.mxu0 0
    %1712 = vmatprep.subr.bf16.mxu0 0
    %1713 = vmatpush1.bf16.msra.mxu0 0
    %1714 = vmatprep.subr.bf16.mxu0 0
    %1715 = vmatpush1.bf16.msra.mxu0 0
    %1716 = vmatprep.subr.bf16.mxu0 0
    %1717 = vmatpush1.bf16.msra.mxu0 0
    %1718 = vmatprep.subr.bf16.mxu0 0
    %1719 = vmatpush1.bf16.msra.mxu0 0
    %1720 = vmatprep.subr.bf16.mxu0 0
    %1721 = vmatpush1.bf16.msra.mxu0 0
    %1722 = vmatprep.subr.bf16.mxu0 0
    %1723 = vmatpush1.bf16.msra.mxu0 0
    %1724 = vmatprep.mubr.bf16.mxu0 0
    %1725 = vmatmul.mubr.bf16.gmra.mrb[0].mxu0 %v1572
    %v1726 = vpop.f32.mrb[0].mxu0
    %v1727 = vadd.f32 0.0, %v1726
    %v1728 = vpop.f32.mrb[0].mxu0
    %v1729 = vadd.f32 0.0, %v1728
    %v1730 = vpop.f32.mrb[0].mxu0
    %v1731 = vpop.f32.mrb[0].mxu0
    %1732 = vdwg.mxu0
    %1733 = vmatprep.subr.bf16.mxu0 %v1171
    %1734 = vmatpush1.bf16.msra.mxu0 %v1170
    %1735 = vmatprep.subr.bf16.mxu0 %v1175
    %1736 = vmatpush1.bf16.msra.mxu0 %v1174
    %1737 = vmatprep.subr.bf16.mxu0 %v1179
    %1738 = vmatpush1.bf16.msra.mxu0 %v1178
    %1739 = vmatprep.subr.bf16.mxu0 %v1183
    %1740 = vmatpush1.bf16.msra.mxu0 %v1182
    %1741 = vmatprep.subr.bf16.mxu0 %v1187
    %1742 = vmatpush1.bf16.msra.mxu0 %v1186
    %1743 = vmatprep.subr.bf16.mxu0 %v1191
    %1744 = vmatpush1.bf16.msra.mxu0 %v1190
    %1745 = vmatprep.subr.bf16.mxu0 %v1195
    %1746 = vmatpush1.bf16.msra.mxu0 %v1194
    %1747 = vmatprep.subr.bf16.mxu0 %v1199
    %1748 = vmatpush1.bf16.msra.mxu0 %v1198
    %1749 = vmatprep.subr.bf16.mxu0 0
    %1750 = vmatpush1.bf16.msra.mxu0 0
    %1751 = vmatprep.subr.bf16.mxu0 0
    %1752 = vmatpush1.bf16.msra.mxu0 0
    %1753 = vmatprep.subr.bf16.mxu0 0
    %1754 = vmatpush1.bf16.msra.mxu0 0
    %1755 = vmatprep.subr.bf16.mxu0 0
    %1756 = vmatpush1.bf16.msra.mxu0 0
    %1757 = vmatprep.subr.bf16.mxu0 0
    %1758 = vmatpush1.bf16.msra.mxu0 0
    %1759 = vmatprep.subr.bf16.mxu0 0
    %1760 = vmatpush1.bf16.msra.mxu0 0
    %1761 = vmatprep.subr.bf16.mxu0 0
    %1762 = vmatpush1.bf16.msra.mxu0 0
    %1763 = vmatprep.subr.bf16.mxu0 0
    %1764 = vmatpush1.bf16.msra.mxu0 0
    %1765 = vmatprep.mubr.bf16.mxu0 0
    %1766 = vmatmul.mubr.bf16.gmra.mrb[0].mxu0 %v1572
    %v1767 = vpop.f32.mrb[0].mxu0
    %v1768 = vadd.f32 0.0, %v1767
    %v1769 = vpop.f32.mrb[0].mxu0
    %v1770 = vadd.f32 0.0, %v1769
    %v1771 = vpop.f32.mrb[0].mxu0
    %v1772 = vpop.f32.mrb[0].mxu0
    %1773 = vdwg.mxu0
    %v1774 = vadd.f32 %v1577, %v1727
    %v1775 = vadd.f32 %v1578, %v1729
    %v1776 = vadd.f32 %v1579, %v1768
    %v1777 = vadd.f32 %v1580, %v1770
    %v1778 = vxor.u32 %v1774, 2147483648
    %v1779 = vmul.f32 %v1778, 1.442695
    %v1780 = vpow.pop %v1779
    %v1781 = vadd.f32 %v1780, 1.0
    %v1782 = vrcp.pop %v1781
    %v1783 = vmul.f32 1.0, %v1782
    %v1784 = vxor.u32 %v1775, 2147483648
    %v1785 = vmul.f32 %v1784, 1.442695
    %v1786 = vpow.pop %v1785
    %v1787 = vadd.f32 %v1786, 1.0
    %v1788 = vrcp.pop %v1787
    %v1789 = vmul.f32 1.0, %v1788
    %v1790 = vtanh.pop %v1776
    %v1791 = vxor.u32 %v1777, 2147483648
    %v1792 = vmul.f32 %v1791, 1.442695
    %v1793 = vpow.pop %v1792
    %v1794 = vadd.f32 %v1793, 1.0
    %v1795 = vrcp.pop %v1794
    %v1796 = vmul.f32 1.0, %v1795
    %v1797 = vmul.f32 %v1789, %v1569
    %v1798 = vmul.f32 %v1783, %v1790
    %v1799 = vadd.f32 %v1797, %v1798
    %v1800 = vtanh.pop %v1799
    %v1801 = vmul.f32 %v1796, %v1800
    %v1802 = vpack.c.bf16 %v1801, %v1801
    %v1803 = vld [vmem:[#allocation2 + $0x60] sm:$0xff]
    %v1804 = vld [vmem:[#allocation2 + $0x68] sm:$0xff]
    %v1805 = vld [vmem:[#allocation2 + $0x70] sm:$0xff]
    %v1806 = vld [vmem:[#allocation2 + $0x78] sm:$0xff]
    %v1807 = vld [vmem:[#allocation3 + $0x80] sm:$0xff]
    %v1808 = vld [vmem:[#allocation3 + $0x88] sm:$0xff]
    %v1809 = vld [vmem:[#allocation3 + $0x90] sm:$0xff]
    %v1810 = vld [vmem:[#allocation3 + $0x98] sm:$0xff]
    %1811 = vmatprep.subr.bf16.mxu0 %v866
    %1812 = vmatpush1.bf16.msra.mxu0 %v865
    %1813 = vmatprep.subr.bf16.mxu0 %v870
    %1814 = vmatpush1.bf16.msra.mxu0 %v869
    %1815 = vmatprep.subr.bf16.mxu0 %v874
    %1816 = vmatpush1.bf16.msra.mxu0 %v873
    %1817 = vmatprep.subr.bf16.mxu0 %v878
    %1818 = vmatpush1.bf16.msra.mxu0 %v877
    %1819 = vmatprep.subr.bf16.mxu0 %v882
    %1820 = vmatpush1.bf16.msra.mxu0 %v881
    %1821 = vmatprep.subr.bf16.mxu0 %v886
    %1822 = vmatpush1.bf16.msra.mxu0 %v885
    %1823 = vmatprep.subr.bf16.mxu0 %v890
    %1824 = vmatpush1.bf16.msra.mxu0 %v889
    %1825 = vmatprep.subr.bf16.mxu0 %v894
    %1826 = vmatpush1.bf16.msra.mxu0 %v893
    %1827 = vmatprep.subr.bf16.mxu0 0
    %1828 = vmatpush1.bf16.msra.mxu0 0
    %1829 = vmatprep.subr.bf16.mxu0 0
    %1830 = vmatpush1.bf16.msra.mxu0 0
    %1831 = vmatprep.subr.bf16.mxu0 0
    %1832 = vmatpush1.bf16.msra.mxu0 0
    %1833 = vmatprep.subr.bf16.mxu0 0
    %1834 = vmatpush1.bf16.msra.mxu0 0
    %1835 = vmatprep.subr.bf16.mxu0 0
    %1836 = vmatpush1.bf16.msra.mxu0 0
    %1837 = vmatprep.subr.bf16.mxu0 0
    %1838 = vmatpush1.bf16.msra.mxu0 0
    %1839 = vmatprep.subr.bf16.mxu0 0
    %1840 = vmatpush1.bf16.msra.mxu0 0
    %1841 = vmatprep.subr.bf16.mxu0 0
    %1842 = vmatpush1.bf16.msra.mxu0 0
    %1843 = vmatprep.mubr.bf16.mxu0 0
    %1844 = vmatmul.mubr.bf16.gmra.mrb[0].mxu0 %v1691
    %v1845 = vpop.f32.mrb[0].mxu0
    %v1846 = vadd.f32 0.0, %v1845
    %v1847 = vpop.f32.mrb[0].mxu0
    %v1848 = vadd.f32 0.0, %v1847
    %v1849 = vpop.f32.mrb[0].mxu0
    %v1850 = vpop.f32.mrb[0].mxu0
    %1851 = vdwg.mxu0
    %1852 = vmatprep.subr.bf16.mxu0 %v868
    %1853 = vmatpush1.bf16.msra.mxu0 %v867
    %1854 = vmatprep.subr.bf16.mxu0 %v872
    %1855 = vmatpush1.bf16.msra.mxu0 %v871
    %1856 = vmatprep.subr.bf16.mxu0 %v876
    %1857 = vmatpush1.bf16.msra.mxu0 %v875
    %1858 = vmatprep.subr.bf16.mxu0 %v880
    %1859 = vmatpush1.bf16.msra.mxu0 %v879
    %1860 = vmatprep.subr.bf16.mxu0 %v884
    %1861 = vmatpush1.bf16.msra.mxu0 %v883
    %1862 = vmatprep.subr.bf16.mxu0 %v888
    %1863 = vmatpush1.bf16.msra.mxu0 %v887
    %1864 = vmatprep.subr.bf16.mxu0 %v892
    %1865 = vmatpush1.bf16.msra.mxu0 %v891
    %1866 = vmatprep.subr.bf16.mxu0 %v896
    %1867 = vmatpush1.bf16.msra.mxu0 %v895
    %1868 = vmatprep.subr.bf16.mxu0 0
    %1869 = vmatpush1.bf16.msra.mxu0 0
    %1870 = vmatprep.subr.bf16.mxu0 0
    %1871 = vmatpush1.bf16.msra.mxu0 0
    %1872 = vmatprep.subr.bf16.mxu0 0
    %1873 = vmatpush1.bf16.msra.mxu0 0
    %1874 = vmatprep.subr.bf16.mxu0 0
    %1875 = vmatpush1.bf16.msra.mxu0 0
    %1876 = vmatprep.subr.bf16.mxu0 0
    %1877 = vmatpush1.bf16.msra.mxu0 0
    %1878 = vmatprep.subr.bf16.mxu0 0
    %1879 = vmatpush1.bf16.msra.mxu0 0
    %1880 = vmatprep.subr.bf16.mxu0 0
    %1881 = vmatpush1.bf16.msra.mxu0 0
    %1882 = vmatprep.subr.bf16.mxu0 0
    %1883 = vmatpush1.bf16.msra.mxu0 0
    %1884 = vmatprep.mubr.bf16.mxu0 0
    %1885 = vmatmul.mubr.bf16.gmra.mrb[0].mxu0 %v1691
    %v1886 = vpop.f32.mrb[0].mxu0
    %v1887 = vadd.f32 0.0, %v1886
    %v1888 = vpop.f32.mrb[0].mxu0
    %v1889 = vadd.f32 0.0, %v1888
    %v1890 = vpop.f32.mrb[0].mxu0
    %v1891 = vpop.f32.mrb[0].mxu0
    %1892 = vdwg.mxu0
    %v1893 = vadd.f32 %v1803, %v1846
    %v1894 = vadd.f32 %v1804, %v1848
    %v1895 = vadd.f32 %v1805, %v1887
    %v1896 = vadd.f32 %v1806, %v1889
    %v1897 = vxor.u32 %v1893, 2147483648
    %v1898 = vmul.f32 %v1897, 1.442695
    %v1899 = vpow.pop %v1898
    %v1900 = vadd.f32 %v1899, 1.0
    %v1901 = vrcp.pop %v1900
    %v1902 = vmul.f32 1.0, %v1901
    %v1903 = vxor.u32 %v1894, 2147483648
    %v1904 = vmul.f32 %v1903, 1.442695
    %v1905 = vpow.pop %v1904
    %v1906 = vadd.f32 %v1905, 1.0
    %v1907 = vrcp.pop %v1906
    %v1908 = vmul.f32 1.0, %v1907
    %v1909 = vtanh.pop %v1895
    %v1910 = vxor.u32 %v1896, 2147483648
    %v1911 = vmul.f32 %v1910, 1.442695
    %v1912 = vpow.pop %v1911
    %v1913 = vadd.f32 %v1912, 1.0
    %v1914 = vrcp.pop %v1913
    %v1915 = vmul.f32 1.0, %v1914
    %v1916 = vmul.f32 %v1908, %v1688
    %v1917 = vmul.f32 %v1902, %v1909
    %v1918 = vadd.f32 %v1916, %v1917
    %v1919 = vtanh.pop %v1918
    %v1920 = vmul.f32 %v1915, %v1919
    %v1921 = vpack.c.bf16 %v1920, %v1920
    %1922 = vmatprep.subr.bf16.mxu0 %v1169
    %1923 = vmatpush1.bf16.msra.mxu0 %v1168
    %1924 = vmatprep.subr.bf16.mxu0 %v1173
    %1925 = vmatpush1.bf16.msra.mxu0 %v1172
    %1926 = vmatprep.subr.bf16.mxu0 %v1177
    %1927 = vmatpush1.bf16.msra.mxu0 %v1176
    %1928 = vmatprep.subr.bf16.mxu0 %v1181
    %1929 = vmatpush1.bf16.msra.mxu0 %v1180
    %1930 = vmatprep.subr.bf16.mxu0 %v1185
    %1931 = vmatpush1.bf16.msra.mxu0 %v1184
    %1932 = vmatprep.subr.bf16.mxu0 %v1189
    %1933 = vmatpush1.bf16.msra.mxu0 %v1188
    %1934 = vmatprep.subr.bf16.mxu0 %v1193
    %1935 = vmatpush1.bf16.msra.mxu0 %v1192
    %1936 = vmatprep.subr.bf16.mxu0 %v1197
    %1937 = vmatpush1.bf16.msra.mxu0 %v1196
    %1938 = vmatprep.subr.bf16.mxu0 0
    %1939 = vmatpush1.bf16.msra.mxu0 0
    %1940 = vmatprep.subr.bf16.mxu0 0
    %1941 = vmatpush1.bf16.msra.mxu0 0
    %1942 = vmatprep.subr.bf16.mxu0 0
    %1943 = vmatpush1.bf16.msra.mxu0 0
    %1944 = vmatprep.subr.bf16.mxu0 0
    %1945 = vmatpush1.bf16.msra.mxu0 0
    %1946 = vmatprep.subr.bf16.mxu0 0
    %1947 = vmatpush1.bf16.msra.mxu0 0
    %1948 = vmatprep.subr.bf16.mxu0 0
    %1949 = vmatpush1.bf16.msra.mxu0 0
    %1950 = vmatprep.subr.bf16.mxu0 0
    %1951 = vmatpush1.bf16.msra.mxu0 0
    %1952 = vmatprep.subr.bf16.mxu0 0
    %1953 = vmatpush1.bf16.msra.mxu0 0
    %1954 = vmatprep.mubr.bf16.mxu0 0
    %1955 = vmatmul.mubr.bf16.gmra.mrb[0].mxu0 %v1802
    %v1956 = vpop.f32.mrb[0].mxu0
    %v1957 = vadd.f32 0.0, %v1956
    %v1958 = vpop.f32.mrb[0].mxu0
    %v1959 = vadd.f32 0.0, %v1958
    %v1960 = vpop.f32.mrb[0].mxu0
    %v1961 = vpop.f32.mrb[0].mxu0
    %1962 = vdwg.mxu0
    %1963 = vmatprep.subr.bf16.mxu0 %v1171
    %1964 = vmatpush1.bf16.msra.mxu0 %v1170
    %1965 = vmatprep.subr.bf16.mxu0 %v1175
    %1966 = vmatpush1.bf16.msra.mxu0 %v1174
    %1967 = vmatprep.subr.bf16.mxu0 %v1179
    %1968 = vmatpush1.bf16.msra.mxu0 %v1178
    %1969 = vmatprep.subr.bf16.mxu0 %v1183
    %1970 = vmatpush1.bf16.msra.mxu0 %v1182
    %1971 = vmatprep.subr.bf16.mxu0 %v1187
    %1972 = vmatpush1.bf16.msra.mxu0 %v1186
    %1973 = vmatprep.subr.bf16.mxu0 %v1191
    %1974 = vmatpush1.bf16.msra.mxu0 %v1190
    %1975 = vmatprep.subr.bf16.mxu0 %v1195
    %1976 = vmatpush1.bf16.msra.mxu0 %v1194
    %1977 = vmatprep.subr.bf16.mxu0 %v1199
    %1978 = vmatpush1.bf16.msra.mxu0 %v1198
    %1979 = vmatprep.subr.bf16.mxu0 0
    %1980 = vmatpush1.bf16.msra.mxu0 0
    %1981 = vmatprep.subr.bf16.mxu0 0
    %1982 = vmatpush1.bf16.msra.mxu0 0
    %1983 = vmatprep.subr.bf16.mxu0 0
    %1984 = vmatpush1.bf16.msra.mxu0 0
    %1985 = vmatprep.subr.bf16.mxu0 0
    %1986 = vmatpush1.bf16.msra.mxu0 0
    %1987 = vmatprep.subr.bf16.mxu0 0
    %1988 = vmatpush1.bf16.msra.mxu0 0
    %1989 = vmatprep.subr.bf16.mxu0 0
    %1990 = vmatpush1.bf16.msra.mxu0 0
    %1991 = vmatprep.subr.bf16.mxu0 0
    %1992 = vmatpush1.bf16.msra.mxu0 0
    %1993 = vmatprep.subr.bf16.mxu0 0
    %1994 = vmatpush1.bf16.msra.mxu0 0
    %1995 = vmatprep.mubr.bf16.mxu0 0
    %1996 = vmatmul.mubr.bf16.gmra.mrb[0].mxu0 %v1802
    %v1997 = vpop.f32.mrb[0].mxu0
    %v1998 = vadd.f32 0.0, %v1997
    %v1999 = vpop.f32.mrb[0].mxu0
    %v2000 = vadd.f32 0.0, %v1999
    %v2001 = vpop.f32.mrb[0].mxu0
    %v2002 = vpop.f32.mrb[0].mxu0
    %2003 = vdwg.mxu0
    %v2004 = vadd.f32 %v1807, %v1957
    %v2005 = vadd.f32 %v1808, %v1959
    %v2006 = vadd.f32 %v1809, %v1998
    %v2007 = vadd.f32 %v1810, %v2000
    %v2008 = vxor.u32 %v2004, 2147483648
    %v2009 = vmul.f32 %v2008, 1.442695
    %v2010 = vpow.pop %v2009
    %v2011 = vadd.f32 %v2010, 1.0
    %v2012 = vrcp.pop %v2011
    %v2013 = vmul.f32 1.0, %v2012
    %v2014 = vxor.u32 %v2005, 2147483648
    %v2015 = vmul.f32 %v2014, 1.442695
    %v2016 = vpow.pop %v2015
    %v2017 = vadd.f32 %v2016, 1.0
    %v2018 = vrcp.pop %v2017
    %v2019 = vmul.f32 1.0, %v2018
    %v2020 = vtanh.pop %v2006
    %v2021 = vxor.u32 %v2007, 2147483648
    %v2022 = vmul.f32 %v2021, 1.442695
    %v2023 = vpow.pop %v2022
    %v2024 = vadd.f32 %v2023, 1.0
    %v2025 = vrcp.pop %v2024
    %v2026 = vmul.f32 1.0, %v2025
    %v2027 = vmul.f32 %v2019, %v1799
    %v2028 = vmul.f32 %v2013, %v2020
    %v2029 = vadd.f32 %v2027, %v2028
    %v2030 = vtanh.pop %v2029
    %v2031 = vmul.f32 %v2026, %v2030
    %v2032 = vpack.c.bf16 %v2031, %v2031
    %v2033 = vld [vmem:[#allocation2 + $0x80] sm:$0xff]
    %v2034 = vld [vmem:[#allocation2 + $0x88] sm:$0xff]
    %v2035 = vld [vmem:[#allocation2 + $0x90] sm:$0xff]
    %v2036 = vld [vmem:[#allocation2 + $0x98] sm:$0xff]
    %v2037 = vld [vmem:[#allocation3 + $0x60] sm:$0xff]
    %v2038 = vld [vmem:[#allocation3 + $0x68] sm:$0xff]
    %v2039 = vld [vmem:[#allocation3 + $0x70] sm:$0xff]
    %v2040 = vld [vmem:[#allocation3 + $0x78] sm:$0xff]
    %2041 = vmatprep.subr.bf16.mxu0 %v866
    %2042 = vmatpush1.bf16.msra.mxu0 %v865
    %2043 = vmatprep.subr.bf16.mxu0 %v870
    %2044 = vmatpush1.bf16.msra.mxu0 %v869
    %2045 = vmatprep.subr.bf16.mxu0 %v874
    %2046 = vmatpush1.bf16.msra.mxu0 %v873
    %2047 = vmatprep.subr.bf16.mxu0 %v878
    %2048 = vmatpush1.bf16.msra.mxu0 %v877
    %2049 = vmatprep.subr.bf16.mxu0 %v882
    %2050 = vmatpush1.bf16.msra.mxu0 %v881
    %2051 = vmatprep.subr.bf16.mxu0 %v886
    %2052 = vmatpush1.bf16.msra.mxu0 %v885
    %2053 = vmatprep.subr.bf16.mxu0 %v890
    %2054 = vmatpush1.bf16.msra.mxu0 %v889
    %2055 = vmatprep.subr.bf16.mxu0 %v894
    %2056 = vmatpush1.bf16.msra.mxu0 %v893
    %2057 = vmatprep.subr.bf16.mxu0 0
    %2058 = vmatpush1.bf16.msra.mxu0 0
    %2059 = vmatprep.subr.bf16.mxu0 0
    %2060 = vmatpush1.bf16.msra.mxu0 0
    %2061 = vmatprep.subr.bf16.mxu0 0
    %2062 = vmatpush1.bf16.msra.mxu0 0
    %2063 = vmatprep.subr.bf16.mxu0 0
    %2064 = vmatpush1.bf16.msra.mxu0 0
    %2065 = vmatprep.subr.bf16.mxu0 0
    %2066 = vmatpush1.bf16.msra.mxu0 0
    %2067 = vmatprep.subr.bf16.mxu0 0
    %2068 = vmatpush1.bf16.msra.mxu0 0
    %2069 = vmatprep.subr.bf16.mxu0 0
    %2070 = vmatpush1.bf16.msra.mxu0 0
    %2071 = vmatprep.subr.bf16.mxu0 0
    %2072 = vmatpush1.bf16.msra.mxu0 0
    %2073 = vmatprep.mubr.bf16.mxu0 0
    %2074 = vmatmul.mubr.bf16.gmra.mrb[0].mxu0 %v1921
    %v2075 = vpop.f32.mrb[0].mxu0
    %v2076 = vadd.f32 0.0, %v2075
    %v2077 = vpop.f32.mrb[0].mxu0
    %v2078 = vadd.f32 0.0, %v2077
    %v2079 = vpop.f32.mrb[0].mxu0
    %v2080 = vpop.f32.mrb[0].mxu0
    %2081 = vdwg.mxu0
    %2082 = vmatprep.subr.bf16.mxu0 %v868
    %2083 = vmatpush1.bf16.msra.mxu0 %v867
    %2084 = vmatprep.subr.bf16.mxu0 %v872
    %2085 = vmatpush1.bf16.msra.mxu0 %v871
    %2086 = vmatprep.subr.bf16.mxu0 %v876
    %2087 = vmatpush1.bf16.msra.mxu0 %v875
    %2088 = vmatprep.subr.bf16.mxu0 %v880
    %2089 = vmatpush1.bf16.msra.mxu0 %v879
    %2090 = vmatprep.subr.bf16.mxu0 %v884
    %2091 = vmatpush1.bf16.msra.mxu0 %v883
    %2092 = vmatprep.subr.bf16.mxu0 %v888
    %2093 = vmatpush1.bf16.msra.mxu0 %v887
    %2094 = vmatprep.subr.bf16.mxu0 %v892
    %2095 = vmatpush1.bf16.msra.mxu0 %v891
    %2096 = vmatprep.subr.bf16.mxu0 %v896
    %2097 = vmatpush1.bf16.msra.mxu0 %v895
    %2098 = vmatprep.subr.bf16.mxu0 0
    %2099 = vmatpush1.bf16.msra.mxu0 0
    %2100 = vmatprep.subr.bf16.mxu0 0
    %2101 = vmatpush1.bf16.msra.mxu0 0
    %2102 = vmatprep.subr.bf16.mxu0 0
    %2103 = vmatpush1.bf16.msra.mxu0 0
    %2104 = vmatprep.subr.bf16.mxu0 0
    %2105 = vmatpush1.bf16.msra.mxu0 0
    %2106 = vmatprep.subr.bf16.mxu0 0
    %2107 = vmatpush1.bf16.msra.mxu0 0
    %2108 = vmatprep.subr.bf16.mxu0 0
    %2109 = vmatpush1.bf16.msra.mxu0 0
    %2110 = vmatprep.subr.bf16.mxu0 0
    %2111 = vmatpush1.bf16.msra.mxu0 0
    %2112 = vmatprep.subr.bf16.mxu0 0
    %2113 = vmatpush1.bf16.msra.mxu0 0
    %2114 = vmatprep.mubr.bf16.mxu0 0
    %2115 = vmatmul.mubr.bf16.gmra.mrb[0].mxu0 %v1921
    %v2116 = vpop.f32.mrb[0].mxu0
    %v2117 = vadd.f32 0.0, %v2116
    %v2118 = vpop.f32.mrb[0].mxu0
    %v2119 = vadd.f32 0.0, %v2118
    %v2120 = vpop.f32.mrb[0].mxu0
    %v2121 = vpop.f32.mrb[0].mxu0
    %2122 = vdwg.mxu0
    %v2123 = vadd.f32 %v2033, %v2076
    %v2124 = vadd.f32 %v2034, %v2078
    %v2125 = vadd.f32 %v2035, %v2117
    %v2126 = vadd.f32 %v2036, %v2119
    %v2127 = vxor.u32 %v2123, 2147483648
    %v2128 = vmul.f32 %v2127, 1.442695
    %v2129 = vpow.pop %v2128
    %v2130 = vadd.f32 %v2129, 1.0
    %v2131 = vrcp.pop %v2130
    %v2132 = vmul.f32 1.0, %v2131
    %v2133 = vxor.u32 %v2124, 2147483648
    %v2134 = vmul.f32 %v2133, 1.442695
    %v2135 = vpow.pop %v2134
    %v2136 = vadd.f32 %v2135, 1.0
    %v2137 = vrcp.pop %v2136
    %v2138 = vmul.f32 1.0, %v2137
    %v2139 = vtanh.pop %v2125
    %v2140 = vxor.u32 %v2126, 2147483648
    %v2141 = vmul.f32 %v2140, 1.442695
    %v2142 = vpow.pop %v2141
    %v2143 = vadd.f32 %v2142, 1.0
    %v2144 = vrcp.pop %v2143
    %v2145 = vmul.f32 1.0, %v2144
    %v2146 = vmul.f32 %v2138, %v1918
    %v2147 = vmul.f32 %v2132, %v2139
    %v2148 = vadd.f32 %v2146, %v2147
    %v2149 = vtanh.pop %v2148
    %v2150 = vmul.f32 %v2145, %v2149
    %v2151 = vpack.c.bf16 %v2150, %v2150
    %2152 = vmatprep.subr.bf16.mxu0 %v1169
    %2153 = vmatpush1.bf16.msra.mxu0 %v1168
    %2154 = vmatprep.subr.bf16.mxu0 %v1173
    %2155 = vmatpush1.bf16.msra.mxu0 %v1172
    %2156 = vmatprep.subr.bf16.mxu0 %v1177
    %2157 = vmatpush1.bf16.msra.mxu0 %v1176
    %2158 = vmatprep.subr.bf16.mxu0 %v1181
    %2159 = vmatpush1.bf16.msra.mxu0 %v1180
    %2160 = vmatprep.subr.bf16.mxu0 %v1185
    %2161 = vmatpush1.bf16.msra.mxu0 %v1184
    %2162 = vmatprep.subr.bf16.mxu0 %v1189
    %2163 = vmatpush1.bf16.msra.mxu0 %v1188
    %2164 = vmatprep.subr.bf16.mxu0 %v1193
    %2165 = vmatpush1.bf16.msra.mxu0 %v1192
    %2166 = vmatprep.subr.bf16.mxu0 %v1197
    %2167 = vmatpush1.bf16.msra.mxu0 %v1196
    %2168 = vmatprep.subr.bf16.mxu0 0
    %2169 = vmatpush1.bf16.msra.mxu0 0
    %2170 = vmatprep.subr.bf16.mxu0 0
    %2171 = vmatpush1.bf16.msra.mxu0 0
    %2172 = vmatprep.subr.bf16.mxu0 0
    %2173 = vmatpush1.bf16.msra.mxu0 0
    %2174 = vmatprep.subr.bf16.mxu0 0
    %2175 = vmatpush1.bf16.msra.mxu0 0
    %2176 = vmatprep.subr.bf16.mxu0 0
    %2177 = vmatpush1.bf16.msra.mxu0 0
    %2178 = vmatprep.subr.bf16.mxu0 0
    %2179 = vmatpush1.bf16.msra.mxu0 0
    %2180 = vmatprep.subr.bf16.mxu0 0
    %2181 = vmatpush1.bf16.msra.mxu0 0
    %2182 = vmatprep.subr.bf16.mxu0 0
    %2183 = vmatpush1.bf16.msra.mxu0 0
    %2184 = vmatprep.mubr.bf16.mxu0 0
    %2185 = vmatmul.mubr.bf16.gmra.mrb[0].mxu0 %v2032
    %v2186 = vpop.f32.mrb[0].mxu0
    %v2187 = vadd.f32 0.0, %v2186
    %v2188 = vpop.f32.mrb[0].mxu0
    %v2189 = vadd.f32 0.0, %v2188
    %v2190 = vpop.f32.mrb[0].mxu0
    %v2191 = vpop.f32.mrb[0].mxu0
    %2192 = vdwg.mxu0
    %2193 = vmatprep.subr.bf16.mxu0 %v1171
    %2194 = vmatpush1.bf16.msra.mxu0 %v1170
    %2195 = vmatprep.subr.bf16.mxu0 %v1175
    %2196 = vmatpush1.bf16.msra.mxu0 %v1174
    %2197 = vmatprep.subr.bf16.mxu0 %v1179
    %2198 = vmatpush1.bf16.msra.mxu0 %v1178
    %2199 = vmatprep.subr.bf16.mxu0 %v1183
    %2200 = vmatpush1.bf16.msra.mxu0 %v1182
    %2201 = vmatprep.subr.bf16.mxu0 %v1187
    %2202 = vmatpush1.bf16.msra.mxu0 %v1186
    %2203 = vmatprep.subr.bf16.mxu0 %v1191
    %2204 = vmatpush1.bf16.msra.mxu0 %v1190
    %2205 = vmatprep.subr.bf16.mxu0 %v1195
    %2206 = vmatpush1.bf16.msra.mxu0 %v1194
    %2207 = vmatprep.subr.bf16.mxu0 %v1199
    %2208 = vmatpush1.bf16.msra.mxu0 %v1198
    %2209 = vmatprep.subr.bf16.mxu0 0
    %2210 = vmatpush1.bf16.msra.mxu0 0
    %2211 = vmatprep.subr.bf16.mxu0 0
    %2212 = vmatpush1.bf16.msra.mxu0 0
    %2213 = vmatprep.subr.bf16.mxu0 0
    %2214 = vmatpush1.bf16.msra.mxu0 0
    %2215 = vmatprep.subr.bf16.mxu0 0
    %2216 = vmatpush1.bf16.msra.mxu0 0
    %2217 = vmatprep.subr.bf16.mxu0 0
    %2218 = vmatpush1.bf16.msra.mxu0 0
    %2219 = vmatprep.subr.bf16.mxu0 0
    %2220 = vmatpush1.bf16.msra.mxu0 0
    %2221 = vmatprep.subr.bf16.mxu0 0
    %2222 = vmatpush1.bf16.msra.mxu0 0
    %2223 = vmatprep.subr.bf16.mxu0 0
    %2224 = vmatpush1.bf16.msra.mxu0 0
    %2225 = vmatprep.mubr.bf16.mxu0 0
    %2226 = vmatmul.mubr.bf16.gmra.mrb[0].mxu0 %v2032
    %v2227 = vpop.f32.mrb[0].mxu0
    %v2228 = vadd.f32 0.0, %v2227
    %v2229 = vpop.f32.mrb[0].mxu0
    %v2230 = vadd.f32 0.0, %v2229
    %v2231 = vpop.f32.mrb[0].mxu0
    %v2232 = vpop.f32.mrb[0].mxu0
    %2233 = vdwg.mxu0
    %v2234 = vadd.f32 %v2037, %v2187
    %v2235 = vadd.f32 %v2038, %v2189
    %v2236 = vadd.f32 %v2039, %v2228
    %v2237 = vadd.f32 %v2040, %v2230
    %v2238 = vxor.u32 %v2234, 2147483648
    %v2239 = vmul.f32 %v2238, 1.442695
    %v2240 = vpow.pop %v2239
    %v2241 = vadd.f32 %v2240, 1.0
    %v2242 = vrcp.pop %v2241
    %v2243 = vmul.f32 1.0, %v2242
    %v2244 = vxor.u32 %v2235, 2147483648
    %v2245 = vmul.f32 %v2244, 1.442695
    %v2246 = vpow.pop %v2245
    %v2247 = vadd.f32 %v2246, 1.0
    %v2248 = vrcp.pop %v2247
    %v2249 = vmul.f32 1.0, %v2248
    %v2250 = vtanh.pop %v2236
    %v2251 = vxor.u32 %v2237, 2147483648
    %v2252 = vmul.f32 %v2251, 1.442695
    %v2253 = vpow.pop %v2252
    %v2254 = vadd.f32 %v2253, 1.0
    %v2255 = vrcp.pop %v2254
    %v2256 = vmul.f32 1.0, %v2255
    %v2257 = vmul.f32 %v2249, %v2029
    %v2258 = vmul.f32 %v2243, %v2250
    %v2259 = vadd.f32 %v2257, %v2258
    %v2260 = vtanh.pop %v2259
    %v2261 = vmul.f32 %v2256, %v2260
    %v2262 = vpack.c.bf16 %v2261, %v2261
    %v2263 = vld [vmem:[#allocation2 + $0xa0] sm:$0xff]
    %v2264 = vld [vmem:[#allocation2 + $0xa8] sm:$0xff]
    %v2265 = vld [vmem:[#allocation2 + $0xb0] sm:$0xff]
    %v2266 = vld [vmem:[#allocation2 + $0xb8] sm:$0xff]
    %v2267 = vld [vmem:[#allocation3 + $0x40] sm:$0xff]
    %v2268 = vld [vmem:[#allocation3 + $0x48] sm:$0xff]
    %v2269 = vld [vmem:[#allocation3 + $0x50] sm:$0xff]
    %v2270 = vld [vmem:[#allocation3 + $0x58] sm:$0xff]
    %2271 = vmatprep.subr.bf16.mxu0 %v866
    %2272 = vmatpush1.bf16.msra.mxu0 %v865
    %2273 = vmatprep.subr.bf16.mxu0 %v870
    %2274 = vmatpush1.bf16.msra.mxu0 %v869
    %2275 = vmatprep.subr.bf16.mxu0 %v874
    %2276 = vmatpush1.bf16.msra.mxu0 %v873
    %2277 = vmatprep.subr.bf16.mxu0 %v878
    %2278 = vmatpush1.bf16.msra.mxu0 %v877
    %2279 = vmatprep.subr.bf16.mxu0 %v882
    %2280 = vmatpush1.bf16.msra.mxu0 %v881
    %2281 = vmatprep.subr.bf16.mxu0 %v886
    %2282 = vmatpush1.bf16.msra.mxu0 %v885
    %2283 = vmatprep.subr.bf16.mxu0 %v890
    %2284 = vmatpush1.bf16.msra.mxu0 %v889
    %2285 = vmatprep.subr.bf16.mxu0 %v894
    %2286 = vmatpush1.bf16.msra.mxu0 %v893
    %2287 = vmatprep.subr.bf16.mxu0 0
    %2288 = vmatpush1.bf16.msra.mxu0 0
    %2289 = vmatprep.subr.bf16.mxu0 0
    %2290 = vmatpush1.bf16.msra.mxu0 0
    %2291 = vmatprep.subr.bf16.mxu0 0
    %2292 = vmatpush1.bf16.msra.mxu0 0
    %2293 = vmatprep.subr.bf16.mxu0 0
    %2294 = vmatpush1.bf16.msra.mxu0 0
    %2295 = vmatprep.subr.bf16.mxu0 0
    %2296 = vmatpush1.bf16.msra.mxu0 0
    %2297 = vmatprep.subr.bf16.mxu0 0
    %2298 = vmatpush1.bf16.msra.mxu0 0
    %2299 = vmatprep.subr.bf16.mxu0 0
    %2300 = vmatpush1.bf16.msra.mxu0 0
    %2301 = vmatprep.subr.bf16.mxu0 0
    %2302 = vmatpush1.bf16.msra.mxu0 0
    %2303 = vmatprep.mubr.bf16.mxu0 0
    %2304 = vmatmul.mubr.bf16.gmra.mrb[0].mxu0 %v2151
    %v2305 = vpop.f32.mrb[0].mxu0
    %v2306 = vadd.f32 0.0, %v2305
    %v2307 = vpop.f32.mrb[0].mxu0
    %v2308 = vadd.f32 0.0, %v2307
    %v2309 = vpop.f32.mrb[0].mxu0
    %v2310 = vpop.f32.mrb[0].mxu0
    %2311 = vdwg.mxu0
    %2312 = vmatprep.subr.bf16.mxu0 %v868
    %2313 = vmatpush1.bf16.msra.mxu0 %v867
    %2314 = vmatprep.subr.bf16.mxu0 %v872
    %2315 = vmatpush1.bf16.msra.mxu0 %v871
    %2316 = vmatprep.subr.bf16.mxu0 %v876
    %2317 = vmatpush1.bf16.msra.mxu0 %v875
    %2318 = vmatprep.subr.bf16.mxu0 %v880
    %2319 = vmatpush1.bf16.msra.mxu0 %v879
    %2320 = vmatprep.subr.bf16.mxu0 %v884
    %2321 = vmatpush1.bf16.msra.mxu0 %v883
    %2322 = vmatprep.subr.bf16.mxu0 %v888
    %2323 = vmatpush1.bf16.msra.mxu0 %v887
    %2324 = vmatprep.subr.bf16.mxu0 %v892
    %2325 = vmatpush1.bf16.msra.mxu0 %v891
    %2326 = vmatprep.subr.bf16.mxu0 %v896
    %2327 = vmatpush1.bf16.msra.mxu0 %v895
    %2328 = vmatprep.subr.bf16.mxu0 0
    %2329 = vmatpush1.bf16.msra.mxu0 0
    %2330 = vmatprep.subr.bf16.mxu0 0
    %2331 = vmatpush1.bf16.msra.mxu0 0
    %2332 = vmatprep.subr.bf16.mxu0 0
    %2333 = vmatpush1.bf16.msra.mxu0 0
    %2334 = vmatprep.subr.bf16.mxu0 0
    %2335 = vmatpush1.bf16.msra.mxu0 0
    %2336 = vmatprep.subr.bf16.mxu0 0
    %2337 = vmatpush1.bf16.msra.mxu0 0
    %2338 = vmatprep.subr.bf16.mxu0 0
    %2339 = vmatpush1.bf16.msra.mxu0 0
    %2340 = vmatprep.subr.bf16.mxu0 0
    %2341 = vmatpush1.bf16.msra.mxu0 0
    %2342 = vmatprep.subr.bf16.mxu0 0
    %2343 = vmatpush1.bf16.msra.mxu0 0
    %2344 = vmatprep.mubr.bf16.mxu0 0
    %2345 = vmatmul.mubr.bf16.gmra.mrb[0].mxu0 %v2151
    %v2346 = vpop.f32.mrb[0].mxu0
    %v2347 = vadd.f32 0.0, %v2346
    %v2348 = vpop.f32.mrb[0].mxu0
    %v2349 = vadd.f32 0.0, %v2348
    %v2350 = vpop.f32.mrb[0].mxu0
    %v2351 = vpop.f32.mrb[0].mxu0
    %2352 = vdwg.mxu0
    %v2353 = vadd.f32 %v2263, %v2306
    %v2354 = vadd.f32 %v2264, %v2308
    %v2355 = vadd.f32 %v2265, %v2347
    %v2356 = vadd.f32 %v2266, %v2349
    %v2357 = vxor.u32 %v2353, 2147483648
    %v2358 = vmul.f32 %v2357, 1.442695
    %v2359 = vpow.pop %v2358
    %v2360 = vadd.f32 %v2359, 1.0
    %v2361 = vrcp.pop %v2360
    %v2362 = vmul.f32 1.0, %v2361
    %v2363 = vxor.u32 %v2354, 2147483648
    %v2364 = vmul.f32 %v2363, 1.442695
    %v2365 = vpow.pop %v2364
    %v2366 = vadd.f32 %v2365, 1.0
    %v2367 = vrcp.pop %v2366
    %v2368 = vmul.f32 1.0, %v2367
    %v2369 = vtanh.pop %v2355
    %v2370 = vxor.u32 %v2356, 2147483648
    %v2371 = vmul.f32 %v2370, 1.442695
    %v2372 = vpow.pop %v2371
    %v2373 = vadd.f32 %v2372, 1.0
    %v2374 = vrcp.pop %v2373
    %v2375 = vmul.f32 1.0, %v2374
    %v2376 = vmul.f32 %v2368, %v2148
    %v2377 = vmul.f32 %v2362, %v2369
    %v2378 = vadd.f32 %v2376, %v2377
    %v2379 = vtanh.pop %v2378
    %v2380 = vmul.f32 %v2375, %v2379
    %v2381 = vpack.c.bf16 %v2380, %v2380
    %2382 = vmatprep.subr.bf16.mxu0 %v1169
    %2383 = vmatpush1.bf16.msra.mxu0 %v1168
    %2384 = vmatprep.subr.bf16.mxu0 %v1173
    %2385 = vmatpush1.bf16.msra.mxu0 %v1172
    %2386 = vmatprep.subr.bf16.mxu0 %v1177
    %2387 = vmatpush1.bf16.msra.mxu0 %v1176
    %2388 = vmatprep.subr.bf16.mxu0 %v1181
    %2389 = vmatpush1.bf16.msra.mxu0 %v1180
    %2390 = vmatprep.subr.bf16.mxu0 %v1185
    %2391 = vmatpush1.bf16.msra.mxu0 %v1184
    %2392 = vmatprep.subr.bf16.mxu0 %v1189
    %2393 = vmatpush1.bf16.msra.mxu0 %v1188
    %2394 = vmatprep.subr.bf16.mxu0 %v1193
    %2395 = vmatpush1.bf16.msra.mxu0 %v1192
    %2396 = vmatprep.subr.bf16.mxu0 %v1197
    %2397 = vmatpush1.bf16.msra.mxu0 %v1196
    %2398 = vmatprep.subr.bf16.mxu0 0
    %2399 = vmatpush1.bf16.msra.mxu0 0
    %2400 = vmatprep.subr.bf16.mxu0 0
    %2401 = vmatpush1.bf16.msra.mxu0 0
    %2402 = vmatprep.subr.bf16.mxu0 0
    %2403 = vmatpush1.bf16.msra.mxu0 0
    %2404 = vmatprep.subr.bf16.mxu0 0
    %2405 = vmatpush1.bf16.msra.mxu0 0
    %2406 = vmatprep.subr.bf16.mxu0 0
    %2407 = vmatpush1.bf16.msra.mxu0 0
    %2408 = vmatprep.subr.bf16.mxu0 0
    %2409 = vmatpush1.bf16.msra.mxu0 0
    %2410 = vmatprep.subr.bf16.mxu0 0
    %2411 = vmatpush1.bf16.msra.mxu0 0
    %2412 = vmatprep.subr.bf16.mxu0 0
    %2413 = vmatpush1.bf16.msra.mxu0 0
    %2414 = vmatprep.mubr.bf16.mxu0 0
    %2415 = vmatmul.mubr.bf16.gmra.mrb[0].mxu0 %v2262
    %v2416 = vpop.f32.mrb[0].mxu0
    %v2417 = vadd.f32 0.0, %v2416
    %v2418 = vpop.f32.mrb[0].mxu0
    %v2419 = vadd.f32 0.0, %v2418
    %v2420 = vpop.f32.mrb[0].mxu0
    %v2421 = vpop.f32.mrb[0].mxu0
    %2422 = vdwg.mxu0
    %2423 = vmatprep.subr.bf16.mxu0 %v1171
    %2424 = vmatpush1.bf16.msra.mxu0 %v1170
    %2425 = vmatprep.subr.bf16.mxu0 %v1175
    %2426 = vmatpush1.bf16.msra.mxu0 %v1174
    %2427 = vmatprep.subr.bf16.mxu0 %v1179
    %2428 = vmatpush1.bf16.msra.mxu0 %v1178
    %2429 = vmatprep.subr.bf16.mxu0 %v1183
    %2430 = vmatpush1.bf16.msra.mxu0 %v1182
    %2431 = vmatprep.subr.bf16.mxu0 %v1187
    %2432 = vmatpush1.bf16.msra.mxu0 %v1186
    %2433 = vmatprep.subr.bf16.mxu0 %v1191
    %2434 = vmatpush1.bf16.msra.mxu0 %v1190
    %2435 = vmatprep.subr.bf16.mxu0 %v1195
    %2436 = vmatpush1.bf16.msra.mxu0 %v1194
    %2437 = vmatprep.subr.bf16.mxu0 %v1199
    %2438 = vmatpush1.bf16.msra.mxu0 %v1198
    %2439 = vmatprep.subr.bf16.mxu0 0
    %2440 = vmatpush1.bf16.msra.mxu0 0
    %2441 = vmatprep.subr.bf16.mxu0 0
    %2442 = vmatpush1.bf16.msra.mxu0 0
    %2443 = vmatprep.subr.bf16.mxu0 0
    %2444 = vmatpush1.bf16.msra.mxu0 0
    %2445 = vmatprep.subr.bf16.mxu0 0
    %2446 = vmatpush1.bf16.msra.mxu0 0
    %2447 = vmatprep.subr.bf16.mxu0 0
    %2448 = vmatpush1.bf16.msra.mxu0 0
    %2449 = vmatprep.subr.bf16.mxu0 0
    %2450 = vmatpush1.bf16.msra.mxu0 0
    %2451 = vmatprep.subr.bf16.mxu0 0
    %2452 = vmatpush1.bf16.msra.mxu0 0
    %2453 = vmatprep.subr.bf16.mxu0 0
    %2454 = vmatpush1.bf16.msra.mxu0 0
    %2455 = vmatprep.mubr.bf16.mxu0 0
    %2456 = vmatmul.mubr.bf16.gmra.mrb[0].mxu0 %v2262
    %v2457 = vpop.f32.mrb[0].mxu0
    %v2458 = vadd.f32 0.0, %v2457
    %v2459 = vpop.f32.mrb[0].mxu0
    %v2460 = vadd.f32 0.0, %v2459
    %v2461 = vpop.f32.mrb[0].mxu0
    %v2462 = vpop.f32.mrb[0].mxu0
    %2463 = vdwg.mxu0
    %v2464 = vadd.f32 %v2267, %v2417
    %v2465 = vadd.f32 %v2268, %v2419
    %v2466 = vadd.f32 %v2269, %v2458
    %v2467 = vadd.f32 %v2270, %v2460
    %v2468 = vxor.u32 %v2464, 2147483648
    %v2469 = vmul.f32 %v2468, 1.442695
    %v2470 = vpow.pop %v2469
    %v2471 = vadd.f32 %v2470, 1.0
    %v2472 = vrcp.pop %v2471
    %v2473 = vmul.f32 1.0, %v2472
    %v2474 = vxor.u32 %v2465, 2147483648
    %v2475 = vmul.f32 %v2474, 1.442695
    %v2476 = vpow.pop %v2475
    %v2477 = vadd.f32 %v2476, 1.0
    %v2478 = vrcp.pop %v2477
    %v2479 = vmul.f32 1.0, %v2478
    %v2480 = vtanh.pop %v2466
    %v2481 = vxor.u32 %v2467, 2147483648
    %v2482 = vmul.f32 %v2481, 1.442695
    %v2483 = vpow.pop %v2482
    %v2484 = vadd.f32 %v2483, 1.0
    %v2485 = vrcp.pop %v2484
    %v2486 = vmul.f32 1.0, %v2485
    %v2487 = vmul.f32 %v2479, %v2259
    %v2488 = vmul.f32 %v2473, %v2480
    %v2489 = vadd.f32 %v2487, %v2488
    %v2490 = vtanh.pop %v2489
    %v2491 = vmul.f32 %v2486, %v2490
    %v2492 = vpack.c.bf16 %v2491, %v2491
    %v2493 = vld [vmem:[#allocation2 + $0xc0] sm:$0xff]
    %v2494 = vld [vmem:[#allocation2 + $0xc8] sm:$0xff]
    %v2495 = vld [vmem:[#allocation2 + $0xd0] sm:$0xff]
    %v2496 = vld [vmem:[#allocation2 + $0xd8] sm:$0xff]
    %v2497 = vld [vmem:[#allocation3 + $0x20] sm:$0xff]
    %v2498 = vld [vmem:[#allocation3 + $0x28] sm:$0xff]
    %v2499 = vld [vmem:[#allocation3 + $0x30] sm:$0xff]
    %v2500 = vld [vmem:[#allocation3 + $0x38] sm:$0xff]
    %2501 = vmatprep.subr.bf16.mxu0 %v866
    %2502 = vmatpush1.bf16.msra.mxu0 %v865
    %2503 = vmatprep.subr.bf16.mxu0 %v870
    %2504 = vmatpush1.bf16.msra.mxu0 %v869
    %2505 = vmatprep.subr.bf16.mxu0 %v874
    %2506 = vmatpush1.bf16.msra.mxu0 %v873
    %2507 = vmatprep.subr.bf16.mxu0 %v878
    %2508 = vmatpush1.bf16.msra.mxu0 %v877
    %2509 = vmatprep.subr.bf16.mxu0 %v882
    %2510 = vmatpush1.bf16.msra.mxu0 %v881
    %2511 = vmatprep.subr.bf16.mxu0 %v886
    %2512 = vmatpush1.bf16.msra.mxu0 %v885
    %2513 = vmatprep.subr.bf16.mxu0 %v890
    %2514 = vmatpush1.bf16.msra.mxu0 %v889
    %2515 = vmatprep.subr.bf16.mxu0 %v894
    %2516 = vmatpush1.bf16.msra.mxu0 %v893
    %2517 = vmatprep.subr.bf16.mxu0 0
    %2518 = vmatpush1.bf16.msra.mxu0 0
    %2519 = vmatprep.subr.bf16.mxu0 0
    %2520 = vmatpush1.bf16.msra.mxu0 0
    %2521 = vmatprep.subr.bf16.mxu0 0
    %2522 = vmatpush1.bf16.msra.mxu0 0
    %2523 = vmatprep.subr.bf16.mxu0 0
    %2524 = vmatpush1.bf16.msra.mxu0 0
    %2525 = vmatprep.subr.bf16.mxu0 0
    %2526 = vmatpush1.bf16.msra.mxu0 0
    %2527 = vmatprep.subr.bf16.mxu0 0
    %2528 = vmatpush1.bf16.msra.mxu0 0
    %2529 = vmatprep.subr.bf16.mxu0 0
    %2530 = vmatpush1.bf16.msra.mxu0 0
    %2531 = vmatprep.subr.bf16.mxu0 0
    %2532 = vmatpush1.bf16.msra.mxu0 0
    %2533 = vmatprep.mubr.bf16.mxu0 0
    %2534 = vmatmul.mubr.bf16.gmra.mrb[0].mxu0 %v2381
    %v2535 = vpop.f32.mrb[0].mxu0
    %v2536 = vadd.f32 0.0, %v2535
    %v2537 = vpop.f32.mrb[0].mxu0
    %v2538 = vadd.f32 0.0, %v2537
    %v2539 = vpop.f32.mrb[0].mxu0
    %v2540 = vpop.f32.mrb[0].mxu0
    %2541 = vdwg.mxu0
    %2542 = vmatprep.subr.bf16.mxu0 %v868
    %2543 = vmatpush1.bf16.msra.mxu0 %v867
    %2544 = vmatprep.subr.bf16.mxu0 %v872
    %2545 = vmatpush1.bf16.msra.mxu0 %v871
    %2546 = vmatprep.subr.bf16.mxu0 %v876
    %2547 = vmatpush1.bf16.msra.mxu0 %v875
    %2548 = vmatprep.subr.bf16.mxu0 %v880
    %2549 = vmatpush1.bf16.msra.mxu0 %v879
    %2550 = vmatprep.subr.bf16.mxu0 %v884
    %2551 = vmatpush1.bf16.msra.mxu0 %v883
    %2552 = vmatprep.subr.bf16.mxu0 %v888
    %2553 = vmatpush1.bf16.msra.mxu0 %v887
    %2554 = vmatprep.subr.bf16.mxu0 %v892
    %2555 = vmatpush1.bf16.msra.mxu0 %v891
    %2556 = vmatprep.subr.bf16.mxu0 %v896
    %2557 = vmatpush1.bf16.msra.mxu0 %v895
    %2558 = vmatprep.subr.bf16.mxu0 0
    %2559 = vmatpush1.bf16.msra.mxu0 0
    %2560 = vmatprep.subr.bf16.mxu0 0
    %2561 = vmatpush1.bf16.msra.mxu0 0
    %2562 = vmatprep.subr.bf16.mxu0 0
    %2563 = vmatpush1.bf16.msra.mxu0 0
    %2564 = vmatprep.subr.bf16.mxu0 0
    %2565 = vmatpush1.bf16.msra.mxu0 0
    %2566 = vmatprep.subr.bf16.mxu0 0
    %2567 = vmatpush1.bf16.msra.mxu0 0
    %2568 = vmatprep.subr.bf16.mxu0 0
    %2569 = vmatpush1.bf16.msra.mxu0 0
    %2570 = vmatprep.subr.bf16.mxu0 0
    %2571 = vmatpush1.bf16.msra.mxu0 0
    %2572 = vmatprep.subr.bf16.mxu0 0
    %2573 = vmatpush1.bf16.msra.mxu0 0
    %2574 = vmatprep.mubr.bf16.mxu0 0
    %2575 = vmatmul.mubr.bf16.gmra.mrb[0].mxu0 %v2381
    %v2576 = vpop.f32.mrb[0].mxu0
    %v2577 = vadd.f32 0.0, %v2576
    %v2578 = vpop.f32.mrb[0].mxu0
    %v2579 = vadd.f32 0.0, %v2578
    %v2580 = vpop.f32.mrb[0].mxu0
    %v2581 = vpop.f32.mrb[0].mxu0
    %2582 = vdwg.mxu0
    %v2583 = vadd.f32 %v2493, %v2536
    %v2584 = vadd.f32 %v2494, %v2538
    %v2585 = vadd.f32 %v2495, %v2577
    %v2586 = vadd.f32 %v2496, %v2579
    %v2587 = vxor.u32 %v2583, 2147483648
    %v2588 = vmul.f32 %v2587, 1.442695
    %v2589 = vpow.pop %v2588
    %v2590 = vadd.f32 %v2589, 1.0
    %v2591 = vrcp.pop %v2590
    %v2592 = vmul.f32 1.0, %v2591
    %v2593 = vxor.u32 %v2584, 2147483648
    %v2594 = vmul.f32 %v2593, 1.442695
    %v2595 = vpow.pop %v2594
    %v2596 = vadd.f32 %v2595, 1.0
    %v2597 = vrcp.pop %v2596
    %v2598 = vmul.f32 1.0, %v2597
    %v2599 = vtanh.pop %v2585
    %v2600 = vxor.u32 %v2586, 2147483648
    %v2601 = vmul.f32 %v2600, 1.442695
    %v2602 = vpow.pop %v2601
    %v2603 = vadd.f32 %v2602, 1.0
    %v2604 = vrcp.pop %v2603
    %v2605 = vmul.f32 1.0, %v2604
    %v2606 = vmul.f32 %v2598, %v2378
    %v2607 = vmul.f32 %v2592, %v2599
    %v2608 = vadd.f32 %v2606, %v2607
    %v2609 = vtanh.pop %v2608
    %v2610 = vmul.f32 %v2605, %v2609
    %v2611 = vpack.c.bf16 %v2610, %v2610
    %2612 = vmatprep.subr.bf16.mxu0 %v1169
    %2613 = vmatpush1.bf16.msra.mxu0 %v1168
    %2614 = vmatprep.subr.bf16.mxu0 %v1173
    %2615 = vmatpush1.bf16.msra.mxu0 %v1172
    %2616 = vmatprep.subr.bf16.mxu0 %v1177
    %2617 = vmatpush1.bf16.msra.mxu0 %v1176
    %2618 = vmatprep.subr.bf16.mxu0 %v1181
    %2619 = vmatpush1.bf16.msra.mxu0 %v1180
    %2620 = vmatprep.subr.bf16.mxu0 %v1185
    %2621 = vmatpush1.bf16.msra.mxu0 %v1184
    %2622 = vmatprep.subr.bf16.mxu0 %v1189
    %2623 = vmatpush1.bf16.msra.mxu0 %v1188
    %2624 = vmatprep.subr.bf16.mxu0 %v1193
    %2625 = vmatpush1.bf16.msra.mxu0 %v1192
    %2626 = vmatprep.subr.bf16.mxu0 %v1197
    %2627 = vmatpush1.bf16.msra.mxu0 %v1196
    %2628 = vmatprep.subr.bf16.mxu0 0
    %2629 = vmatpush1.bf16.msra.mxu0 0
    %2630 = vmatprep.subr.bf16.mxu0 0
    %2631 = vmatpush1.bf16.msra.mxu0 0
    %2632 = vmatprep.subr.bf16.mxu0 0
    %2633 = vmatpush1.bf16.msra.mxu0 0
    %2634 = vmatprep.subr.bf16.mxu0 0
    %2635 = vmatpush1.bf16.msra.mxu0 0
    %2636 = vmatprep.subr.bf16.mxu0 0
    %2637 = vmatpush1.bf16.msra.mxu0 0
    %2638 = vmatprep.subr.bf16.mxu0 0
    %2639 = vmatpush1.bf16.msra.mxu0 0
    %2640 = vmatprep.subr.bf16.mxu0 0
    %2641 = vmatpush1.bf16.msra.mxu0 0
    %2642 = vmatprep.subr.bf16.mxu0 0
    %2643 = vmatpush1.bf16.msra.mxu0 0
    %2644 = vmatprep.mubr.bf16.mxu0 0
    %2645 = vmatmul.mubr.bf16.gmra.mrb[0].mxu0 %v2492
    %v2646 = vpop.f32.mrb[0].mxu0
    %v2647 = vadd.f32 0.0, %v2646
    %v2648 = vpop.f32.mrb[0].mxu0
    %v2649 = vadd.f32 0.0, %v2648
    %v2650 = vpop.f32.mrb[0].mxu0
    %v2651 = vpop.f32.mrb[0].mxu0
    %2652 = vdwg.mxu0
    %2653 = vmatprep.subr.bf16.mxu0 %v1171
    %2654 = vmatpush1.bf16.msra.mxu0 %v1170
    %2655 = vmatprep.subr.bf16.mxu0 %v1175
    %2656 = vmatpush1.bf16.msra.mxu0 %v1174
    %2657 = vmatprep.subr.bf16.mxu0 %v1179
    %2658 = vmatpush1.bf16.msra.mxu0 %v1178
    %2659 = vmatprep.subr.bf16.mxu0 %v1183
    %2660 = vmatpush1.bf16.msra.mxu0 %v1182
    %2661 = vmatprep.subr.bf16.mxu0 %v1187
    %2662 = vmatpush1.bf16.msra.mxu0 %v1186
    %2663 = vmatprep.subr.bf16.mxu0 %v1191
    %2664 = vmatpush1.bf16.msra.mxu0 %v1190
    %2665 = vmatprep.subr.bf16.mxu0 %v1195
    %2666 = vmatpush1.bf16.msra.mxu0 %v1194
    %2667 = vmatprep.subr.bf16.mxu0 %v1199
    %2668 = vmatpush1.bf16.msra.mxu0 %v1198
    %2669 = vmatprep.subr.bf16.mxu0 0
    %2670 = vmatpush1.bf16.msra.mxu0 0
    %2671 = vmatprep.subr.bf16.mxu0 0
    %2672 = vmatpush1.bf16.msra.mxu0 0
    %2673 = vmatprep.subr.bf16.mxu0 0
    %2674 = vmatpush1.bf16.msra.mxu0 0
    %2675 = vmatprep.subr.bf16.mxu0 0
    %2676 = vmatpush1.bf16.msra.mxu0 0
    %2677 = vmatprep.subr.bf16.mxu0 0
    %2678 = vmatpush1.bf16.msra.mxu0 0
    %2679 = vmatprep.subr.bf16.mxu0 0
    %2680 = vmatpush1.bf16.msra.mxu0 0
    %2681 = vmatprep.subr.bf16.mxu0 0
    %2682 = vmatpush1.bf16.msra.mxu0 0
    %2683 = vmatprep.subr.bf16.mxu0 0
    %2684 = vmatpush1.bf16.msra.mxu0 0
    %2685 = vmatprep.mubr.bf16.mxu0 0
    %2686 = vmatmul.mubr.bf16.gmra.mrb[0].mxu0 %v2492
    %v2687 = vpop.f32.mrb[0].mxu0
    %v2688 = vadd.f32 0.0, %v2687
    %v2689 = vpop.f32.mrb[0].mxu0
    %v2690 = vadd.f32 0.0, %v2689
    %v2691 = vpop.f32.mrb[0].mxu0
    %v2692 = vpop.f32.mrb[0].mxu0
    %2693 = vdwg.mxu0
    %v2694 = vadd.f32 %v2497, %v2647
    %v2695 = vadd.f32 %v2498, %v2649
    %v2696 = vadd.f32 %v2499, %v2688
    %v2697 = vadd.f32 %v2500, %v2690
    %v2698 = vxor.u32 %v2694, 2147483648
    %v2699 = vmul.f32 %v2698, 1.442695
    %v2700 = vpow.pop %v2699
    %v2701 = vadd.f32 %v2700, 1.0
    %v2702 = vrcp.pop %v2701
    %v2703 = vmul.f32 1.0, %v2702
    %v2704 = vxor.u32 %v2695, 2147483648
    %v2705 = vmul.f32 %v2704, 1.442695
    %v2706 = vpow.pop %v2705
    %v2707 = vadd.f32 %v2706, 1.0
    %v2708 = vrcp.pop %v2707
    %v2709 = vmul.f32 1.0, %v2708
    %v2710 = vtanh.pop %v2696
    %v2711 = vxor.u32 %v2697, 2147483648
    %v2712 = vmul.f32 %v2711, 1.442695
    %v2713 = vpow.pop %v2712
    %v2714 = vadd.f32 %v2713, 1.0
    %v2715 = vrcp.pop %v2714
    %v2716 = vmul.f32 1.0, %v2715
    %v2717 = vmul.f32 %v2709, %v2489
    %v2718 = vmul.f32 %v2703, %v2710
    %v2719 = vadd.f32 %v2717, %v2718
    %v2720 = vtanh.pop %v2719
    %v2721 = vmul.f32 %v2716, %v2720
    %v2722 = vpack.c.bf16 %v2721, %v2721
    %v2723 = vld [vmem:[#allocation2 + $0xe0] sm:$0xff]
    %v2724 = vld [vmem:[#allocation2 + $0xe8] sm:$0xff]
    %v2725 = vld [vmem:[#allocation2 + $0xf0] sm:$0xff]
    %v2726 = vld [vmem:[#allocation2 + $0xf8] sm:$0xff]
    %v2727 = vld [vmem:[#allocation3] sm:$0xff]
    %v2728 = vld [vmem:[#allocation3 + $0x8] sm:$0xff]
    %v2729 = vld [vmem:[#allocation3 + $0x10] sm:$0xff]
    %v2730 = vld [vmem:[#allocation3 + $0x18] sm:$0xff]
    %2731 = vmatprep.subr.bf16.mxu0 %v866
    %2732 = vmatpush1.bf16.msra.mxu0 %v865
    %2733 = vmatprep.subr.bf16.mxu0 %v870
    %2734 = vmatpush1.bf16.msra.mxu0 %v869
    %2735 = vmatprep.subr.bf16.mxu0 %v874
    %2736 = vmatpush1.bf16.msra.mxu0 %v873
    %2737 = vmatprep.subr.bf16.mxu0 %v878
    %2738 = vmatpush1.bf16.msra.mxu0 %v877
    %2739 = vmatprep.subr.bf16.mxu0 %v882
    %2740 = vmatpush1.bf16.msra.mxu0 %v881
    %2741 = vmatprep.subr.bf16.mxu0 %v886
    %2742 = vmatpush1.bf16.msra.mxu0 %v885
    %2743 = vmatprep.subr.bf16.mxu0 %v890
    %2744 = vmatpush1.bf16.msra.mxu0 %v889
    %2745 = vmatprep.subr.bf16.mxu0 %v894
    %2746 = vmatpush1.bf16.msra.mxu0 %v893
    %2747 = vmatprep.subr.bf16.mxu0 0
    %2748 = vmatpush1.bf16.msra.mxu0 0
    %2749 = vmatprep.subr.bf16.mxu0 0
    %2750 = vmatpush1.bf16.msra.mxu0 0
    %2751 = vmatprep.subr.bf16.mxu0 0
    %2752 = vmatpush1.bf16.msra.mxu0 0
    %2753 = vmatprep.subr.bf16.mxu0 0
    %2754 = vmatpush1.bf16.msra.mxu0 0
    %2755 = vmatprep.subr.bf16.mxu0 0
    %2756 = vmatpush1.bf16.msra.mxu0 0
    %2757 = vmatprep.subr.bf16.mxu0 0
    %2758 = vmatpush1.bf16.msra.mxu0 0
    %2759 = vmatprep.subr.bf16.mxu0 0
    %2760 = vmatpush1.bf16.msra.mxu0 0
    %2761 = vmatprep.subr.bf16.mxu0 0
    %2762 = vmatpush1.bf16.msra.mxu0 0
    %2763 = vmatprep.mubr.bf16.mxu0 0
    %2764 = vmatmul.mubr.bf16.gmra.mrb[0].mxu0 %v2611
    %v2765 = vpop.f32.mrb[0].mxu0
    %v2766 = vadd.f32 0.0, %v2765
    %v2767 = vpop.f32.mrb[0].mxu0
    %v2768 = vadd.f32 0.0, %v2767
    %v2769 = vpop.f32.mrb[0].mxu0
    %v2770 = vpop.f32.mrb[0].mxu0
    %2771 = vdwg.mxu0
    %2772 = vmatprep.subr.bf16.mxu0 %v868
    %2773 = vmatpush1.bf16.msra.mxu0 %v867
    %2774 = vmatprep.subr.bf16.mxu0 %v872
    %2775 = vmatpush1.bf16.msra.mxu0 %v871
    %2776 = vmatprep.subr.bf16.mxu0 %v876
    %2777 = vmatpush1.bf16.msra.mxu0 %v875
    %2778 = vmatprep.subr.bf16.mxu0 %v880
    %2779 = vmatpush1.bf16.msra.mxu0 %v879
    %2780 = vmatprep.subr.bf16.mxu0 %v884
    %2781 = vmatpush1.bf16.msra.mxu0 %v883
    %2782 = vmatprep.subr.bf16.mxu0 %v888
    %2783 = vmatpush1.bf16.msra.mxu0 %v887
    %2784 = vmatprep.subr.bf16.mxu0 %v892
    %2785 = vmatpush1.bf16.msra.mxu0 %v891
    %2786 = vmatprep.subr.bf16.mxu0 %v896
    %2787 = vmatpush1.bf16.msra.mxu0 %v895
    %2788 = vmatprep.subr.bf16.mxu0 0
    %2789 = vmatpush1.bf16.msra.mxu0 0
    %2790 = vmatprep.subr.bf16.mxu0 0
    %2791 = vmatpush1.bf16.msra.mxu0 0
    %2792 = vmatprep.subr.bf16.mxu0 0
    %2793 = vmatpush1.bf16.msra.mxu0 0
    %2794 = vmatprep.subr.bf16.mxu0 0
    %2795 = vmatpush1.bf16.msra.mxu0 0
    %2796 = vmatprep.subr.bf16.mxu0 0
    %2797 = vmatpush1.bf16.msra.mxu0 0
    %2798 = vmatprep.subr.bf16.mxu0 0
    %2799 = vmatpush1.bf16.msra.mxu0 0
    %2800 = vmatprep.subr.bf16.mxu0 0
    %2801 = vmatpush1.bf16.msra.mxu0 0
    %2802 = vmatprep.subr.bf16.mxu0 0
    %2803 = vmatpush1.bf16.msra.mxu0 0
    %2804 = vmatprep.mubr.bf16.mxu0 0
    %2805 = vmatmul.mubr.bf16.gmra.mrb[0].mxu0 %v2611
    %v2806 = vpop.f32.mrb[0].mxu0
    %v2807 = vadd.f32 0.0, %v2806
    %v2808 = vpop.f32.mrb[0].mxu0
    %v2809 = vadd.f32 0.0, %v2808
    %v2810 = vpop.f32.mrb[0].mxu0
    %v2811 = vpop.f32.mrb[0].mxu0
    %2812 = vdwg.mxu0
    %v2813 = vadd.f32 %v2723, %v2766
    %v2814 = vadd.f32 %v2724, %v2768
    %v2815 = vadd.f32 %v2725, %v2807
    %v2816 = vadd.f32 %v2726, %v2809
    %v2817 = vxor.u32 %v2813, 2147483648
    %v2818 = vmul.f32 %v2817, 1.442695
    %v2819 = vpow.pop %v2818
    %v2820 = vadd.f32 %v2819, 1.0
    %v2821 = vrcp.pop %v2820
    %v2822 = vmul.f32 1.0, %v2821
    %v2823 = vxor.u32 %v2814, 2147483648
    %v2824 = vmul.f32 %v2823, 1.442695
    %v2825 = vpow.pop %v2824
    %v2826 = vadd.f32 %v2825, 1.0
    %v2827 = vrcp.pop %v2826
    %v2828 = vmul.f32 1.0, %v2827
    %v2829 = vtanh.pop %v2815
    %v2830 = vxor.u32 %v2816, 2147483648
    %v2831 = vmul.f32 %v2830, 1.442695
    %v2832 = vpow.pop %v2831
    %v2833 = vadd.f32 %v2832, 1.0
    %v2834 = vrcp.pop %v2833
    %v2835 = vmul.f32 1.0, %v2834
    %v2836 = vmul.f32 %v2828, %v2608
    %v2837 = vmul.f32 %v2822, %v2829
    %v2838 = vadd.f32 %v2836, %v2837
    %v2839 = vtanh.pop %v2838
    %v2840 = vmul.f32 %v2835, %v2839
    %v2841 = vpack.c.bf16 %v2840, %v2840
    %2842 = vmatprep.subr.bf16.mxu0 %v1169
    %2843 = vmatpush1.bf16.msra.mxu0 %v1168
    %2844 = vmatprep.subr.bf16.mxu0 %v1173
    %2845 = vmatpush1.bf16.msra.mxu0 %v1172
    %2846 = vmatprep.subr.bf16.mxu0 %v1177
    %2847 = vmatpush1.bf16.msra.mxu0 %v1176
    %2848 = vmatprep.subr.bf16.mxu0 %v1181
    %2849 = vmatpush1.bf16.msra.mxu0 %v1180
    %2850 = vmatprep.subr.bf16.mxu0 %v1185
    %2851 = vmatpush1.bf16.msra.mxu0 %v1184
    %2852 = vmatprep.subr.bf16.mxu0 %v1189
    %2853 = vmatpush1.bf16.msra.mxu0 %v1188
    %2854 = vmatprep.subr.bf16.mxu0 %v1193
    %2855 = vmatpush1.bf16.msra.mxu0 %v1192
    %2856 = vmatprep.subr.bf16.mxu0 %v1197
    %2857 = vmatpush1.bf16.msra.mxu0 %v1196
    %2858 = vmatprep.subr.bf16.mxu0 0
    %2859 = vmatpush1.bf16.msra.mxu0 0
    %2860 = vmatprep.subr.bf16.mxu0 0
    %2861 = vmatpush1.bf16.msra.mxu0 0
    %2862 = vmatprep.subr.bf16.mxu0 0
    %2863 = vmatpush1.bf16.msra.mxu0 0
    %2864 = vmatprep.subr.bf16.mxu0 0
    %2865 = vmatpush1.bf16.msra.mxu0 0
    %2866 = vmatprep.subr.bf16.mxu0 0
    %2867 = vmatpush1.bf16.msra.mxu0 0
    %2868 = vmatprep.subr.bf16.mxu0 0
    %2869 = vmatpush1.bf16.msra.mxu0 0
    %2870 = vmatprep.subr.bf16.mxu0 0
    %2871 = vmatpush1.bf16.msra.mxu0 0
    %2872 = vmatprep.subr.bf16.mxu0 0
    %2873 = vmatpush1.bf16.msra.mxu0 0
    %2874 = vmatprep.mubr.bf16.mxu0 0
    %2875 = vmatmul.mubr.bf16.gmra.mrb[0].mxu0 %v2722
    %v2876 = vpop.f32.mrb[0].mxu0
    %v2877 = vadd.f32 0.0, %v2876
    %v2878 = vpop.f32.mrb[0].mxu0
    %v2879 = vadd.f32 0.0, %v2878
    %v2880 = vpop.f32.mrb[0].mxu0
    %v2881 = vpop.f32.mrb[0].mxu0
    %2882 = vdwg.mxu0
    %2883 = vmatprep.subr.bf16.mxu0 %v1171
    %2884 = vmatpush1.bf16.msra.mxu0 %v1170
    %2885 = vmatprep.subr.bf16.mxu0 %v1175
    %2886 = vmatpush1.bf16.msra.mxu0 %v1174
    %2887 = vmatprep.subr.bf16.mxu0 %v1179
    %2888 = vmatpush1.bf16.msra.mxu0 %v1178
    %2889 = vmatprep.subr.bf16.mxu0 %v1183
    %2890 = vmatpush1.bf16.msra.mxu0 %v1182
    %2891 = vmatprep.subr.bf16.mxu0 %v1187
    %2892 = vmatpush1.bf16.msra.mxu0 %v1186
    %2893 = vmatprep.subr.bf16.mxu0 %v1191
    %2894 = vmatpush1.bf16.msra.mxu0 %v1190
    %2895 = vmatprep.subr.bf16.mxu0 %v1195
    %2896 = vmatpush1.bf16.msra.mxu0 %v1194
    %2897 = vmatprep.subr.bf16.mxu0 %v1199
    %2898 = vmatpush1.bf16.msra.mxu0 %v1198
    %2899 = vmatprep.subr.bf16.mxu0 0
    %2900 = vmatpush1.bf16.msra.mxu0 0
    %2901 = vmatprep.subr.bf16.mxu0 0
    %2902 = vmatpush1.bf16.msra.mxu0 0
    %2903 = vmatprep.subr.bf16.mxu0 0
    %2904 = vmatpush1.bf16.msra.mxu0 0
    %2905 = vmatprep.subr.bf16.mxu0 0
    %2906 = vmatpush1.bf16.msra.mxu0 0
    %2907 = vmatprep.subr.bf16.mxu0 0
    %2908 = vmatpush1.bf16.msra.mxu0 0
    %2909 = vmatprep.subr.bf16.mxu0 0
    %2910 = vmatpush1.bf16.msra.mxu0 0
    %2911 = vmatprep.subr.bf16.mxu0 0
    %2912 = vmatpush1.bf16.msra.mxu0 0
    %2913 = vmatprep.subr.bf16.mxu0 0
    %2914 = vmatpush1.bf16.msra.mxu0 0
    %2915 = vmatprep.mubr.bf16.mxu0 0
    %2916 = vmatmul.mubr.bf16.gmra.mrb[0].mxu0 %v2722
    %v2917 = vpop.f32.mrb[0].mxu0
    %v2918 = vadd.f32 0.0, %v2917
    %v2919 = vpop.f32.mrb[0].mxu0
    %v2920 = vadd.f32 0.0, %v2919
    %v2921 = vpop.f32.mrb[0].mxu0
    %v2922 = vpop.f32.mrb[0].mxu0
    %2923 = vdwg.mxu0
    %v2924 = vadd.f32 %v2727, %v2877
    %v2925 = vadd.f32 %v2728, %v2879
    %v2926 = vadd.f32 %v2729, %v2918
    %v2927 = vadd.f32 %v2730, %v2920
    %v2928 = vxor.u32 %v2924, 2147483648
    %v2929 = vmul.f32 %v2928, 1.442695
    %v2930 = vpow.pop %v2929
    %v2931 = vadd.f32 %v2930, 1.0
    %v2932 = vrcp.pop %v2931
    %v2933 = vmul.f32 1.0, %v2932
    %v2934 = vxor.u32 %v2925, 2147483648
    %v2935 = vmul.f32 %v2934, 1.442695
    %v2936 = vpow.pop %v2935
    %v2937 = vadd.f32 %v2936, 1.0
    %v2938 = vrcp.pop %v2937
    %v2939 = vmul.f32 1.0, %v2938
    %v2940 = vtanh.pop %v2926
    %v2941 = vxor.u32 %v2927, 2147483648
    %v2942 = vmul.f32 %v2941, 1.442695
    %v2943 = vpow.pop %v2942
    %v2944 = vadd.f32 %v2943, 1.0
    %v2945 = vrcp.pop %v2944
    %v2946 = vmul.f32 1.0, %v2945
    %v2947 = vmul.f32 %v2939, %v2719
    %v2948 = vmul.f32 %v2933, %v2940
    %v2949 = vadd.f32 %v2947, %v2948
    %v2950 = vtanh.pop %v2949
    %v2951 = vmul.f32 %v2946, %v2950
    %v2952 = vpack.c.bf16 %v2951, %v2951
    %2953 = vst [vmem:[#allocation4] sm:$0xf] %v2841
    %2954 = vst [vmem:[#allocation5] sm:$0xff] %v2838
    %2955 = vst [vmem:[#allocation6] sm:$0xf] %v2952
    %2956 = vst [vmem:[#allocation7] sm:$0xff] %v2949
    // Predicated region
    $region74: #{tpu_custom_call.1} parent=1 // pred_check
      %p2957 = pneg %p140
    $region75: #{tpu_custom_call.1} parent=1 // pred_check_branch
      %2959 = sbr.rel (%p2957) target = $region77
    $region76: #{tpu_custom_call.1} parent=1 // pred_region
      %v2960 = vld [vmem:[#allocation17] sm:$0xf]
      %v2961 = vld [vmem:[#allocation17 + $0x4] sm:$0xf]
      %v2962 = vld [vmem:[#allocation17 + $0x8] sm:$0xf]
      %v2963 = vld [vmem:[#allocation17 + $0xc] sm:$0xf]
      %v2964 = vld [vmem:[#allocation17 + $0x10] sm:$0xf]
      %v2965 = vld [vmem:[#allocation17 + $0x14] sm:$0xf]
      %v2966 = vld [vmem:[#allocation17 + $0x18] sm:$0xf]
      %v2967 = vld [vmem:[#allocation17 + $0x1c] sm:$0xf]
      %v2968 = vld [vmem:[#allocation17 + $0x20] sm:$0xf]
      %v2969 = vld [vmem:[#allocation17 + $0x24] sm:$0xf]
      %v2970 = vld [vmem:[#allocation17 + $0x28] sm:$0xf]
      %v2971 = vld [vmem:[#allocation17 + $0x2c] sm:$0xf]
      %v2972 = vld [vmem:[#allocation17 + $0x30] sm:$0xf]
      %v2973 = vld [vmem:[#allocation17 + $0x34] sm:$0xf]
      %v2974 = vld [vmem:[#allocation17 + $0x38] sm:$0xf]
      %v2975 = vld [vmem:[#allocation17 + $0x3c] sm:$0xf]
      %v2976 = vld [vmem:[%s9] sm:$0xf]
      %v2977 = vld [vmem:[%s9 + $0x4] sm:$0xf]
      %v2978 = vld [vmem:[%s9 + $0x8] sm:$0xf]
      %v2979 = vld [vmem:[%s9 + $0xc] sm:$0xf]
      %v2980 = vld [vmem:[%s9 + $0x10] sm:$0xf]
      %v2981 = vld [vmem:[%s9 + $0x14] sm:$0xf]
      %v2982 = vld [vmem:[%s9 + $0x18] sm:$0xf]
      %v2983 = vld [vmem:[%s9 + $0x1c] sm:$0xf]
      %v2984 = vld [vmem:[%s9 + $0x20] sm:$0xf]
      %v2985 = vld [vmem:[%s9 + $0x24] sm:$0xf]
      %v2986 = vld [vmem:[%s9 + $0x28] sm:$0xf]
      %v2987 = vld [vmem:[%s9 + $0x2c] sm:$0xf]
      %v2988 = vld [vmem:[%s9 + $0x30] sm:$0xf]
      %v2989 = vld [vmem:[%s9 + $0x34] sm:$0xf]
      %v2990 = vld [vmem:[%s9 + $0x38] sm:$0xf]
      %v2991 = vld [vmem:[%s9 + $0x3c] sm:$0xf]
      %v3008 = vunpack.c.l.b16 %v2976
      %v3009 = vunpack.c.l.b16 %v2977
      %v3010 = vunpack.c.l.b16 %v2978
      %v3011 = vunpack.c.l.b16 %v2979
      %v3012 = vunpack.c.l.b16 %v2980
      %v3013 = vunpack.c.l.b16 %v2981
      %v3014 = vunpack.c.l.b16 %v2982
      %v3015 = vunpack.c.l.b16 %v2983
      %v3016 = vunpack.c.l.b16 %v2984
      %v3017 = vunpack.c.l.b16 %v2985
      %v3018 = vunpack.c.l.b16 %v2986
      %v3019 = vunpack.c.l.b16 %v2987
      %v3020 = vunpack.c.l.b16 %v2988
      %v3021 = vunpack.c.l.b16 %v2989
      %v3022 = vunpack.c.l.b16 %v2990
      %v3023 = vunpack.c.l.b16 %v2991
      %v3024 = vpack.c.b16 %v3009, %v3008
      %v3025 = vpack.c.b16 %v3011, %v3010
      %v3026 = vpack.c.b16 %v3013, %v3012
      %v3027 = vpack.c.b16 %v3015, %v3014
      %v3028 = vpack.c.b16 %v3017, %v3016
      %v3029 = vpack.c.b16 %v3019, %v3018
      %v3030 = vpack.c.b16 %v3021, %v3020
      %v3031 = vpack.c.b16 %v3023, %v3022
      %3040 = vmatprep.subr.bf16.mxu0 0
      %3041 = vmatpush1.bf16.msra.mxu0 %v3024
      %3042 = vmatprep.subr.bf16.mxu0 0
      %3043 = vmatpush1.bf16.msra.mxu0 %v3025
      %3044 = vmatprep.subr.bf16.mxu0 0
      %3045 = vmatpush1.bf16.msra.mxu0 %v3026
      %3046 = vmatprep.subr.bf16.mxu0 0
      %3047 = vmatpush1.bf16.msra.mxu0 %v3027
      %3048 = vmatprep.subr.bf16.mxu0 0
      %3049 = vmatpush1.bf16.msra.mxu0 %v3028
      %3050 = vmatprep.subr.bf16.mxu0 0
      %3051 = vmatpush1.bf16.msra.mxu0 %v3029
      %3052 = vmatprep.subr.bf16.mxu0 0
      %3053 = vmatpush1.bf16.msra.mxu0 %v3030
      %3054 = vmatprep.subr.bf16.mxu0 0
      %3055 = vmatpush1.bf16.msra.mxu0 %v3031
      %3056 = vmatprep.subr.bf16.mxu0 0
      %3057 = vmatpush1.bf16.msra.mxu0 0
      %3058 = vmatprep.subr.bf16.mxu0 0
      %3059 = vmatpush1.bf16.msra.mxu0 0
      %3060 = vmatprep.subr.bf16.mxu0 0
      %3061 = vmatpush1.bf16.msra.mxu0 0
      %3062 = vmatprep.subr.bf16.mxu0 0
      %3063 = vmatpush1.bf16.msra.mxu0 0
      %3064 = vmatprep.subr.bf16.mxu0 0
      %3065 = vmatpush1.bf16.msra.mxu0 0
      %3066 = vmatprep.subr.bf16.mxu0 0
      %3067 = vmatpush1.bf16.msra.mxu0 0
      %3068 = vmatprep.subr.bf16.mxu0 0
      %3069 = vmatpush1.bf16.msra.mxu0 0
      %3070 = vmatprep.subr.bf16.mxu0 0
      %3071 = vmatpush1.bf16.msra.mxu0 0
      %3072 = vmatprep.mubr.bf16.mxu0 0
      %3073 = vmatmul.mubr.bf16.gmra.mrb[0].mxu0 %v2952
      %v3074 = vpop.f32.mrb[0].mxu0
      %v3075 = vadd.f32 0.0, %v3074
      %v3076 = vpop.f32.mrb[0].mxu0
      %v3077 = vpop.f32.mrb[0].mxu0
      %v3078 = vpop.f32.mrb[0].mxu0
      %3079 = vdwg.mxu0
      %v3096 = vunpack.c.l.b16 %v2960
      %v3097 = vunpack.c.l.b16 %v2961
      %v3098 = vunpack.c.l.b16 %v2962
      %v3099 = vunpack.c.l.b16 %v2963
      %v3100 = vunpack.c.l.b16 %v2964
      %v3101 = vunpack.c.l.b16 %v2965
      %v3102 = vunpack.c.l.b16 %v2966
      %v3103 = vunpack.c.l.b16 %v2967
      %v3104 = vunpack.c.l.b16 %v2968
      %v3105 = vunpack.c.l.b16 %v2969
      %v3106 = vunpack.c.l.b16 %v2970
      %v3107 = vunpack.c.l.b16 %v2971
      %v3108 = vunpack.c.l.b16 %v2972
      %v3109 = vunpack.c.l.b16 %v2973
      %v3110 = vunpack.c.l.b16 %v2974
      %v3111 = vunpack.c.l.b16 %v2975
      %v3112 = vpack.c.b16 %v3097, %v3096
      %v3113 = vpack.c.b16 %v3099, %v3098
      %v3114 = vpack.c.b16 %v3101, %v3100
      %v3115 = vpack.c.b16 %v3103, %v3102
      %v3116 = vpack.c.b16 %v3105, %v3104
      %v3117 = vpack.c.b16 %v3107, %v3106
      %v3118 = vpack.c.b16 %v3109, %v3108
      %v3119 = vpack.c.b16 %v3111, %v3110
      %3128 = vmatprep.subr.bf16.mxu0 0
      %3129 = vmatpush1.bf16.msra.mxu0 %v3112
      %3130 = vmatprep.subr.bf16.mxu0 0
      %3131 = vmatpush1.bf16.msra.mxu0 %v3113
      %3132 = vmatprep.subr.bf16.mxu0 0
      %3133 = vmatpush1.bf16.msra.mxu0 %v3114
      %3134 = vmatprep.subr.bf16.mxu0 0
      %3135 = vmatpush1.bf16.msra.mxu0 %v3115
      %3136 = vmatprep.subr.bf16.mxu0 0
      %3137 = vmatpush1.bf16.msra.mxu0 %v3116
      %3138 = vmatprep.subr.bf16.mxu0 0
      %3139 = vmatpush1.bf16.msra.mxu0 %v3117
      %3140 = vmatprep.subr.bf16.mxu0 0
      %3141 = vmatpush1.bf16.msra.mxu0 %v3118
      %3142 = vmatprep.subr.bf16.mxu0 0
      %3143 = vmatpush1.bf16.msra.mxu0 %v3119
      %3144 = vmatprep.subr.bf16.mxu0 0
      %3145 = vmatpush1.bf16.msra.mxu0 0
      %3146 = vmatprep.subr.bf16.mxu0 0
      %3147 = vmatpush1.bf16.msra.mxu0 0
      %3148 = vmatprep.subr.bf16.mxu0 0
      %3149 = vmatpush1.bf16.msra.mxu0 0
      %3150 = vmatprep.subr.bf16.mxu0 0
      %3151 = vmatpush1.bf16.msra.mxu0 0
      %3152 = vmatprep.subr.bf16.mxu0 0
      %3153 = vmatpush1.bf16.msra.mxu0 0
      %3154 = vmatprep.subr.bf16.mxu0 0
      %3155 = vmatpush1.bf16.msra.mxu0 0
      %3156 = vmatprep.subr.bf16.mxu0 0
      %3157 = vmatpush1.bf16.msra.mxu0 0
      %3158 = vmatprep.subr.bf16.mxu0 0
      %3159 = vmatpush1.bf16.msra.mxu0 0
      %3160 = vmatprep.mubr.bf16.mxu0 0
      %3161 = vmatmul.mubr.bf16.gmra.mrb[0].mxu0 %v2841
      %v3162 = vpop.f32.mrb[0].mxu0
      %v3163 = vadd.f32 %v3075, %v3162
      %v3164 = vpop.f32.mrb[0].mxu0
      %v3165 = vpop.f32.mrb[0].mxu0
      %v3166 = vpop.f32.mrb[0].mxu0
      %3167 = vdwg.mxu0
      %v3168 = vld [vmem:[%s10] sm:$0x1]
      %v3170 = vlaneseq
      %v3171 = vshrl.u32 %v3170, 7
      %v3172 = vsub.s32 0, %v3171
      %v3173 = vrot.slane %v3168, %v3172
      %v3175 = vadd.f32 %v3163, %v3173
      %3176 = vst [vmem:[#allocation19] sm:$0xff] %v3175
    $region77: #{tpu_custom_call.1} parent=1 // pred_fallthru
      _
    // Predicated region
    $region78: #{tpu_custom_call.1} parent=1 // pred_check
      _
    $region79: #{tpu_custom_call.1} parent=1 // pred_check_branch
      %3178 = sbr.rel (0) target = $region81
    $region80: #{tpu_custom_call.1} parent=1 // pred_region
      %s3180 = ssub.s32 128, 128
      %3181 = vsyncadd [#allocation10], %s3180
      %s3183 = sshll.u32 [#allocation19], 4
      %s3184 = int_to_ptr.vmem [resolvable:$true] %s3183
      %3186 = dma.vmem_to_hbm [thread:$0]  %s3184, 128, %s11, [#allocation10]
    $region81: #{tpu_custom_call.1} parent=1 // pred_fallthru
      _
    // Predicated region
    $region82: #{tpu_custom_call.1} parent=1 // pred_check
      _
    $region83: #{tpu_custom_call.1} parent=1 // pred_check_branch
      %3188 = sbr.rel (0) target = $region85
    $region84: #{tpu_custom_call.1} parent=1 // pred_region
      %3189 = dma.done [#allocation10], 128
    $region85: #{tpu_custom_call.1} parent=1 // pred_fallthru
      _
    %3190 = vsyncpa [#allocation9], 1
    %3191 = vsyncpa [#allocation12], 1
    %3192 = vsyncpa [#allocation15], 1
    %3193 = vsyncpa [#allocation18], 1
    %3194 = vsyncpa [#allocation10], 1

</llo_original>
